<compile_context>
chip_gen: v5e
topology: v5e:2x2
jax: 0.10.0
libtpu: 0.0.40
codegen_flags: <defaults>
</compile_context>

<pallas_src>
import numpy as np
import jax
import jax.numpy as jnp
from jax.experimental import pallas as pl
from jax.experimental.pallas import tpu as pltpu


# ---------------------------------------------------------------------------
# Fused Pallas kernel: one grid step == one image (N axis), everything in VMEM
# ---------------------------------------------------------------------------

def _fused_bottleneck_kernel(x_ref,          # (1, H, W, Cin)   bf16
                             w1_ref,         # (Cin, Cmid)      bf16
                             s1_ref, b1_ref, # (1, Cmid)        f32
                             w2_ref,         # (9, Cmid, Cmid)  bf16
                             s2_ref, b2_ref, # (1, Cmid)        f32
                             w3_ref,         # (Cmid, Cout)     bf16
                             s3_ref, b3_ref, # (1, Cout)        f32
                             o_ref,          # (1, H, W, Cout)  bf16
                             o1p_ref,        # VMEM scratch (H+2, W+2, Cmid) bf16
                             col_ref):       # VMEM scratch (H+2, W,   Cmid) bf16
    _, H, W, Cin = x_ref.shape
    Cmid = w1_ref.shape[1]
    Cout = w3_ref.shape[1]
    M = H * W

    # Load the input tile once (bf16); reused for conv1 and (upcast) residual.
    x2d = x_ref[0].reshape(M, Cin)

    # ---- conv1 (1x1) + bn1 + relu (f32 epilogue) -------------------------
    y1 = jnp.dot(x2d, w1_ref[...], preferred_element_type=jnp.float32)
    y1 = jnp.maximum(y1 * s1_ref[...] + b1_ref[...], 0.0)

    # ---- write conv1 output into the zero-haloed bf16 VMEM scratch -------
    # Border is re-zeroed every grid step (scratch persists across steps and
    # with megacore "parallel" sharding we cannot rely on step 0 running on
    # every core); the interior is fully overwritten each step.
    zrow = jnp.zeros((1, W + 2, Cmid), jnp.bfloat16)
    zcol = jnp.zeros((H + 2, 1, Cmid), jnp.bfloat16)
    o1p_ref[0:1, :, :] = zrow
    o1p_ref[H + 1:H + 2, :, :] = zrow
    o1p_ref[:, 0:1, :] = zcol
    o1p_ref[:, W + 1:W + 2, :] = zcol
    o1p_ref[1:H + 1, 1:W + 1, :] = y1.astype(jnp.bfloat16).reshape(H, W, Cmid)

    # ---- conv2 (3x3, stride=1, pad=1) + bn2 + relu ------------------------
    # 3 kw-shifted staging copies (one sublane shift each) into col_ref; each
    # staged column is reused for 3 kh taps via aligned leading-axis slices,
    # so the 9 tap matmul operands need no per-tap relayout.  f32 accumulator
    # initialized from the first tap; operands already bf16 (no per-tap cast).
    acc = None
    for kw in range(3):
        col_ref[...] = o1p_ref[:, kw:kw + W, :]
        for kh in range(3):
            patch = col_ref[kh:kh + H].reshape(M, Cmid)
            d = jnp.dot(patch, w2_ref[kh * 3 + kw],
                        preferred_element_type=jnp.float32)
            acc = d if acc is None else acc + d
    y2 = jnp.maximum(acc * s2_ref[...] + b2_ref[...], 0.0)        # f32 epilogue

    # ---- conv3 (1x1) + bn3 + residual add + relu --------------------------
    y3 = jnp.dot(y2.astype(jnp.bfloat16), w3_ref[...],
                 preferred_element_type=jnp.float32)
    y3 = jnp.maximum(y3 * s3_ref[...] + b3_ref[...] + x2d.astype(jnp.float32),
                     0.0)                                         # residual in f32
    o_ref[...] = y3.astype(o_ref.dtype).reshape(1, H, W, Cout)    # bf16 store


# ---------------------------------------------------------------------------
# Wrappers
# ---------------------------------------------------------------------------

def fold_bn(gamma, beta, mean, var, eps=1e-5):
    scale = gamma / jnp.sqrt(var + eps)
    bias = beta - mean * scale
    return (scale.reshape(1, -1).astype(jnp.float32),
            bias.reshape(1, -1).astype(jnp.float32))


def _round_up(v, m):
    return (v + m - 1) // m * m


def _vmem_limit_bytes(H, W, Cin, Cmid, Cout):
    """Padding-aware VMEM budget, capped by the actual hardware VMEM size."""
    cin_p = _round_up(Cin, 128)
    cmid_p = _round_up(Cmid, 128)
    cout_p = _round_up(Cout, 128)
    w_p = _round_up(W, 16)          # bf16 sublane packing
    wp2_p = _round_up(W + 2, 16)

    x_blk = H * w_p * cin_p * 2                         # bf16 input block
    o_blk = H * w_p * cout_p * 2                        # bf16 output block
    scratch = ((H + 2) * wp2_p * cmid_p + (H + 2) * w_p * cmid_p) * 2
    # Constant-index weights/scales: counted once (revisited, not re-DMA'd).
    weights = (_round_up(Cin, 16) * cmid_p
               + 9 * _round_up(Cmid, 16) * cmid_p
               + _round_up(Cmid, 16) * cout_p) * 2 + 6 * 8 * 128 * 4
    # Live f32 intermediates (y1/acc/y2, y3) + upcast residual.
    work = H * w_p * (3 * cmid_p + cout_p + cin_p) * 4

    est = int((2 * (x_blk + o_blk) + weights + scratch + work) * 1.25)

    try:
        cap = int(getattr(pltpu.get_tpu_info(), "vmem_capacity_bytes", 64 << 20))
    except Exception:
        cap = 64 << 20
    return int(min(cap - (8 << 20), max(16 << 20, est)))


def eca_bottleneck_forward_nhwc(x_nhwc, params):
    """Fused bottleneck forward, NHWC in / NHWC(bf16) out (preferred entry)."""
    N, H, W, Cin = x_nhwc.shape
    w1 = params["w1"].astype(jnp.bfloat16)          # (Cin,  Cmid)
    w2 = params["w2"].astype(jnp.bfloat16)          # (9, Cmid, Cmid)
    w3 = params["w3"].astype(jnp.bfloat16)          # (Cmid, Cout)
    Cmid = w1.shape[1]
    Cout = w3.shape[1]
    assert Cout == Cin, "stride=1 / downsample=None requires inplanes == planes*4"

    s1, b1 = fold_bn(*params["bn1"])
    s2, b2 = fold_bn(*params["bn2"])
    s3, b3 = fold_bn(*params["bn3"])

    x_nhwc = x_nhwc.astype(jnp.bfloat16)            # bf16 at the HBM boundary

    flops = 2 * N * H * W * (Cin * Cmid + 9 * Cmid * Cmid + Cmid * Cout)
    bytes_accessed = (x_nhwc.size * 2 + N * H * W * Cout * 2
                      + (w1.size + w2.size + w3.size) * 2
                      + 2 * (2 * Cmid + Cout) * 4)

    const2 = lambda n: (0, 0)
    const3 = lambda n: (0, 0, 0)

    out = pl.pallas_call(
        _fused_bottleneck_kernel,
        out_shape=jax.ShapeDtypeStruct((N, H, W, Cout), jnp.bfloat16),
        grid_spec=pltpu.PrefetchScalarGridSpec(
            num_scalar_prefetch=0,
            grid=(N,),
            in_specs=[
                pl.BlockSpec((1, H, W, Cin), lambda n: (n, 0, 0, 0)),   # x (tile)
                pl.BlockSpec((Cin, Cmid), const2),                      # w1 (resident)
                pl.BlockSpec((1, Cmid), const2),                        # s1
                pl.BlockSpec((1, Cmid), const2),                        # b1
                pl.BlockSpec((9, Cmid, Cmid), const3),                  # w2
                pl.BlockSpec((1, Cmid), const2),                        # s2
                pl.BlockSpec((1, Cmid), const2),                        # b2
                pl.BlockSpec((Cmid, Cout), const2),                     # w3
                pl.BlockSpec((1, Cout), const2),                        # s3
                pl.BlockSpec((1, Cout), const2),                        # b3
            ],
            out_specs=pl.BlockSpec((1, H, W, Cout), lambda n: (n, 0, 0, 0)),
            scratch_shapes=[
                pltpu.VMEM((H + 2, W + 2, Cmid), jnp.bfloat16),   # halo scratch
                pltpu.VMEM((H + 2, W, Cmid), jnp.bfloat16),       # kw staging
            ],
        ),
        compiler_params=pltpu.CompilerParams(
            dimension_semantics=("parallel",),
            vmem_limit_bytes=_vmem_limit_bytes(H, W, Cin, Cmid, Cout),
        ),
        cost_estimate=pl.CostEstimate(flops=flops, transcendentals=0,
                                      bytes_accessed=bytes_accessed),
    )(x_nhwc, w1, s1, b1, w2, s2, b2, w3, s3, b3)
    return out


def eca_bottleneck_forward(x_nchw, params):
    """NCHW compatibility wrapper (matches the PyTorch module's layout)."""
    x = jnp.transpose(x_nchw, (0, 2, 3, 1))
    y = eca_bottleneck_forward_nhwc(x, params)
    return jnp.transpose(y, (0, 3, 1, 2))


# ---------------------------------------------------------------------------
# Pure-JAX reference (mirrors the kernel's bf16-operand / f32-accumulate math)
# ---------------------------------------------------------------------------

def reference_forward_nhwc(x, params):
    N, H, W, Cin = x.shape

    def bn(y, p):
        s, b = fold_bn(*p)
        return y * s.reshape(1, 1, 1, -1) + b.reshape(1, 1, 1, -1)

    w1 = params["w1"].astype(jnp.bfloat16)
    w2 = params["w2"].astype(jnp.bfloat16)
    w3 = params["w3"].astype(jnp.bfloat16)
    Cmid = w1.shape[1]

    xb = x.astype(jnp.bfloat16)

    o = jnp.einsum("nhwc,cd->nhwd", xb, w1, preferred_element_type=jnp.float32)
    o = jax.nn.relu(bn(o, params["bn1"])).astype(jnp.bfloat16)   # bf16 scratch

    op = jnp.pad(o, ((0, 0), (1, 1), (1, 1), (0, 0)))
    acc = jnp.zeros((N, H, W, Cmid), jnp.float32)
    for kh in range(3):
        for kw in range(3):
            acc = acc + jnp.einsum(
                "nhwc,cd->nhwd", op[:, kh:kh + H, kw:kw + W, :],
                w2[kh * 3 + kw], preferred_element_type=jnp.float32)
    o = jax.nn.relu(bn(acc, params["bn2"]))

    o = jnp.einsum("nhwc,cd->nhwd", o.astype(jnp.bfloat16), w3,
                   preferred_element_type=jnp.float32)
    o = jax.nn.relu(bn(o, params["bn3"]) + xb.astype(jnp.float32))
    return o


def reference_forward(x_nchw, params):
    x = jnp.transpose(x_nchw, (0, 2, 3, 1))
    y = reference_forward_nhwc(x, params)
    return jnp.transpose(y, (0, 3, 1, 2))


# ---------------------------------------------------------------------------
# Main
# ---------------------------------------------------------------------------

if __name__ == "__main__":
    # Small shapes: inplanes=16, planes=4 (expansion 4 -> out=16), N=2, H=W=16.
    inplanes, planes = 16, 4
    N, H, W = 2, 16, 16
    outplanes = planes * 4  # == inplanes so the residual add is valid

    key = jax.random.PRNGKey(0)
    k0, k1, k2, k3 = jax.random.split(key, 4)

    x = jax.random.normal(k0, (N, inplanes, H, W), dtype=jnp.float32)

    # Conv weights stored channels-last for the matmul formulation:
    #   w1: (inplanes, planes), w2: (9, planes, planes), w3: (planes, outplanes)
    w1 = 0.1 * jax.random.normal(k1, (inplanes, planes), dtype=jnp.float32)
    w2 = 0.1 * jax.random.normal(k2, (9, planes, planes), dtype=jnp.float32)
    w3 = 0.1 * jax.random.normal(k3, (planes, outplanes), dtype=jnp.float32)

    def bn_params(c, base):
        gamma = 1.0 + 0.01 * jnp.arange(c, dtype=jnp.float32)
        beta = 0.02 * jnp.arange(c, dtype=jnp.float32) + base
        mean = 0.001 * jnp.arange(c, dtype=jnp.float32)
        var = 1.0 + 0.005 * jnp.arange(c, dtype=jnp.float32)
        return (gamma, beta, mean, var)

    params = {
        "w1": w1, "w2": w2, "w3": w3,
        "bn1": bn_params(planes, 0.00),
        "bn2": bn_params(planes, 0.01),
        "bn3": bn_params(outplanes, 0.02),
    }

    out = jax.jit(eca_bottleneck_forward)(x, params)
    out = jax.block_until_ready(out)

    ref = jax.block_until_ready(reference_forward(x, params))
    np.testing.assert_allclose(np.asarray(out).astype(np.float32),
                               np.asarray(ref),
                               rtol=2e-2, atol=2e-2)
    assert out.shape == (N, inplanes, H, W)
    print("KERNEL_OK")
</pallas_src>

<mosaic_0001>
module attributes {stable_mosaic.version = 11 : i64} {
  func.func @_fused_bottleneck_kernel(%arg0: i32, %arg1: memref<1x16x16x16xbf16, #tpu.memory_space<vmem>>, %arg2: memref<16x4xbf16, #tpu.memory_space<vmem>>, %arg3: memref<1x4xf32, #tpu.memory_space<vmem>>, %arg4: memref<1x4xf32, #tpu.memory_space<vmem>>, %arg5: memref<9x4x4xbf16, #tpu.memory_space<vmem>>, %arg6: memref<1x4xf32, #tpu.memory_space<vmem>>, %arg7: memref<1x4xf32, #tpu.memory_space<vmem>>, %arg8: memref<4x16xbf16, #tpu.memory_space<vmem>>, %arg9: memref<1x16xf32, #tpu.memory_space<vmem>>, %arg10: memref<1x16xf32, #tpu.memory_space<vmem>>, %arg11: memref<1x16x16x16xbf16, #tpu.memory_space<vmem>>, %arg12: memref<18x18x4xbf16, #tpu.memory_space<vmem>>, %arg13: memref<18x16x4xbf16, #tpu.memory_space<vmem>>) attributes {dimension_semantics = [#tpu.dimension_semantics<parallel>], iteration_bounds = array<i64: 2>, scalar_prefetch = 0 : i64, scratch_operands = 2 : i64, tpu.core_type = #tpu.core_type<tc>, window_params = [{transform_indices = @transform_0, window_bounds = array<i64: 1, 16, 16, 16>}, {pipeline_mode = #tpu.pipeline_mode<synchronous>, transform_indices = @transform_1, window_bounds = array<i64: 16, 4>}, {pipeline_mode = #tpu.pipeline_mode<synchronous>, transform_indices = @transform_2, window_bounds = array<i64: 1, 4>}, {pipeline_mode = #tpu.pipeline_mode<synchronous>, transform_indices = @transform_3, window_bounds = array<i64: 1, 4>}, {pipeline_mode = #tpu.pipeline_mode<synchronous>, transform_indices = @transform_4, window_bounds = array<i64: 9, 4, 4>}, {pipeline_mode = #tpu.pipeline_mode<synchronous>, transform_indices = @transform_5, window_bounds = array<i64: 1, 4>}, {pipeline_mode = #tpu.pipeline_mode<synchronous>, transform_indices = @transform_6, window_bounds = array<i64: 1, 4>}, {pipeline_mode = #tpu.pipeline_mode<synchronous>, transform_indices = @transform_7, window_bounds = array<i64: 4, 16>}, {pipeline_mode = #tpu.pipeline_mode<synchronous>, transform_indices = @transform_8, window_bounds = array<i64: 1, 16>}, {pipeline_mode = #tpu.pipeline_mode<synchronous>, transform_indices = @transform_9, window_bounds = array<i64: 1, 16>}, {transform_indices = @transform_10, window_bounds = array<i64: 1, 16, 16, 16>}]} {
    %c0 = arith.constant 0 : index
    %c0_0 = arith.constant 0 : index
    %c0_1 = arith.constant 0 : index
    %c0_2 = arith.constant 0 : index
    %0 = vector.load %arg1[%c0, %c0_0, %c0_1, %c0_2] : memref<1x16x16x16xbf16, #tpu.memory_space<vmem>>, vector<1x16x16x16xbf16>
    %1 = vector.shape_cast %0 : vector<1x16x16x16xbf16> to vector<16x16x16xbf16>
    %2 = vector.shape_cast %1 : vector<16x16x16xbf16> to vector<256x16xbf16>
    %c0_3 = arith.constant 0 : index
    %c0_4 = arith.constant 0 : index
    %3 = vector.load %arg2[%c0_3, %c0_4] : memref<16x4xbf16, #tpu.memory_space<vmem>>, vector<16x4xbf16>
    %cst = arith.constant dense<0.000000e+00> : vector<256x4xf32>
    %4 = tpu.matmul %2, %3, %cst {dimension_numbers = #tpu.dot_dimension_numbers<[1], [0], [0], [1], [0, 0, 1, 1], [], []>} : vector<256x16xbf16>, vector<16x4xbf16>, vector<256x4xf32> -> vector<256x4xf32>
    %c0_5 = arith.constant 0 : index
    %c0_6 = arith.constant 0 : index
    %5 = vector.load %arg3[%c0_5, %c0_6] : memref<1x4xf32, #tpu.memory_space<vmem>>, vector<1x4xf32>
    %6 = vector.broadcast %5 : vector<1x4xf32> to vector<256x4xf32>
    %7 = arith.mulf %4, %6 : vector<256x4xf32>
    %c0_7 = arith.constant 0 : index
    %c0_8 = arith.constant 0 : index
    %8 = vector.load %arg4[%c0_7, %c0_8] : memref<1x4xf32, #tpu.memory_space<vmem>>, vector<1x4xf32>
    %9 = vector.broadcast %8 : vector<1x4xf32> to vector<256x4xf32>
    %10 = arith.addf %7, %9 : vector<256x4xf32>
    %cst_9 = arith.constant 0.000000e+00 : f32
    %11 = vector.broadcast %cst_9 : f32 to vector<256x4xf32>
    %12 = arith.maximumf %10, %11 : vector<256x4xf32>
    %cst_10 = arith.constant 0.000000e+00 : bf16
    %13 = vector.broadcast %cst_10 : bf16 to vector<1x18x4xbf16>
    %cst_11 = arith.constant 0.000000e+00 : bf16
    %14 = vector.broadcast %cst_11 : bf16 to vector<18x1x4xbf16>
    %c0_12 = arith.constant 0 : index
    %c0_13 = arith.constant 0 : index
    %c0_14 = arith.constant 0 : index
    %15 = vector.load %arg12[%c0_12, %c0_13, %c0_14] : memref<18x18x4xbf16, #tpu.memory_space<vmem>>, vector<1x18x4xbf16>
    tpu.vector_store %arg12[%c0_12, %c0_13, %c0_14], %13 {strides = array<i32>} : memref<18x18x4xbf16, #tpu.memory_space<vmem>>, vector<1x18x4xbf16>,
    %c17 = arith.constant 17 : index
    %c0_15 = arith.constant 0 : index
    %c0_16 = arith.constant 0 : index
    %16 = vector.load %arg12[%c17, %c0_15, %c0_16] : memref<18x18x4xbf16, #tpu.memory_space<vmem>>, vector<1x18x4xbf16>
    tpu.vector_store %arg12[%c17, %c0_15, %c0_16], %13 {strides = array<i32>} : memref<18x18x4xbf16, #tpu.memory_space<vmem>>, vector<1x18x4xbf16>,
    %c0_17 = arith.constant 0 : index
    %c0_18 = arith.constant 0 : index
    %c0_19 = arith.constant 0 : index
    %17 = vector.load %arg12[%c0_17, %c0_18, %c0_19] : memref<18x18x4xbf16, #tpu.memory_space<vmem>>, vector<18x1x4xbf16>
    tpu.vector_store %arg12[%c0_17, %c0_18, %c0_19], %14 {strides = array<i32>} : memref<18x18x4xbf16, #tpu.memory_space<vmem>>, vector<18x1x4xbf16>,
    %c0_20 = arith.constant 0 : index
    %c17_21 = arith.constant 17 : index
    %c0_22 = arith.constant 0 : index
    %18 = vector.load %arg12[%c0_20, %c17_21, %c0_22] : memref<18x18x4xbf16, #tpu.memory_space<vmem>>, vector<18x1x4xbf16>
    tpu.vector_store %arg12[%c0_20, %c17_21, %c0_22], %14 {strides = array<i32>} : memref<18x18x4xbf16, #tpu.memory_space<vmem>>, vector<18x1x4xbf16>,
    %19 = arith.truncf %12 : vector<256x4xf32> to vector<256x4xbf16>
    %20 = vector.shape_cast %19 : vector<256x4xbf16> to vector<16x16x4xbf16>
    %c1 = arith.constant 1 : index
    %c1_23 = arith.constant 1 : index
    %c0_24 = arith.constant 0 : index
    %21 = vector.load %arg12[%c1, %c1_23, %c0_24] : memref<18x18x4xbf16, #tpu.memory_space<vmem>>, vector<16x16x4xbf16>
    tpu.vector_store %arg12[%c1, %c1_23, %c0_24], %20 {strides = array<i32>} : memref<18x18x4xbf16, #tpu.memory_space<vmem>>, vector<16x16x4xbf16>,
    %c0_25 = arith.constant 0 : index
    %c0_26 = arith.constant 0 : index
    %c0_27 = arith.constant 0 : index
    %22 = vector.load %arg12[%c0_25, %c0_26, %c0_27] : memref<18x18x4xbf16, #tpu.memory_space<vmem>>, vector<18x16x4xbf16>
    %c0_28 = arith.constant 0 : index
    %c0_29 = arith.constant 0 : index
    %c0_30 = arith.constant 0 : index
    %23 = vector.load %arg13[%c0_28, %c0_29, %c0_30] : memref<18x16x4xbf16, #tpu.memory_space<vmem>>, vector<18x16x4xbf16>
    tpu.vector_store %arg13[%c0_28, %c0_29, %c0_30], %22 {strides = array<i32>} : memref<18x16x4xbf16, #tpu.memory_space<vmem>>, vector<18x16x4xbf16>,
    %c0_31 = arith.constant 0 : index
    %c0_32 = arith.constant 0 : index
    %c0_33 = arith.constant 0 : index
    %24 = vector.load %arg13[%c0_31, %c0_32, %c0_33] : memref<18x16x4xbf16, #tpu.memory_space<vmem>>, vector<16x16x4xbf16>
    %25 = vector.shape_cast %24 : vector<16x16x4xbf16> to vector<256x4xbf16>
    %c0_34 = arith.constant 0 : index
    %c0_35 = arith.constant 0 : index
    %c0_36 = arith.constant 0 : index
    %26 = vector.load %arg5[%c0_34, %c0_35, %c0_36] : memref<9x4x4xbf16, #tpu.memory_space<vmem>>, vector<1x4x4xbf16>
    %27 = vector.shape_cast %26 : vector<1x4x4xbf16> to vector<4x4xbf16>
    %cst_37 = arith.constant dense<0.000000e+00> : vector<256x4xf32>
    %28 = tpu.matmul %25, %27, %cst_37 {dimension_numbers = #tpu.dot_dimension_numbers<[1], [0], [0], [1], [0, 0, 1, 1], [], []>} : vector<256x4xbf16>, vector<4x4xbf16>, vector<256x4xf32> -> vector<256x4xf32>
    %c1_38 = arith.constant 1 : index
    %c0_39 = arith.constant 0 : index
    %c0_40 = arith.constant 0 : index
    %29 = vector.load %arg13[%c1_38, %c0_39, %c0_40] : memref<18x16x4xbf16, #tpu.memory_space<vmem>>, vector<16x16x4xbf16>
    %30 = vector.shape_cast %29 : vector<16x16x4xbf16> to vector<256x4xbf16>
    %c3 = arith.constant 3 : index
    %c0_41 = arith.constant 0 : index
    %c0_42 = arith.constant 0 : index
    %31 = vector.load %arg5[%c3, %c0_41, %c0_42] : memref<9x4x4xbf16, #tpu.memory_space<vmem>>, vector<1x4x4xbf16>
    %32 = vector.shape_cast %31 : vector<1x4x4xbf16> to vector<4x4xbf16>
    %cst_43 = arith.constant dense<0.000000e+00> : vector<256x4xf32>
    %33 = tpu.matmul %30, %32, %cst_43 {dimension_numbers = #tpu.dot_dimension_numbers<[1], [0], [0], [1], [0, 0, 1, 1], [], []>} : vector<256x4xbf16>, vector<4x4xbf16>, vector<256x4xf32> -> vector<256x4xf32>
    %34 = arith.addf %28, %33 : vector<256x4xf32>
    %c2 = arith.constant 2 : index
    %c0_44 = arith.constant 0 : index
    %c0_45 = arith.constant 0 : index
    %35 = vector.load %arg13[%c2, %c0_44, %c0_45] : memref<18x16x4xbf16, #tpu.memory_space<vmem>>, vector<16x16x4xbf16>
    %36 = vector.shape_cast %35 : vector<16x16x4xbf16> to vector<256x4xbf16>
    %c6 = arith.constant 6 : index
    %c0_46 = arith.constant 0 : index
    %c0_47 = arith.constant 0 : index
    %37 = vector.load %arg5[%c6, %c0_46, %c0_47] : memref<9x4x4xbf16, #tpu.memory_space<vmem>>, vector<1x4x4xbf16>
    %38 = vector.shape_cast %37 : vector<1x4x4xbf16> to vector<4x4xbf16>
    %cst_48 = arith.constant dense<0.000000e+00> : vector<256x4xf32>
    %39 = tpu.matmul %36, %38, %cst_48 {dimension_numbers = #tpu.dot_dimension_numbers<[1], [0], [0], [1], [0, 0, 1, 1], [], []>} : vector<256x4xbf16>, vector<4x4xbf16>, vector<256x4xf32> -> vector<256x4xf32>
    %40 = arith.addf %34, %39 : vector<256x4xf32>
    %c0_49 = arith.constant 0 : index
    %c1_50 = arith.constant 1 : index
    %c0_51 = arith.constant 0 : index
    %41 = vector.load %arg12[%c0_49, %c1_50, %c0_51] : memref<18x18x4xbf16, #tpu.memory_space<vmem>>, vector<18x16x4xbf16>
    %c0_52 = arith.constant 0 : index
    %c0_53 = arith.constant 0 : index
    %c0_54 = arith.constant 0 : index
    %42 = vector.load %arg13[%c0_52, %c0_53, %c0_54] : memref<18x16x4xbf16, #tpu.memory_space<vmem>>, vector<18x16x4xbf16>
    tpu.vector_store %arg13[%c0_52, %c0_53, %c0_54], %41 {strides = array<i32>} : memref<18x16x4xbf16, #tpu.memory_space<vmem>>, vector<18x16x4xbf16>,
    %c0_55 = arith.constant 0 : index
    %c0_56 = arith.constant 0 : index
    %c0_57 = arith.constant 0 : index
    %43 = vector.load %arg13[%c0_55, %c0_56, %c0_57] : memref<18x16x4xbf16, #tpu.memory_space<vmem>>, vector<16x16x4xbf16>
    %44 = vector.shape_cast %43 : vector<16x16x4xbf16> to vector<256x4xbf16>
    %c1_58 = arith.constant 1 : index
    %c0_59 = arith.constant 0 : index
    %c0_60 = arith.constant 0 : index
    %45 = vector.load %arg5[%c1_58, %c0_59, %c0_60] : memref<9x4x4xbf16, #tpu.memory_space<vmem>>, vector<1x4x4xbf16>
    %46 = vector.shape_cast %45 : vector<1x4x4xbf16> to vector<4x4xbf16>
    %cst_61 = arith.constant dense<0.000000e+00> : vector<256x4xf32>
    %47 = tpu.matmul %44, %46, %cst_61 {dimension_numbers = #tpu.dot_dimension_numbers<[1], [0], [0], [1], [0, 0, 1, 1], [], []>} : vector<256x4xbf16>, vector<4x4xbf16>, vector<256x4xf32> -> vector<256x4xf32>
    %48 = arith.addf %40, %47 : vector<256x4xf32>
    %c1_62 = arith.constant 1 : index
    %c0_63 = arith.constant 0 : index
    %c0_64 = arith.constant 0 : index
    %49 = vector.load %arg13[%c1_62, %c0_63, %c0_64] : memref<18x16x4xbf16, #tpu.memory_space<vmem>>, vector<16x16x4xbf16>
    %50 = vector.shape_cast %49 : vector<16x16x4xbf16> to vector<256x4xbf16>
    %c4 = arith.constant 4 : index
    %c0_65 = arith.constant 0 : index
    %c0_66 = arith.constant 0 : index
    %51 = vector.load %arg5[%c4, %c0_65, %c0_66] : memref<9x4x4xbf16, #tpu.memory_space<vmem>>, vector<1x4x4xbf16>
    %52 = vector.shape_cast %51 : vector<1x4x4xbf16> to vector<4x4xbf16>
    %cst_67 = arith.constant dense<0.000000e+00> : vector<256x4xf32>
    %53 = tpu.matmul %50, %52, %cst_67 {dimension_numbers = #tpu.dot_dimension_numbers<[1], [0], [0], [1], [0, 0, 1, 1], [], []>} : vector<256x4xbf16>, vector<4x4xbf16>, vector<256x4xf32> -> vector<256x4xf32>
    %54 = arith.addf %48, %53 : vector<256x4xf32>
    %c2_68 = arith.constant 2 : index
    %c0_69 = arith.constant 0 : index
    %c0_70 = arith.constant 0 : index
    %55 = vector.load %arg13[%c2_68, %c0_69, %c0_70] : memref<18x16x4xbf16, #tpu.memory_space<vmem>>, vector<16x16x4xbf16>
    %56 = vector.shape_cast %55 : vector<16x16x4xbf16> to vector<256x4xbf16>
    %c7 = arith.constant 7 : index
    %c0_71 = arith.constant 0 : index
    %c0_72 = arith.constant 0 : index
    %57 = vector.load %arg5[%c7, %c0_71, %c0_72] : memref<9x4x4xbf16, #tpu.memory_space<vmem>>, vector<1x4x4xbf16>
    %58 = vector.shape_cast %57 : vector<1x4x4xbf16> to vector<4x4xbf16>
    %cst_73 = arith.constant dense<0.000000e+00> : vector<256x4xf32>
    %59 = tpu.matmul %56, %58, %cst_73 {dimension_numbers = #tpu.dot_dimension_numbers<[1], [0], [0], [1], [0, 0, 1, 1], [], []>} : vector<256x4xbf16>, vector<4x4xbf16>, vector<256x4xf32> -> vector<256x4xf32>
    %60 = arith.addf %54, %59 : vector<256x4xf32>
    %c0_74 = arith.constant 0 : index
    %c2_75 = arith.constant 2 : index
    %c0_76 = arith.constant 0 : index
    %61 = vector.load %arg12[%c0_74, %c2_75, %c0_76] : memref<18x18x4xbf16, #tpu.memory_space<vmem>>, vector<18x16x4xbf16>
    %c0_77 = arith.constant 0 : index
    %c0_78 = arith.constant 0 : index
    %c0_79 = arith.constant 0 : index
    %62 = vector.load %arg13[%c0_77, %c0_78, %c0_79] : memref<18x16x4xbf16, #tpu.memory_space<vmem>>, vector<18x16x4xbf16>
    tpu.vector_store %arg13[%c0_77, %c0_78, %c0_79], %61 {strides = array<i32>} : memref<18x16x4xbf16, #tpu.memory_space<vmem>>, vector<18x16x4xbf16>,
    %c0_80 = arith.constant 0 : index
    %c0_81 = arith.constant 0 : index
    %c0_82 = arith.constant 0 : index
    %63 = vector.load %arg13[%c0_80, %c0_81, %c0_82] : memref<18x16x4xbf16, #tpu.memory_space<vmem>>, vector<16x16x4xbf16>
    %64 = vector.shape_cast %63 : vector<16x16x4xbf16> to vector<256x4xbf16>
    %c2_83 = arith.constant 2 : index
    %c0_84 = arith.constant 0 : index
    %c0_85 = arith.constant 0 : index
    %65 = vector.load %arg5[%c2_83, %c0_84, %c0_85] : memref<9x4x4xbf16, #tpu.memory_space<vmem>>, vector<1x4x4xbf16>
    %66 = vector.shape_cast %65 : vector<1x4x4xbf16> to vector<4x4xbf16>
    %cst_86 = arith.constant dense<0.000000e+00> : vector<256x4xf32>
    %67 = tpu.matmul %64, %66, %cst_86 {dimension_numbers = #tpu.dot_dimension_numbers<[1], [0], [0], [1], [0, 0, 1, 1], [], []>} : vector<256x4xbf16>, vector<4x4xbf16>, vector<256x4xf32> -> vector<256x4xf32>
    %68 = arith.addf %60, %67 : vector<256x4xf32>
    %c1_87 = arith.constant 1 : index
    %c0_88 = arith.constant 0 : index
    %c0_89 = arith.constant 0 : index
    %69 = vector.load %arg13[%c1_87, %c0_88, %c0_89] : memref<18x16x4xbf16, #tpu.memory_space<vmem>>, vector<16x16x4xbf16>
    %70 = vector.shape_cast %69 : vector<16x16x4xbf16> to vector<256x4xbf16>
    %c5 = arith.constant 5 : index
    %c0_90 = arith.constant 0 : index
    %c0_91 = arith.constant 0 : index
    %71 = vector.load %arg5[%c5, %c0_90, %c0_91] : memref<9x4x4xbf16, #tpu.memory_space<vmem>>, vector<1x4x4xbf16>
    %72 = vector.shape_cast %71 : vector<1x4x4xbf16> to vector<4x4xbf16>
    %cst_92 = arith.constant dense<0.000000e+00> : vector<256x4xf32>
    %73 = tpu.matmul %70, %72, %cst_92 {dimension_numbers = #tpu.dot_dimension_numbers<[1], [0], [0], [1], [0, 0, 1, 1], [], []>} : vector<256x4xbf16>, vector<4x4xbf16>, vector<256x4xf32> -> vector<256x4xf32>
    %74 = arith.addf %68, %73 : vector<256x4xf32>
    %c2_93 = arith.constant 2 : index
    %c0_94 = arith.constant 0 : index
    %c0_95 = arith.constant 0 : index
    %75 = vector.load %arg13[%c2_93, %c0_94, %c0_95] : memref<18x16x4xbf16, #tpu.memory_space<vmem>>, vector<16x16x4xbf16>
    %76 = vector.shape_cast %75 : vector<16x16x4xbf16> to vector<256x4xbf16>
    %c8 = arith.constant 8 : index
    %c0_96 = arith.constant 0 : index
    %c0_97 = arith.constant 0 : index
    %77 = vector.load %arg5[%c8, %c0_96, %c0_97] : memref<9x4x4xbf16, #tpu.memory_space<vmem>>, vector<1x4x4xbf16>
    %78 = vector.shape_cast %77 : vector<1x4x4xbf16> to vector<4x4xbf16>
    %cst_98 = arith.constant dense<0.000000e+00> : vector<256x4xf32>
    %79 = tpu.matmul %76, %78, %cst_98 {dimension_numbers = #tpu.dot_dimension_numbers<[1], [0], [0], [1], [0, 0, 1, 1], [], []>} : vector<256x4xbf16>, vector<4x4xbf16>, vector<256x4xf32> -> vector<256x4xf32>
    %80 = arith.addf %74, %79 : vector<256x4xf32>
    %c0_99 = arith.constant 0 : index
    %c0_100 = arith.constant 0 : index
    %81 = vector.load %arg6[%c0_99, %c0_100] : memref<1x4xf32, #tpu.memory_space<vmem>>, vector<1x4xf32>
    %82 = vector.broadcast %81 : vector<1x4xf32> to vector<256x4xf32>
    %83 = arith.mulf %80, %82 : vector<256x4xf32>
    %c0_101 = arith.constant 0 : index
    %c0_102 = arith.constant 0 : index
    %84 = vector.load %arg7[%c0_101, %c0_102] : memref<1x4xf32, #tpu.memory_space<vmem>>, vector<1x4xf32>
    %85 = vector.broadcast %84 : vector<1x4xf32> to vector<256x4xf32>
    %86 = arith.addf %83, %85 : vector<256x4xf32>
    %cst_103 = arith.constant 0.000000e+00 : f32
    %87 = vector.broadcast %cst_103 : f32 to vector<256x4xf32>
    %88 = arith.maximumf %86, %87 : vector<256x4xf32>
    %89 = arith.truncf %88 : vector<256x4xf32> to vector<256x4xbf16>
    %c0_104 = arith.constant 0 : index
    %c0_105 = arith.constant 0 : index
    %90 = vector.load %arg8[%c0_104, %c0_105] : memref<4x16xbf16, #tpu.memory_space<vmem>>, vector<4x16xbf16>
    %cst_106 = arith.constant dense<0.000000e+00> : vector<256x16xf32>
    %91 = tpu.matmul %89, %90, %cst_106 {dimension_numbers = #tpu.dot_dimension_numbers<[1], [0], [0], [1], [0, 0, 1, 1], [], []>} : vector<256x4xbf16>, vector<4x16xbf16>, vector<256x16xf32> -> vector<256x16xf32>
    %c0_107 = arith.constant 0 : index
    %c0_108 = arith.constant 0 : index
    %92 = vector.load %arg9[%c0_107, %c0_108] : memref<1x16xf32, #tpu.memory_space<vmem>>, vector<1x16xf32>
    %93 = vector.broadcast %92 : vector<1x16xf32> to vector<256x16xf32>
    %94 = arith.mulf %91, %93 : vector<256x16xf32>
    %c0_109 = arith.constant 0 : index
    %c0_110 = arith.constant 0 : index
    %95 = vector.load %arg10[%c0_109, %c0_110] : memref<1x16xf32, #tpu.memory_space<vmem>>, vector<1x16xf32>
    %96 = vector.broadcast %95 : vector<1x16xf32> to vector<256x16xf32>
    %97 = arith.addf %94, %96 : vector<256x16xf32>
    %98 = arith.extf %2 : vector<256x16xbf16> to vector<256x16xf32>
    %99 = arith.addf %97, %98 : vector<256x16xf32>
    %cst_111 = arith.constant 0.000000e+00 : f32
    %100 = vector.broadcast %cst_111 : f32 to vector<256x16xf32>
    %101 = arith.maximumf %99, %100 : vector<256x16xf32>
    %102 = arith.truncf %101 : vector<256x16xf32> to vector<256x16xbf16>
    %103 = vector.shape_cast %102 : vector<256x16xbf16> to vector<1x16x16x16xbf16>
    %c0_112 = arith.constant 0 : index
    %c0_113 = arith.constant 0 : index
    %c0_114 = arith.constant 0 : index
    %c0_115 = arith.constant 0 : index
    %104 = vector.load %arg11[%c0_112, %c0_113, %c0_114, %c0_115] : memref<1x16x16x16xbf16, #tpu.memory_space<vmem>>, vector<1x16x16x16xbf16>
    tpu.vector_store %arg11[%c0_112, %c0_113, %c0_114, %c0_115], %103 {strides = array<i32>} : memref<1x16x16x16xbf16, #tpu.memory_space<vmem>>, vector<1x16x16x16xbf16>,
    return
  }
  func.func @transform_0(%arg0: i32) -> (i32, i32, i32, i32) {
    %c0_i32 = arith.constant 0 : i32
    %c0_i32_0 = arith.constant 0 : i32
    %c0_i32_1 = arith.constant 0 : i32
    %c0_i32_2 = arith.constant 0 : i32
    return %arg0, %c0_i32, %c0_i32_0, %c0_i32_1 : i32, i32, i32, i32
  }
  func.func @transform_1(%arg0: i32) -> (i32, i32) {
    %c0_i32 = arith.constant 0 : i32
    %c0_i32_0 = arith.constant 0 : i32
    %c0_i32_1 = arith.constant 0 : i32
    return %c0_i32, %c0_i32_0 : i32, i32
  }
  func.func @transform_2(%arg0: i32) -> (i32, i32) {
    %c0_i32 = arith.constant 0 : i32
    %c0_i32_0 = arith.constant 0 : i32
    %c0_i32_1 = arith.constant 0 : i32
    return %c0_i32, %c0_i32_0 : i32, i32
  }
  func.func @transform_3(%arg0: i32) -> (i32, i32) {
    %c0_i32 = arith.constant 0 : i32
    %c0_i32_0 = arith.constant 0 : i32
    %c0_i32_1 = arith.constant 0 : i32
    return %c0_i32, %c0_i32_0 : i32, i32
  }
  func.func @transform_4(%arg0: i32) -> (i32, i32, i32) {
    %c0_i32 = arith.constant 0 : i32
    %c0_i32_0 = arith.constant 0 : i32
    %c0_i32_1 = arith.constant 0 : i32
    %c0_i32_2 = arith.constant 0 : i32
    return %c0_i32, %c0_i32_0, %c0_i32_1 : i32, i32, i32
  }
  func.func @transform_5(%arg0: i32) -> (i32, i32) {
    %c0_i32 = arith.constant 0 : i32
    %c0_i32_0 = arith.constant 0 : i32
    %c0_i32_1 = arith.constant 0 : i32
    return %c0_i32, %c0_i32_0 : i32, i32
  }
  func.func @transform_6(%arg0: i32) -> (i32, i32) {
    %c0_i32 = arith.constant 0 : i32
    %c0_i32_0 = arith.constant 0 : i32
    %c0_i32_1 = arith.constant 0 : i32
    return %c0_i32, %c0_i32_0 : i32, i32
  }
  func.func @transform_7(%arg0: i32) -> (i32, i32) {
    %c0_i32 = arith.constant 0 : i32
    %c0_i32_0 = arith.constant 0 : i32
    %c0_i32_1 = arith.constant 0 : i32
    return %c0_i32, %c0_i32_0 : i32, i32
  }
  func.func @transform_8(%arg0: i32) -> (i32, i32) {
    %c0_i32 = arith.constant 0 : i32
    %c0_i32_0 = arith.constant 0 : i32
    %c0_i32_1 = arith.constant 0 : i32
    return %c0_i32, %c0_i32_0 : i32, i32
  }
  func.func @transform_9(%arg0: i32) -> (i32, i32) {
    %c0_i32 = arith.constant 0 : i32
    %c0_i32_0 = arith.constant 0 : i32
    %c0_i32_1 = arith.constant 0 : i32
    return %c0_i32, %c0_i32_0 : i32, i32
  }
  func.func @transform_10(%arg0: i32) -> (i32, i32, i32, i32) {
    %c0_i32 = arith.constant 0 : i32
    %c0_i32_0 = arith.constant 0 : i32
    %c0_i32_1 = arith.constant 0 : i32
    %c0_i32_2 = arith.constant 0 : i32
    return %arg0, %c0_i32, %c0_i32_0, %c0_i32_1 : i32, i32, i32, i32
  }
}

</mosaic_0001>

<llo_original>
// kernel: eca_bottleneck_forward.1
$region0: #{eca_bottleneck_forward.1}
  #allocation0 [shape = 'u32[]', space=smem, size = 0x4, offset = 0x4, fixed_abs, tag = 'smem constant byte address 0x4 - core index']
  #allocation1 [shape = 'u32[72,128]{1,0:T(1,128)}', space=vmem, size = 0x9000, scoped, tag = 'internal scratch']
  #allocation2 [shape = 'bf16[18,18,4]{2,1,0:T(8,128)(2,1)}', space=vmem, size = 0x1b000, scoped, tag = 'scratch operand']
  #allocation3 [shape = 'bf16[18,16,4]{2,1,0:T(8,128)(2,1)}', space=vmem, size = 0x12000, scoped, tag = 'scratch operand']
  %s0 = inlined_call_operand.vmem [shape: bf16[2,16,16,16], index: 0, kind: input, shape index: {}]
  %s1 = inlined_call_operand.vmem [shape: bf16[16,4], index: 1, kind: input, shape index: {}]
  %s2 = inlined_call_operand.vmem [shape: f32[1,4], index: 2, kind: input, shape index: {}]
  %s3 = inlined_call_operand.vmem [shape: f32[1,4], index: 3, kind: input, shape index: {}]
  %s4 = inlined_call_operand.vmem [shape: bf16[9,4,4], index: 4, kind: input, shape index: {}]
  %s5 = inlined_call_operand.vmem [shape: f32[1,4], index: 5, kind: input, shape index: {}]
  %s6 = inlined_call_operand.vmem [shape: f32[1,4], index: 6, kind: input, shape index: {}]
  %s7 = inlined_call_operand.vmem [shape: bf16[4,16], index: 7, kind: input, shape index: {}]
  %s8 = inlined_call_operand.vmem [shape: f32[1,16], index: 8, kind: input, shape index: {}]
  %s9 = inlined_call_operand.vmem [shape: f32[1,16], index: 9, kind: input, shape index: {}]
  %s10 = inlined_call_operand.vmem [shape: bf16[2,16,16,16], index: 10, kind: output, shape index: {}]
  %s11 = sld [smem:[#allocation0]]
  $region73: #{eca_bottleneck_forward.1} parent=0
    _
  %s13 = ssub.s32 1, %s11
  %s14 = scalar_select 0, %s13, %s11
  loop: start=0, step=1, limit=4
  $region2: #{eca_bottleneck_forward.1} parent=0 // loop_pre_header
    _
  $region3: #{eca_bottleneck_forward.1} parent=0 // loop_header
    %s16 = sphi 0, %s20
    %p17 = scmp.ge.s32.totalorder %s16, 4
    %s26 = sphi 0, %s28
    %s29 = sphi 0, %s26
    %s30 = sphi 0, %s29
    %s46 = sphi 0, %s30
    %s50 = sphi 0, %s50
    %s52 = sphi 0, %s50
    %s53 = sphi 0, %s52
    %s67 = sphi 0, %s53
    %s71 = sphi 0, %s71
    %s73 = sphi 0, %s71
    %s74 = sphi 0, %s73
    %s88 = sphi 0, %s74
    %s92 = sphi 0, %s92
    %s94 = sphi 0, %s92
    %s95 = sphi 0, %s94
    %s109 = sphi 0, %s95
    %s113 = sphi 0, %s113
    %s115 = sphi 0, %s113
    %s116 = sphi 0, %s115
    %s130 = sphi 0, %s116
    %s134 = sphi 0, %s134
    %s136 = sphi 0, %s134
    %s137 = sphi 0, %s136
    %s151 = sphi 0, %s137
    %s155 = sphi 0, %s155
    %s157 = sphi 0, %s155
    %s158 = sphi 0, %s157
    %s172 = sphi 0, %s158
    %s176 = sphi 0, %s176
    %s178 = sphi 0, %s176
    %s179 = sphi 0, %s178
    %s193 = sphi 0, %s179
    %s197 = sphi 0, %s197
    %s199 = sphi 0, %s197
    %s200 = sphi 0, %s199
    %s214 = sphi 0, %s200
    %s218 = sphi 0, %s218
    %s220 = sphi 0, %s218
    %s221 = sphi 0, %s220
    %s235 = sphi 0, %s221
    %s241 = sphi 0, %s243
    %s244 = sphi 0, %s241
    %s245 = sphi 0, %s244
    %s261 = sphi 0, %s245
  $region4: #{eca_bottleneck_forward.1} parent=0 // loop_header_branch
    %19 = sbr.rel (%p17) target = $region8
  $region5: #{eca_bottleneck_forward.1} parent=0 // loop_body
    %s21 = ssub.s32 %s16, 1
    %s22 = ssub.s32 %s16, 2
    %s23 = sadd.s32 %s16, 1
    %s24 = ssub.s32 %s16, %s23
    %p25 = scmp.eq.s32.totalorder %s24, 0
    %s27 = sadd.s32 %s26, 1
    %s28 = scalar_select %p25, %s26, %s27
    %p31 = pneg %p25
    %p32 = scmp.eq.s32.totalorder %s16, 1
    %p33 = por %p31, %p32
    %p34 = scmp.ne.s32.totalorder %s26, %s29
    %p35 = scmp.eq.s32.totalorder %s16, 0
    %p36 = por %p34, %p35
    %p37 = scmp.ne.s32.totalorder %s26, %s29
    %p38 = scmp.eq.s32.totalorder %s21, 1
    %p39 = por %p37, %p38
    %p40 = scmp.ne.s32.totalorder %s29, %s30
    %p41 = scmp.eq.s32.totalorder %s21, 0
    %p42 = por %p40, %p41
    %p43 = scmp.ne.s32.totalorder %s29, %s30
    %p44 = scmp.eq.s32.totalorder %s22, 1
    %p45 = por %p43, %p44
    %p47 = scmp.ne.s32.totalorder %s30, %s46
    %p48 = scmp.eq.s32.totalorder %s22, 0
    %p49 = por %p47, %p48
    %s51 = sadd.s32 %s50, 1
    %p54 = scmp.eq.s32.totalorder %s16, 1
    %p55 = scmp.ne.s32.totalorder %s50, %s52
    %p56 = scmp.eq.s32.totalorder %s16, 0
    %p57 = por %p55, %p56
    %p58 = scmp.ne.s32.totalorder %s50, %s52
    %p59 = scmp.eq.s32.totalorder %s21, 1
    %p60 = por %p58, %p59
    %p61 = scmp.ne.s32.totalorder %s52, %s53
    %p62 = scmp.eq.s32.totalorder %s21, 0
    %p63 = por %p61, %p62
    %p64 = scmp.ne.s32.totalorder %s52, %s53
    %p65 = scmp.eq.s32.totalorder %s22, 1
    %p66 = por %p64, %p65
    %p68 = scmp.ne.s32.totalorder %s53, %s67
    %p69 = scmp.eq.s32.totalorder %s22, 0
    %p70 = por %p68, %p69
    %s72 = sadd.s32 %s71, 1
    %p75 = scmp.eq.s32.totalorder %s16, 1
    %p76 = scmp.ne.s32.totalorder %s71, %s73
    %p77 = scmp.eq.s32.totalorder %s16, 0
    %p78 = por %p76, %p77
    %p79 = scmp.ne.s32.totalorder %s71, %s73
    %p80 = scmp.eq.s32.totalorder %s21, 1
    %p81 = por %p79, %p80
    %p82 = scmp.ne.s32.totalorder %s73, %s74
    %p83 = scmp.eq.s32.totalorder %s21, 0
    %p84 = por %p82, %p83
    %p85 = scmp.ne.s32.totalorder %s73, %s74
    %p86 = scmp.eq.s32.totalorder %s22, 1
    %p87 = por %p85, %p86
    %p89 = scmp.ne.s32.totalorder %s74, %s88
    %p90 = scmp.eq.s32.totalorder %s22, 0
    %p91 = por %p89, %p90
    %s93 = sadd.s32 %s92, 1
    %p96 = scmp.eq.s32.totalorder %s16, 1
    %p97 = scmp.ne.s32.totalorder %s92, %s94
    %p98 = scmp.eq.s32.totalorder %s16, 0
    %p99 = por %p97, %p98
    %p100 = scmp.ne.s32.totalorder %s92, %s94
    %p101 = scmp.eq.s32.totalorder %s21, 1
    %p102 = por %p100, %p101
    %p103 = scmp.ne.s32.totalorder %s94, %s95
    %p104 = scmp.eq.s32.totalorder %s21, 0
    %p105 = por %p103, %p104
    %p106 = scmp.ne.s32.totalorder %s94, %s95
    %p107 = scmp.eq.s32.totalorder %s22, 1
    %p108 = por %p106, %p107
    %p110 = scmp.ne.s32.totalorder %s95, %s109
    %p111 = scmp.eq.s32.totalorder %s22, 0
    %p112 = por %p110, %p111
    %s114 = sadd.s32 %s113, 1
    %p117 = scmp.eq.s32.totalorder %s16, 1
    %p118 = scmp.ne.s32.totalorder %s113, %s115
    %p119 = scmp.eq.s32.totalorder %s16, 0
    %p120 = por %p118, %p119
    %p121 = scmp.ne.s32.totalorder %s113, %s115
    %p122 = scmp.eq.s32.totalorder %s21, 1
    %p123 = por %p121, %p122
    %p124 = scmp.ne.s32.totalorder %s115, %s116
    %p125 = scmp.eq.s32.totalorder %s21, 0
    %p126 = por %p124, %p125
    %p127 = scmp.ne.s32.totalorder %s115, %s116
    %p128 = scmp.eq.s32.totalorder %s22, 1
    %p129 = por %p127, %p128
    %p131 = scmp.ne.s32.totalorder %s116, %s130
    %p132 = scmp.eq.s32.totalorder %s22, 0
    %p133 = por %p131, %p132
    %s135 = sadd.s32 %s134, 1
    %p138 = scmp.eq.s32.totalorder %s16, 1
    %p139 = scmp.ne.s32.totalorder %s134, %s136
    %p140 = scmp.eq.s32.totalorder %s16, 0
    %p141 = por %p139, %p140
    %p142 = scmp.ne.s32.totalorder %s134, %s136
    %p143 = scmp.eq.s32.totalorder %s21, 1
    %p144 = por %p142, %p143
    %p145 = scmp.ne.s32.totalorder %s136, %s137
    %p146 = scmp.eq.s32.totalorder %s21, 0
    %p147 = por %p145, %p146
    %p148 = scmp.ne.s32.totalorder %s136, %s137
    %p149 = scmp.eq.s32.totalorder %s22, 1
    %p150 = por %p148, %p149
    %p152 = scmp.ne.s32.totalorder %s137, %s151
    %p153 = scmp.eq.s32.totalorder %s22, 0
    %p154 = por %p152, %p153
    %s156 = sadd.s32 %s155, 1
    %p159 = scmp.eq.s32.totalorder %s16, 1
    %p160 = scmp.ne.s32.totalorder %s155, %s157
    %p161 = scmp.eq.s32.totalorder %s16, 0
    %p162 = por %p160, %p161
    %p163 = scmp.ne.s32.totalorder %s155, %s157
    %p164 = scmp.eq.s32.totalorder %s21, 1
    %p165 = por %p163, %p164
    %p166 = scmp.ne.s32.totalorder %s157, %s158
    %p167 = scmp.eq.s32.totalorder %s21, 0
    %p168 = por %p166, %p167
    %p169 = scmp.ne.s32.totalorder %s157, %s158
    %p170 = scmp.eq.s32.totalorder %s22, 1
    %p171 = por %p169, %p170
    %p173 = scmp.ne.s32.totalorder %s158, %s172
    %p174 = scmp.eq.s32.totalorder %s22, 0
    %p175 = por %p173, %p174
    %s177 = sadd.s32 %s176, 1
    %p180 = scmp.eq.s32.totalorder %s16, 1
    %p181 = scmp.ne.s32.totalorder %s176, %s178
    %p182 = scmp.eq.s32.totalorder %s16, 0
    %p183 = por %p181, %p182
    %p184 = scmp.ne.s32.totalorder %s176, %s178
    %p185 = scmp.eq.s32.totalorder %s21, 1
    %p186 = por %p184, %p185
    %p187 = scmp.ne.s32.totalorder %s178, %s179
    %p188 = scmp.eq.s32.totalorder %s21, 0
    %p189 = por %p187, %p188
    %p190 = scmp.ne.s32.totalorder %s178, %s179
    %p191 = scmp.eq.s32.totalorder %s22, 1
    %p192 = por %p190, %p191
    %p194 = scmp.ne.s32.totalorder %s179, %s193
    %p195 = scmp.eq.s32.totalorder %s22, 0
    %p196 = por %p194, %p195
    %s198 = sadd.s32 %s197, 1
    %p201 = scmp.eq.s32.totalorder %s16, 1
    %p202 = scmp.ne.s32.totalorder %s197, %s199
    %p203 = scmp.eq.s32.totalorder %s16, 0
    %p204 = por %p202, %p203
    %p205 = scmp.ne.s32.totalorder %s197, %s199
    %p206 = scmp.eq.s32.totalorder %s21, 1
    %p207 = por %p205, %p206
    %p208 = scmp.ne.s32.totalorder %s199, %s200
    %p209 = scmp.eq.s32.totalorder %s21, 0
    %p210 = por %p208, %p209
    %p211 = scmp.ne.s32.totalorder %s199, %s200
    %p212 = scmp.eq.s32.totalorder %s22, 1
    %p213 = por %p211, %p212
    %p215 = scmp.ne.s32.totalorder %s200, %s214
    %p216 = scmp.eq.s32.totalorder %s22, 0
    %p217 = por %p215, %p216
    %s219 = sadd.s32 %s218, 1
    %p222 = scmp.eq.s32.totalorder %s16, 1
    %p223 = scmp.ne.s32.totalorder %s218, %s220
    %p224 = scmp.eq.s32.totalorder %s16, 0
    %p225 = por %p223, %p224
    %p226 = scmp.ne.s32.totalorder %s218, %s220
    %p227 = scmp.eq.s32.totalorder %s21, 1
    %p228 = por %p226, %p227
    %p229 = scmp.ne.s32.totalorder %s220, %s221
    %p230 = scmp.eq.s32.totalorder %s21, 0
    %p231 = por %p229, %p230
    %p232 = scmp.ne.s32.totalorder %s220, %s221
    %p233 = scmp.eq.s32.totalorder %s22, 1
    %p234 = por %p232, %p233
    %p236 = scmp.ne.s32.totalorder %s221, %s235
    %p237 = scmp.eq.s32.totalorder %s22, 0
    %p238 = por %p236, %p237
    %s239 = ssub.s32 %s16, %s23
    %p240 = scmp.eq.s32.totalorder %s239, 0
    %s242 = sadd.s32 %s241, 1
    %s243 = scalar_select %p240, %s241, %s242
    %p246 = pneg %p240
    %p247 = scmp.eq.s32.totalorder %s16, 1
    %p248 = por %p246, %p247
    %p249 = scmp.ne.s32.totalorder %s241, %s244
    %p250 = scmp.eq.s32.totalorder %s16, 0
    %p251 = por %p249, %p250
    %p252 = scmp.ne.s32.totalorder %s241, %s244
    %p253 = scmp.eq.s32.totalorder %s21, 1
    %p254 = por %p252, %p253
    %p255 = scmp.ne.s32.totalorder %s244, %s245
    %p256 = scmp.eq.s32.totalorder %s21, 0
    %p257 = por %p255, %p256
    %p258 = scmp.ne.s32.totalorder %s244, %s245
    %p259 = scmp.eq.s32.totalorder %s22, 1
    %p260 = por %p258, %p259
    %p262 = scmp.ne.s32.totalorder %s245, %s261
    %p263 = scmp.eq.s32.totalorder %s22, 0
    %p264 = por %p262, %p263
    %p265 = scmp.le.s32.totalorder 1, %s16
    %p266 = scmp.lt.s32.totalorder %s16, 3
    %p267 = pnand %p265, %p266
    %p268 = pneg %p267
    // Predicated region
    $region9: #{eca_bottleneck_forward.1} parent=5 // pred_check
      _
    $region10: #{eca_bottleneck_forward.1} parent=5 // pred_check_branch
      %270 = sbr.rel (%p267) target = $region12
    $region11: #{eca_bottleneck_forward.1} parent=5 // pred_region
      %s271 = ssub.s32 %s16, 1
      // Predicated region
      $region13: #{eca_bottleneck_forward.1} parent=11 // pred_check
        %p272 = pneg %p63
      $region14: #{eca_bottleneck_forward.1} parent=11 // pred_check_branch
        %274 = sbr.rel (%p272) target = $region16
      $region15: #{eca_bottleneck_forward.1} parent=11 // pred_region
        _
      $region16: #{eca_bottleneck_forward.1} parent=11 // pred_fallthru
        _
      // Predicated region
      $region17: #{eca_bottleneck_forward.1} parent=11 // pred_check
        %p275 = pneg %p84
      $region18: #{eca_bottleneck_forward.1} parent=11 // pred_check_branch
        %277 = sbr.rel (%p275) target = $region20
      $region19: #{eca_bottleneck_forward.1} parent=11 // pred_region
        _
      $region20: #{eca_bottleneck_forward.1} parent=11 // pred_fallthru
        _
      // Predicated region
      $region21: #{eca_bottleneck_forward.1} parent=11 // pred_check
        %p278 = pneg %p105
      $region22: #{eca_bottleneck_forward.1} parent=11 // pred_check_branch
        %280 = sbr.rel (%p278) target = $region24
      $region23: #{eca_bottleneck_forward.1} parent=11 // pred_region
        _
      $region24: #{eca_bottleneck_forward.1} parent=11 // pred_fallthru
        _
      // Predicated region
      $region25: #{eca_bottleneck_forward.1} parent=11 // pred_check
        %p281 = pneg %p126
      $region26: #{eca_bottleneck_forward.1} parent=11 // pred_check_branch
        %283 = sbr.rel (%p281) target = $region28
      $region27: #{eca_bottleneck_forward.1} parent=11 // pred_region
        _
      $region28: #{eca_bottleneck_forward.1} parent=11 // pred_fallthru
        _
      // Predicated region
      $region29: #{eca_bottleneck_forward.1} parent=11 // pred_check
        %p284 = pneg %p147
      $region30: #{eca_bottleneck_forward.1} parent=11 // pred_check_branch
        %286 = sbr.rel (%p284) target = $region32
      $region31: #{eca_bottleneck_forward.1} parent=11 // pred_region
        _
      $region32: #{eca_bottleneck_forward.1} parent=11 // pred_fallthru
        _
      // Predicated region
      $region33: #{eca_bottleneck_forward.1} parent=11 // pred_check
        %p287 = pneg %p168
      $region34: #{eca_bottleneck_forward.1} parent=11 // pred_check_branch
        %289 = sbr.rel (%p287) target = $region36
      $region35: #{eca_bottleneck_forward.1} parent=11 // pred_region
        _
      $region36: #{eca_bottleneck_forward.1} parent=11 // pred_fallthru
        _
      // Predicated region
      $region37: #{eca_bottleneck_forward.1} parent=11 // pred_check
        %p290 = pneg %p189
      $region38: #{eca_bottleneck_forward.1} parent=11 // pred_check_branch
        %292 = sbr.rel (%p290) target = $region40
      $region39: #{eca_bottleneck_forward.1} parent=11 // pred_region
        _
      $region40: #{eca_bottleneck_forward.1} parent=11 // pred_fallthru
        _
      // Predicated region
      $region41: #{eca_bottleneck_forward.1} parent=11 // pred_check
        %p293 = pneg %p210
      $region42: #{eca_bottleneck_forward.1} parent=11 // pred_check_branch
        %295 = sbr.rel (%p293) target = $region44
      $region43: #{eca_bottleneck_forward.1} parent=11 // pred_region
        _
      $region44: #{eca_bottleneck_forward.1} parent=11 // pred_fallthru
        _
      // Predicated region
      $region45: #{eca_bottleneck_forward.1} parent=11 // pred_check
        %p296 = pneg %p231
      $region46: #{eca_bottleneck_forward.1} parent=11 // pred_check_branch
        %298 = sbr.rel (%p296) target = $region48
      $region47: #{eca_bottleneck_forward.1} parent=11 // pred_region
        _
      $region48: #{eca_bottleneck_forward.1} parent=11 // pred_fallthru
        _
    $region12: #{eca_bottleneck_forward.1} parent=5 // pred_fallthru
      _
    %p299 = scmp.lt.s32.totalorder %s16, 2
    // Predicated region
    $region49: #{eca_bottleneck_forward.1} parent=5 // pred_check
      %p300 = pneg %p299
    $region50: #{eca_bottleneck_forward.1} parent=5 // pred_check_branch
      %302 = sbr.rel (%p300) target = $region52
    $region51: #{eca_bottleneck_forward.1} parent=5 // pred_region
      // Predicated region
      $region53: #{eca_bottleneck_forward.1} parent=51 // pred_check
        %p303 = pneg %p36
      $region54: #{eca_bottleneck_forward.1} parent=51 // pred_check_branch
        %305 = sbr.rel (%p303) target = $region56
      $region55: #{eca_bottleneck_forward.1} parent=51 // pred_region
        %p306 = scmp.lt.s32.totalorder %s16, 1
        %s307 = scalar_select %p306, %s16, 1
        %s308 = smul.addr %s307, 32
        %s309 = smul.addr %s308, 4
        %s310 = scalar_lea.vmem %s0, %s309
      $region56: #{eca_bottleneck_forward.1} parent=51 // pred_fallthru
        _
    $region52: #{eca_bottleneck_forward.1} parent=5 // pred_fallthru
      _
    %p311 = scmp.le.s32.totalorder 1, %s16
    %p312 = scmp.lt.s32.totalorder %s16, 3
    %p313 = pnand %p311, %p312
    %p314 = pneg %p313
    // Predicated region
    $region57: #{eca_bottleneck_forward.1} parent=5 // pred_check
      _
    $region58: #{eca_bottleneck_forward.1} parent=5 // pred_check_branch
      %316 = sbr.rel (%p313) target = $region60
    $region59: #{eca_bottleneck_forward.1} parent=5 // pred_region
      %s317 = ssub.s32 %s16, 1
      %p318 = scmp.lt.s32.totalorder %s21, 1
      %s319 = scalar_select %p318, %s21, 1
      %s320 = smul.addr %s319, 32
      %s321 = smul.addr %s320, 4
      %s322 = scalar_lea.vmem %s0, %s321
      %p323 = pneg %p42
      %p324 = pneg %p39
      %p325 = pneg %p63
      %p326 = pneg %p60
      %p327 = pneg %p84
      %p328 = pneg %p81
      %p329 = pneg %p105
      %p330 = pneg %p102
      %p331 = pneg %p126
      %p332 = pneg %p123
      %p333 = pneg %p147
      %p334 = pneg %p144
      %p335 = pneg %p168
      %p336 = pneg %p165
      %p337 = pneg %p189
      %p338 = pneg %p186
      %p339 = pneg %p210
      %p340 = pneg %p207
      %p341 = pneg %p231
      %p342 = pneg %p228
      %p343 = pneg %p257
      %p344 = pneg %p254
      %p345 = scmp.lt.s32.totalorder %s21, 1
      %s346 = scalar_select %p345, %s21, 1
      %s347 = smul.addr %s346, 32
      %s348 = smul.addr %s347, 4
      %s349 = scalar_lea.vmem %s10, %s348
      %p350 = scmp.lt.s32.totalorder %s21, 1
      %s351 = scalar_select %p350, %s21, 1
      %s352 = smul.addr %s351, 32
      %s353 = smul.addr %s352, 4
      %s354 = scalar_lea.vmem %s0, %s353
      %p355 = scmp.lt.s32.totalorder %s21, 1
      %s356 = scalar_select %p355, %s21, 1
      %s357 = smul.addr %s356, 32
      %s358 = smul.addr %s357, 4
      %s359 = scalar_lea.vmem %s10, %s358
      %v361 = vld [vmem:[%s354] sm:$0xf]
      %v362 = vld [vmem:[%s354 + $0x4] sm:$0xf]
      %v363 = vld [vmem:[%s354 + $0x8] sm:$0xf]
      %v364 = vld [vmem:[%s354 + $0xc] sm:$0xf]
      %v365 = vld [vmem:[%s354 + $0x10] sm:$0xf]
      %v366 = vld [vmem:[%s354 + $0x14] sm:$0xf]
      %v367 = vld [vmem:[%s354 + $0x18] sm:$0xf]
      %v368 = vld [vmem:[%s354 + $0x1c] sm:$0xf]
      %v369 = vld [vmem:[%s354 + $0x20] sm:$0xf]
      %v370 = vld [vmem:[%s354 + $0x24] sm:$0xf]
      %v371 = vld [vmem:[%s354 + $0x28] sm:$0xf]
      %v372 = vld [vmem:[%s354 + $0x2c] sm:$0xf]
      %v373 = vld [vmem:[%s354 + $0x30] sm:$0xf]
      %v374 = vld [vmem:[%s354 + $0x34] sm:$0xf]
      %v375 = vld [vmem:[%s354 + $0x38] sm:$0xf]
      %v376 = vld [vmem:[%s354 + $0x3c] sm:$0xf]
      %v377 = vld [vmem:[%s354 + $0x40] sm:$0xf]
      %v378 = vld [vmem:[%s354 + $0x44] sm:$0xf]
      %v379 = vld [vmem:[%s354 + $0x48] sm:$0xf]
      %v380 = vld [vmem:[%s354 + $0x4c] sm:$0xf]
      %v381 = vld [vmem:[%s354 + $0x50] sm:$0xf]
      %v382 = vld [vmem:[%s354 + $0x54] sm:$0xf]
      %v383 = vld [vmem:[%s354 + $0x58] sm:$0xf]
      %v384 = vld [vmem:[%s354 + $0x5c] sm:$0xf]
      %v385 = vld [vmem:[%s354 + $0x60] sm:$0xf]
      %v386 = vld [vmem:[%s354 + $0x64] sm:$0xf]
      %v387 = vld [vmem:[%s354 + $0x68] sm:$0xf]
      %v388 = vld [vmem:[%s354 + $0x6c] sm:$0xf]
      %v389 = vld [vmem:[%s354 + $0x70] sm:$0xf]
      %v390 = vld [vmem:[%s354 + $0x74] sm:$0xf]
      %v391 = vld [vmem:[%s354 + $0x78] sm:$0xf]
      %v392 = vld [vmem:[%s354 + $0x7c] sm:$0xf]
      %v393 = vld [vmem:[%s1] sm:$0xf]
      %v394 = vld [vmem:[%s1 + $0x4] sm:$0xf]
      %v427 = vunpack.c.l.b16 %v361
      %v428 = vunpack.c.l.b16 %v362
      %v429 = vunpack.c.l.b16 %v363
      %v430 = vunpack.c.l.b16 %v364
      %v431 = vunpack.c.l.b16 %v365
      %v432 = vunpack.c.l.b16 %v366
      %v433 = vunpack.c.l.b16 %v367
      %v434 = vunpack.c.l.b16 %v368
      %v435 = vunpack.c.l.b16 %v369
      %v436 = vunpack.c.l.b16 %v370
      %v437 = vunpack.c.l.b16 %v371
      %v438 = vunpack.c.l.b16 %v372
      %v439 = vunpack.c.l.b16 %v373
      %v440 = vunpack.c.l.b16 %v374
      %v441 = vunpack.c.l.b16 %v375
      %v442 = vunpack.c.l.b16 %v376
      %v443 = vunpack.c.l.b16 %v377
      %v444 = vunpack.c.l.b16 %v378
      %v445 = vunpack.c.l.b16 %v379
      %v446 = vunpack.c.l.b16 %v380
      %v447 = vunpack.c.l.b16 %v381
      %v448 = vunpack.c.l.b16 %v382
      %v449 = vunpack.c.l.b16 %v383
      %v450 = vunpack.c.l.b16 %v384
      %v451 = vunpack.c.l.b16 %v385
      %v452 = vunpack.c.l.b16 %v386
      %v453 = vunpack.c.l.b16 %v387
      %v454 = vunpack.c.l.b16 %v388
      %v455 = vunpack.c.l.b16 %v389
      %v456 = vunpack.c.l.b16 %v390
      %v457 = vunpack.c.l.b16 %v391
      %v458 = vunpack.c.l.b16 %v392
      %v459 = vpack.c.b16 %v428, %v427
      %v460 = vpack.c.b16 %v430, %v429
      %v461 = vpack.c.b16 %v432, %v431
      %v462 = vpack.c.b16 %v434, %v433
      %v463 = vpack.c.b16 %v436, %v435
      %v464 = vpack.c.b16 %v438, %v437
      %v465 = vpack.c.b16 %v440, %v439
      %v466 = vpack.c.b16 %v442, %v441
      %v467 = vpack.c.b16 %v444, %v443
      %v468 = vpack.c.b16 %v446, %v445
      %v469 = vpack.c.b16 %v448, %v447
      %v470 = vpack.c.b16 %v450, %v449
      %v471 = vpack.c.b16 %v452, %v451
      %v472 = vpack.c.b16 %v454, %v453
      %v473 = vpack.c.b16 %v456, %v455
      %v474 = vpack.c.b16 %v458, %v457
      %v477 = vunpack.c.l.b16 %v393
      %v478 = vunpack.c.l.b16 %v394
      %v479 = vpack.c.b16 %v478, %v477
      %vm481 = vcmask 130048
      %v483 = vsel %vm481, %v459, 0
      %v486 = vsel %vm481, %v460, 0
      %v489 = vsel %vm481, %v461, 0
      %v492 = vsel %vm481, %v462, 0
      %v495 = vsel %vm481, %v463, 0
      %v498 = vsel %vm481, %v464, 0
      %v501 = vsel %vm481, %v465, 0
      %v504 = vsel %vm481, %v466, 0
      %v507 = vsel %vm481, %v467, 0
      %v510 = vsel %vm481, %v468, 0
      %v513 = vsel %vm481, %v469, 0
      %v516 = vsel %vm481, %v470, 0
      %v519 = vsel %vm481, %v471, 0
      %v522 = vsel %vm481, %v472, 0
      %v525 = vsel %vm481, %v473, 0
      %v528 = vsel %vm481, %v474, 0
      %530 = vmatpush.bf16.msra.mxu0 0
      %531 = vmatpush.bf16.msra.mxu0 0
      %532 = vmatpush.bf16.msra.mxu0 0
      %533 = vmatpush.bf16.msra.mxu0 0
      %534 = vmatpush.bf16.msra.mxu0 0
      %535 = vmatpush.bf16.msra.mxu0 0
      %536 = vmatpush.bf16.msra.mxu0 0
      %537 = vmatpush.bf16.msra.mxu0 %v479
      %538 = vmatmul.bf16.gmra.mxu0 %v483
      %v539 = vpop.f32.mrf.mxu0
      %v540 = vadd.f32 0.0, %v539
      %v541 = vpop.f32.mrf.mxu0
      %v542 = vadd.f32 0.0, %v541
      %543 = vmatmul.bf16.gmra.mxu0 %v486
      %v544 = vpop.f32.mrf.mxu0
      %v545 = vadd.f32 0.0, %v544
      %v546 = vpop.f32.mrf.mxu0
      %v547 = vadd.f32 0.0, %v546
      %548 = vmatmul.bf16.gmra.mxu0 %v489
      %v549 = vpop.f32.mrf.mxu0
      %v550 = vadd.f32 0.0, %v549
      %v551 = vpop.f32.mrf.mxu0
      %v552 = vadd.f32 0.0, %v551
      %553 = vmatmul.bf16.gmra.mxu0 %v492
      %v554 = vpop.f32.mrf.mxu0
      %v555 = vadd.f32 0.0, %v554
      %v556 = vpop.f32.mrf.mxu0
      %v557 = vadd.f32 0.0, %v556
      %558 = vmatmul.bf16.gmra.mxu0 %v495
      %v559 = vpop.f32.mrf.mxu0
      %v560 = vadd.f32 0.0, %v559
      %v561 = vpop.f32.mrf.mxu0
      %v562 = vadd.f32 0.0, %v561
      %563 = vmatmul.bf16.gmra.mxu0 %v498
      %v564 = vpop.f32.mrf.mxu0
      %v565 = vadd.f32 0.0, %v564
      %v566 = vpop.f32.mrf.mxu0
      %v567 = vadd.f32 0.0, %v566
      %568 = vmatmul.bf16.gmra.mxu0 %v501
      %v569 = vpop.f32.mrf.mxu0
      %v570 = vadd.f32 0.0, %v569
      %v571 = vpop.f32.mrf.mxu0
      %v572 = vadd.f32 0.0, %v571
      %573 = vmatmul.bf16.gmra.mxu0 %v504
      %v574 = vpop.f32.mrf.mxu0
      %v575 = vadd.f32 0.0, %v574
      %v576 = vpop.f32.mrf.mxu0
      %v577 = vadd.f32 0.0, %v576
      %578 = vmatmul.bf16.gmra.mxu0 %v507
      %v579 = vpop.f32.mrf.mxu0
      %v580 = vadd.f32 0.0, %v579
      %v581 = vpop.f32.mrf.mxu0
      %v582 = vadd.f32 0.0, %v581
      %583 = vmatmul.bf16.gmra.mxu0 %v510
      %v584 = vpop.f32.mrf.mxu0
      %v585 = vadd.f32 0.0, %v584
      %v586 = vpop.f32.mrf.mxu0
      %v587 = vadd.f32 0.0, %v586
      %588 = vmatmul.bf16.gmra.mxu0 %v513
      %v589 = vpop.f32.mrf.mxu0
      %v590 = vadd.f32 0.0, %v589
      %v591 = vpop.f32.mrf.mxu0
      %v592 = vadd.f32 0.0, %v591
      %593 = vmatmul.bf16.gmra.mxu0 %v516
      %v594 = vpop.f32.mrf.mxu0
      %v595 = vadd.f32 0.0, %v594
      %v596 = vpop.f32.mrf.mxu0
      %v597 = vadd.f32 0.0, %v596
      %598 = vmatmul.bf16.gmra.mxu0 %v519
      %v599 = vpop.f32.mrf.mxu0
      %v600 = vadd.f32 0.0, %v599
      %v601 = vpop.f32.mrf.mxu0
      %v602 = vadd.f32 0.0, %v601
      %603 = vmatmul.bf16.gmra.mxu0 %v522
      %v604 = vpop.f32.mrf.mxu0
      %v605 = vadd.f32 0.0, %v604
      %v606 = vpop.f32.mrf.mxu0
      %v607 = vadd.f32 0.0, %v606
      %608 = vmatmul.bf16.gmra.mxu0 %v525
      %v609 = vpop.f32.mrf.mxu0
      %v610 = vadd.f32 0.0, %v609
      %v611 = vpop.f32.mrf.mxu0
      %v612 = vadd.f32 0.0, %v611
      %613 = vmatmul.bf16.gmra.mxu0 %v528
      %v614 = vpop.f32.mrf.mxu0
      %v615 = vadd.f32 0.0, %v614
      %v616 = vpop.f32.mrf.mxu0
      %v617 = vadd.f32 0.0, %v616
      %618 = vdwg.mxu0
      %v619 = vld [vmem:[%s2] sm:$0x1]
      %v621 = vperm.slane %v619, 0
      %v623 = vmul.f32 %v540, %v621
      %v624 = vmul.f32 %v542, %v621
      %v625 = vmul.f32 %v545, %v621
      %v626 = vmul.f32 %v547, %v621
      %v627 = vmul.f32 %v550, %v621
      %v628 = vmul.f32 %v552, %v621
      %v629 = vmul.f32 %v555, %v621
      %v630 = vmul.f32 %v557, %v621
      %v631 = vmul.f32 %v560, %v621
      %v632 = vmul.f32 %v562, %v621
      %v633 = vmul.f32 %v565, %v621
      %v634 = vmul.f32 %v567, %v621
      %v635 = vmul.f32 %v570, %v621
      %v636 = vmul.f32 %v572, %v621
      %v637 = vmul.f32 %v575, %v621
      %v638 = vmul.f32 %v577, %v621
      %v639 = vmul.f32 %v580, %v621
      %v640 = vmul.f32 %v582, %v621
      %v641 = vmul.f32 %v585, %v621
      %v642 = vmul.f32 %v587, %v621
      %v643 = vmul.f32 %v590, %v621
      %v644 = vmul.f32 %v592, %v621
      %v645 = vmul.f32 %v595, %v621
      %v646 = vmul.f32 %v597, %v621
      %v647 = vmul.f32 %v600, %v621
      %v648 = vmul.f32 %v602, %v621
      %v649 = vmul.f32 %v605, %v621
      %v650 = vmul.f32 %v607, %v621
      %v651 = vmul.f32 %v610, %v621
      %v652 = vmul.f32 %v612, %v621
      %v653 = vmul.f32 %v615, %v621
      %v654 = vmul.f32 %v617, %v621
      %v655 = vld [vmem:[%s3] sm:$0x1]
      %v657 = vperm.slane %v655, 0
      %v659 = vadd.f32 %v623, %v657
      %v660 = vadd.f32 %v624, %v657
      %v661 = vadd.f32 %v625, %v657
      %v662 = vadd.f32 %v626, %v657
      %v663 = vadd.f32 %v627, %v657
      %v664 = vadd.f32 %v628, %v657
      %v665 = vadd.f32 %v629, %v657
      %v666 = vadd.f32 %v630, %v657
      %v667 = vadd.f32 %v631, %v657
      %v668 = vadd.f32 %v632, %v657
      %v669 = vadd.f32 %v633, %v657
      %v670 = vadd.f32 %v634, %v657
      %v671 = vadd.f32 %v635, %v657
      %v672 = vadd.f32 %v636, %v657
      %v673 = vadd.f32 %v637, %v657
      %v674 = vadd.f32 %v638, %v657
      %v675 = vadd.f32 %v639, %v657
      %v676 = vadd.f32 %v640, %v657
      %v677 = vadd.f32 %v641, %v657
      %v678 = vadd.f32 %v642, %v657
      %v679 = vadd.f32 %v643, %v657
      %v680 = vadd.f32 %v644, %v657
      %v681 = vadd.f32 %v645, %v657
      %v682 = vadd.f32 %v646, %v657
      %v683 = vadd.f32 %v647, %v657
      %v684 = vadd.f32 %v648, %v657
      %v685 = vadd.f32 %v649, %v657
      %v686 = vadd.f32 %v650, %v657
      %v687 = vadd.f32 %v651, %v657
      %v688 = vadd.f32 %v652, %v657
      %v689 = vadd.f32 %v653, %v657
      %v690 = vadd.f32 %v654, %v657
      %v691 = vmax.f32 %v659, 0.0
      %v692 = vmax.f32 %v660, 0.0
      %v693 = vmax.f32 %v661, 0.0
      %v694 = vmax.f32 %v662, 0.0
      %v695 = vmax.f32 %v663, 0.0
      %v696 = vmax.f32 %v664, 0.0
      %v697 = vmax.f32 %v665, 0.0
      %v698 = vmax.f32 %v666, 0.0
      %v699 = vmax.f32 %v667, 0.0
      %v700 = vmax.f32 %v668, 0.0
      %v701 = vmax.f32 %v669, 0.0
      %v702 = vmax.f32 %v670, 0.0
      %v703 = vmax.f32 %v671, 0.0
      %v704 = vmax.f32 %v672, 0.0
      %v705 = vmax.f32 %v673, 0.0
      %v706 = vmax.f32 %v674, 0.0
      %v707 = vmax.f32 %v675, 0.0
      %v708 = vmax.f32 %v676, 0.0
      %v709 = vmax.f32 %v677, 0.0
      %v710 = vmax.f32 %v678, 0.0
      %v711 = vmax.f32 %v679, 0.0
      %v712 = vmax.f32 %v680, 0.0
      %v713 = vmax.f32 %v681, 0.0
      %v714 = vmax.f32 %v682, 0.0
      %v715 = vmax.f32 %v683, 0.0
      %v716 = vmax.f32 %v684, 0.0
      %v717 = vmax.f32 %v685, 0.0
      %v718 = vmax.f32 %v686, 0.0
      %v719 = vmax.f32 %v687, 0.0
      %v720 = vmax.f32 %v688, 0.0
      %v721 = vmax.f32 %v689, 0.0
      %v722 = vmax.f32 %v690, 0.0
      %vm723 = vcmask 27648
      %724 = vst.msk [vmem:[#allocation2] sm:$0xf] %vm723, 0
      %725 = vst.msk [vmem:[#allocation2 + $0x4] sm:$0xf] %vm723, 0
      %vm726 = vcmask 24576
      %727 = vst.msk [vmem:[#allocation2 + $0x8] sm:$0x1] %vm726, 0
      %s728 = scalar_lea.vmem [#allocation2], 204
      %729 = vst.msk [vmem:[%s728] sm:$0xf] %vm723, 0
      %730 = vst.msk [vmem:[%s728 + $0x4] sm:$0xf] %vm723, 0
      %731 = vst.msk [vmem:[%s728 + $0x8] sm:$0x1] %vm726, 0
      %vm732 = vcmask 24576
      %vm733 = vsmask.f32 256
      %vm734 = vmand %vm732, %vm733
      %v735 = vld [vmem:[#allocation2] sm:$0x1]
      %v736 = vsel %vm734, 0, %v735
      %737 = vst [vmem:[#allocation2] sm:$0x1] %v736
      %v738 = vld [vmem:[#allocation2 + $0xc] sm:$0x1]
      %v739 = vsel %vm734, 0, %v738
      %740 = vst [vmem:[#allocation2 + $0xc] sm:$0x1] %v739
      %v741 = vld [vmem:[#allocation2 + $0x18] sm:$0x1]
      %v742 = vsel %vm734, 0, %v741
      %743 = vst [vmem:[#allocation2 + $0x18] sm:$0x1] %v742
      %v744 = vld [vmem:[#allocation2 + $0x24] sm:$0x1]
      %v745 = vsel %vm734, 0, %v744
      %746 = vst [vmem:[#allocation2 + $0x24] sm:$0x1] %v745
      %v747 = vld [vmem:[#allocation2 + $0x30] sm:$0x1]
      %v748 = vsel %vm734, 0, %v747
      %749 = vst [vmem:[#allocation2 + $0x30] sm:$0x1] %v748
      %v750 = vld [vmem:[#allocation2 + $0x3c] sm:$0x1]
      %v751 = vsel %vm734, 0, %v750
      %752 = vst [vmem:[#allocation2 + $0x3c] sm:$0x1] %v751
      %v753 = vld [vmem:[#allocation2 + $0x48] sm:$0x1]
      %v754 = vsel %vm734, 0, %v753
      %755 = vst [vmem:[#allocation2 + $0x48] sm:$0x1] %v754
      %v756 = vld [vmem:[#allocation2 + $0x54] sm:$0x1]
      %v757 = vsel %vm734, 0, %v756
      %758 = vst [vmem:[#allocation2 + $0x54] sm:$0x1] %v757
      %v759 = vld [vmem:[#allocation2 + $0x60] sm:$0x1]
      %v760 = vsel %vm734, 0, %v759
      %761 = vst [vmem:[#allocation2 + $0x60] sm:$0x1] %v760
      %v762 = vld [vmem:[#allocation2 + $0x6c] sm:$0x1]
      %v763 = vsel %vm734, 0, %v762
      %764 = vst [vmem:[#allocation2 + $0x6c] sm:$0x1] %v763
      %v765 = vld [vmem:[#allocation2 + $0x78] sm:$0x1]
      %v766 = vsel %vm734, 0, %v765
      %767 = vst [vmem:[#allocation2 + $0x78] sm:$0x1] %v766
      %v768 = vld [vmem:[#allocation2 + $0x84] sm:$0x1]
      %v769 = vsel %vm734, 0, %v768
      %770 = vst [vmem:[#allocation2 + $0x84] sm:$0x1] %v769
      %v771 = vld [vmem:[#allocation2 + $0x90] sm:$0x1]
      %v772 = vsel %vm734, 0, %v771
      %773 = vst [vmem:[#allocation2 + $0x90] sm:$0x1] %v772
      %v774 = vld [vmem:[#allocation2 + $0x9c] sm:$0x1]
      %v775 = vsel %vm734, 0, %v774
      %776 = vst [vmem:[#allocation2 + $0x9c] sm:$0x1] %v775
      %v777 = vld [vmem:[#allocation2 + $0xa8] sm:$0x1]
      %v778 = vsel %vm734, 0, %v777
      %779 = vst [vmem:[#allocation2 + $0xa8] sm:$0x1] %v778
      %v780 = vld [vmem:[#allocation2 + $0xb4] sm:$0x1]
      %v781 = vsel %vm734, 0, %v780
      %782 = vst [vmem:[#allocation2 + $0xb4] sm:$0x1] %v781
      %v783 = vld [vmem:[#allocation2 + $0xc0] sm:$0x1]
      %v784 = vsel %vm734, 0, %v783
      %785 = vst [vmem:[#allocation2 + $0xc0] sm:$0x1] %v784
      %v786 = vld [vmem:[#allocation2 + $0xcc] sm:$0x1]
      %v787 = vsel %vm734, 0, %v786
      %788 = vst [vmem:[#allocation2 + $0xcc] sm:$0x1] %v787
      %vm789 = vsmask.f32 7938
      %vm790 = vmand %vm732, %vm789
      %v791 = vld [vmem:[#allocation2 + $0x8] sm:$0x1]
      %v792 = vsel %vm790, 0, %v791
      %793 = vst [vmem:[#allocation2 + $0x8] sm:$0x1] %v792
      %v794 = vld [vmem:[#allocation2 + $0x14] sm:$0x1]
      %v795 = vsel %vm790, 0, %v794
      %796 = vst [vmem:[#allocation2 + $0x14] sm:$0x1] %v795
      %v797 = vld [vmem:[#allocation2 + $0x20] sm:$0x1]
      %v798 = vsel %vm790, 0, %v797
      %799 = vst [vmem:[#allocation2 + $0x20] sm:$0x1] %v798
      %v800 = vld [vmem:[#allocation2 + $0x2c] sm:$0x1]
      %v801 = vsel %vm790, 0, %v800
      %802 = vst [vmem:[#allocation2 + $0x2c] sm:$0x1] %v801
      %v803 = vld [vmem:[#allocation2 + $0x38] sm:$0x1]
      %v804 = vsel %vm790, 0, %v803
      %805 = vst [vmem:[#allocation2 + $0x38] sm:$0x1] %v804
      %v806 = vld [vmem:[#allocation2 + $0x44] sm:$0x1]
      %v807 = vsel %vm790, 0, %v806
      %808 = vst [vmem:[#allocation2 + $0x44] sm:$0x1] %v807
      %v809 = vld [vmem:[#allocation2 + $0x50] sm:$0x1]
      %v810 = vsel %vm790, 0, %v809
      %811 = vst [vmem:[#allocation2 + $0x50] sm:$0x1] %v810
      %v812 = vld [vmem:[#allocation2 + $0x5c] sm:$0x1]
      %v813 = vsel %vm790, 0, %v812
      %814 = vst [vmem:[#allocation2 + $0x5c] sm:$0x1] %v813
      %v815 = vld [vmem:[#allocation2 + $0x68] sm:$0x1]
      %v816 = vsel %vm790, 0, %v815
      %817 = vst [vmem:[#allocation2 + $0x68] sm:$0x1] %v816
      %v818 = vld [vmem:[#allocation2 + $0x74] sm:$0x1]
      %v819 = vsel %vm790, 0, %v818
      %820 = vst [vmem:[#allocation2 + $0x74] sm:$0x1] %v819
      %v821 = vld [vmem:[#allocation2 + $0x80] sm:$0x1]
      %v822 = vsel %vm790, 0, %v821
      %823 = vst [vmem:[#allocation2 + $0x80] sm:$0x1] %v822
      %v824 = vld [vmem:[#allocation2 + $0x8c] sm:$0x1]
      %v825 = vsel %vm790, 0, %v824
      %826 = vst [vmem:[#allocation2 + $0x8c] sm:$0x1] %v825
      %v827 = vld [vmem:[#allocation2 + $0x98] sm:$0x1]
      %v828 = vsel %vm790, 0, %v827
      %829 = vst [vmem:[#allocation2 + $0x98] sm:$0x1] %v828
      %v830 = vld [vmem:[#allocation2 + $0xa4] sm:$0x1]
      %v831 = vsel %vm790, 0, %v830
      %832 = vst [vmem:[#allocation2 + $0xa4] sm:$0x1] %v831
      %v833 = vld [vmem:[#allocation2 + $0xb0] sm:$0x1]
      %v834 = vsel %vm790, 0, %v833
      %835 = vst [vmem:[#allocation2 + $0xb0] sm:$0x1] %v834
      %v836 = vld [vmem:[#allocation2 + $0xbc] sm:$0x1]
      %v837 = vsel %vm790, 0, %v836
      %838 = vst [vmem:[#allocation2 + $0xbc] sm:$0x1] %v837
      %v839 = vld [vmem:[#allocation2 + $0xc8] sm:$0x1]
      %v840 = vsel %vm790, 0, %v839
      %841 = vst [vmem:[#allocation2 + $0xc8] sm:$0x1] %v840
      %v842 = vld [vmem:[#allocation2 + $0xd4] sm:$0x1]
      %v843 = vsel %vm790, 0, %v842
      %844 = vst [vmem:[#allocation2 + $0xd4] sm:$0x1] %v843
      %v845 = vpack.c.bf16 %v691, %v691
      %v846 = vpack.c.bf16 %v692, %v692
      %v847 = vpack.c.bf16 %v693, %v693
      %v848 = vpack.c.bf16 %v694, %v694
      %v849 = vpack.c.bf16 %v695, %v695
      %v850 = vpack.c.bf16 %v696, %v696
      %v851 = vpack.c.bf16 %v697, %v697
      %v852 = vpack.c.bf16 %v698, %v698
      %v853 = vpack.c.bf16 %v699, %v699
      %v854 = vpack.c.bf16 %v700, %v700
      %v855 = vpack.c.bf16 %v701, %v701
      %v856 = vpack.c.bf16 %v702, %v702
      %v857 = vpack.c.bf16 %v703, %v703
      %v858 = vpack.c.bf16 %v704, %v704
      %v859 = vpack.c.bf16 %v705, %v705
      %v860 = vpack.c.bf16 %v706, %v706
      %v861 = vpack.c.bf16 %v707, %v707
      %v862 = vpack.c.bf16 %v708, %v708
      %v863 = vpack.c.bf16 %v709, %v709
      %v864 = vpack.c.bf16 %v710, %v710
      %v865 = vpack.c.bf16 %v711, %v711
      %v866 = vpack.c.bf16 %v712, %v712
      %v867 = vpack.c.bf16 %v713, %v713
      %v868 = vpack.c.bf16 %v714, %v714
      %v869 = vpack.c.bf16 %v715, %v715
      %v870 = vpack.c.bf16 %v716, %v716
      %v871 = vpack.c.bf16 %v717, %v717
      %v872 = vpack.c.bf16 %v718, %v718
      %v873 = vpack.c.bf16 %v719, %v719
      %v874 = vpack.c.bf16 %v720, %v720
      %v875 = vpack.c.bf16 %v721, %v721
      %v876 = vpack.c.bf16 %v722, %v722
      %vm877 = vsmask.f32 4368
      %vm878 = vmor %vm733, %vm877
      %v880 = vshrl.u32 %v845, 16
      %v882 = vrot.slane %v880, 7
      %v883 = vshll.u32 %v845, 16
      %v885 = vor.u32 %v882, %v883
      %v886 = vrot.slane %v882, 4
      %v888 = vshrl.u32 %v846, 16
      %v890 = vrot.slane %v888, 7
      %v891 = vshll.u32 %v846, 16
      %v893 = vor.u32 %v890, %v891
      %v894 = vsel %vm878, %v886, %v893
      %v895 = vrot.slane %v890, 4
      %v897 = vshrl.u32 %v847, 16
      %v899 = vrot.slane %v897, 7
      %v900 = vshll.u32 %v847, 16
      %v902 = vor.u32 %v899, %v900
      %v903 = vrot.slane %v899, 4
      %v905 = vshrl.u32 %v848, 16
      %v907 = vrot.slane %v905, 7
      %v908 = vshll.u32 %v848, 16
      %v910 = vor.u32 %v907, %v908
      %v911 = vsel %vm878, %v903, %v910
      %v912 = vrot.slane %v907, 4
      %v914 = vshrl.u32 %v849, 16
      %v916 = vrot.slane %v914, 7
      %v917 = vshll.u32 %v849, 16
      %v919 = vor.u32 %v916, %v917
      %v920 = vrot.slane %v916, 4
      %v922 = vshrl.u32 %v850, 16
      %v924 = vrot.slane %v922, 7
      %v925 = vshll.u32 %v850, 16
      %v927 = vor.u32 %v924, %v925
      %v928 = vsel %vm878, %v920, %v927
      %v929 = vrot.slane %v924, 4
      %v931 = vshrl.u32 %v851, 16
      %v933 = vrot.slane %v931, 7
      %v934 = vshll.u32 %v851, 16
      %v936 = vor.u32 %v933, %v934
      %v937 = vrot.slane %v933, 4
      %v939 = vshrl.u32 %v852, 16
      %v941 = vrot.slane %v939, 7
      %v942 = vshll.u32 %v852, 16
      %v944 = vor.u32 %v941, %v942
      %v945 = vsel %vm878, %v937, %v944
      %v946 = vrot.slane %v941, 4
      %v948 = vshrl.u32 %v853, 16
      %v950 = vrot.slane %v948, 7
      %v951 = vshll.u32 %v853, 16
      %v953 = vor.u32 %v950, %v951
      %v954 = vrot.slane %v950, 4
      %v956 = vshrl.u32 %v854, 16
      %v958 = vrot.slane %v956, 7
      %v959 = vshll.u32 %v854, 16
      %v961 = vor.u32 %v958, %v959
      %v962 = vsel %vm878, %v954, %v961
      %v963 = vrot.slane %v958, 4
      %v965 = vshrl.u32 %v855, 16
      %v967 = vrot.slane %v965, 7
      %v968 = vshll.u32 %v855, 16
      %v970 = vor.u32 %v967, %v968
      %v971 = vrot.slane %v967, 4
      %v973 = vshrl.u32 %v856, 16
      %v975 = vrot.slane %v973, 7
      %v976 = vshll.u32 %v856, 16
      %v978 = vor.u32 %v975, %v976
      %v979 = vsel %vm878, %v971, %v978
      %v980 = vrot.slane %v975, 4
      %v982 = vshrl.u32 %v857, 16
      %v984 = vrot.slane %v982, 7
      %v985 = vshll.u32 %v857, 16
      %v987 = vor.u32 %v984, %v985
      %v988 = vrot.slane %v984, 4
      %v990 = vshrl.u32 %v858, 16
      %v992 = vrot.slane %v990, 7
      %v993 = vshll.u32 %v858, 16
      %v995 = vor.u32 %v992, %v993
      %v996 = vsel %vm878, %v988, %v995
      %v997 = vrot.slane %v992, 4
      %v999 = vshrl.u32 %v859, 16
      %v1001 = vrot.slane %v999, 7
      %v1002 = vshll.u32 %v859, 16
      %v1004 = vor.u32 %v1001, %v1002
      %v1005 = vrot.slane %v1001, 4
      %v1007 = vshrl.u32 %v860, 16
      %v1009 = vrot.slane %v1007, 7
      %v1010 = vshll.u32 %v860, 16
      %v1012 = vor.u32 %v1009, %v1010
      %v1013 = vsel %vm878, %v1005, %v1012
      %v1014 = vrot.slane %v1009, 4
      %v1016 = vshrl.u32 %v861, 16
      %v1018 = vrot.slane %v1016, 7
      %v1019 = vshll.u32 %v861, 16
      %v1021 = vor.u32 %v1018, %v1019
      %v1022 = vrot.slane %v1018, 4
      %v1024 = vshrl.u32 %v862, 16
      %v1026 = vrot.slane %v1024, 7
      %v1027 = vshll.u32 %v862, 16
      %v1029 = vor.u32 %v1026, %v1027
      %v1030 = vsel %vm878, %v1022, %v1029
      %v1031 = vrot.slane %v1026, 4
      %v1033 = vshrl.u32 %v863, 16
      %v1035 = vrot.slane %v1033, 7
      %v1036 = vshll.u32 %v863, 16
      %v1038 = vor.u32 %v1035, %v1036
      %v1039 = vrot.slane %v1035, 4
      %v1041 = vshrl.u32 %v864, 16
      %v1043 = vrot.slane %v1041, 7
      %v1044 = vshll.u32 %v864, 16
      %v1046 = vor.u32 %v1043, %v1044
      %v1047 = vsel %vm878, %v1039, %v1046
      %v1048 = vrot.slane %v1043, 4
      %v1050 = vshrl.u32 %v865, 16
      %v1052 = vrot.slane %v1050, 7
      %v1053 = vshll.u32 %v865, 16
      %v1055 = vor.u32 %v1052, %v1053
      %v1056 = vrot.slane %v1052, 4
      %v1058 = vshrl.u32 %v866, 16
      %v1060 = vrot.slane %v1058, 7
      %v1061 = vshll.u32 %v866, 16
      %v1063 = vor.u32 %v1060, %v1061
      %v1064 = vsel %vm878, %v1056, %v1063
      %v1065 = vrot.slane %v1060, 4
      %v1067 = vshrl.u32 %v867, 16
      %v1069 = vrot.slane %v1067, 7
      %v1070 = vshll.u32 %v867, 16
      %v1072 = vor.u32 %v1069, %v1070
      %v1073 = vrot.slane %v1069, 4
      %v1075 = vshrl.u32 %v868, 16
      %v1077 = vrot.slane %v1075, 7
      %v1078 = vshll.u32 %v868, 16
      %v1080 = vor.u32 %v1077, %v1078
      %v1081 = vsel %vm878, %v1073, %v1080
      %v1082 = vrot.slane %v1077, 4
      %v1084 = vshrl.u32 %v869, 16
      %v1086 = vrot.slane %v1084, 7
      %v1087 = vshll.u32 %v869, 16
      %v1089 = vor.u32 %v1086, %v1087
      %v1090 = vrot.slane %v1086, 4
      %v1092 = vshrl.u32 %v870, 16
      %v1094 = vrot.slane %v1092, 7
      %v1095 = vshll.u32 %v870, 16
      %v1097 = vor.u32 %v1094, %v1095
      %v1098 = vsel %vm878, %v1090, %v1097
      %v1099 = vrot.slane %v1094, 4
      %v1101 = vshrl.u32 %v871, 16
      %v1103 = vrot.slane %v1101, 7
      %v1104 = vshll.u32 %v871, 16
      %v1106 = vor.u32 %v1103, %v1104
      %v1107 = vrot.slane %v1103, 4
      %v1109 = vshrl.u32 %v872, 16
      %v1111 = vrot.slane %v1109, 7
      %v1112 = vshll.u32 %v872, 16
      %v1114 = vor.u32 %v1111, %v1112
      %v1115 = vsel %vm878, %v1107, %v1114
      %v1116 = vrot.slane %v1111, 4
      %v1118 = vshrl.u32 %v873, 16
      %v1120 = vrot.slane %v1118, 7
      %v1121 = vshll.u32 %v873, 16
      %v1123 = vor.u32 %v1120, %v1121
      %v1124 = vrot.slane %v1120, 4
      %v1126 = vshrl.u32 %v874, 16
      %v1128 = vrot.slane %v1126, 7
      %v1129 = vshll.u32 %v874, 16
      %v1131 = vor.u32 %v1128, %v1129
      %v1132 = vsel %vm878, %v1124, %v1131
      %v1133 = vrot.slane %v1128, 4
      %v1135 = vshrl.u32 %v875, 16
      %v1137 = vrot.slane %v1135, 7
      %v1138 = vshll.u32 %v875, 16
      %v1140 = vor.u32 %v1137, %v1138
      %v1141 = vrot.slane %v1137, 4
      %v1143 = vshrl.u32 %v876, 16
      %v1145 = vrot.slane %v1143, 7
      %v1146 = vshll.u32 %v876, 16
      %v1148 = vor.u32 %v1145, %v1146
      %v1149 = vsel %vm878, %v1141, %v1148
      %v1150 = vrot.slane %v1145, 4
      %s1199 = scalar_lea.vmem [#allocation2], 12
      %vm1200 = vcmask 27648
      %vm1201 = vmand %vm1200, %vm789
      %v1202 = vld [vmem:[%s1199] sm:$0xf]
      %v1203 = vsel %vm1201, %v885, %v1202
      %1204 = vst [vmem:[%s1199] sm:$0xf] %v1203
      %1205 = vst.msk [vmem:[%s1199 + $0x4] sm:$0xf] %vm723, %v894
      %v1206 = vld [vmem:[%s1199 + $0x8] sm:$0x1]
      %v1207 = vsel %vm734, %v895, %v1206
      %1208 = vst [vmem:[%s1199 + $0x8] sm:$0x1] %v1207
      %v1209 = vld [vmem:[%s1199 + $0xc] sm:$0xf]
      %v1210 = vsel %vm1201, %v902, %v1209
      %1211 = vst [vmem:[%s1199 + $0xc] sm:$0xf] %v1210
      %1212 = vst.msk [vmem:[%s1199 + $0x10] sm:$0xf] %vm723, %v911
      %v1213 = vld [vmem:[%s1199 + $0x14] sm:$0x1]
      %v1214 = vsel %vm734, %v912, %v1213
      %1215 = vst [vmem:[%s1199 + $0x14] sm:$0x1] %v1214
      %v1216 = vld [vmem:[%s1199 + $0x18] sm:$0xf]
      %v1217 = vsel %vm1201, %v919, %v1216
      %1218 = vst [vmem:[%s1199 + $0x18] sm:$0xf] %v1217
      %1219 = vst.msk [vmem:[%s1199 + $0x1c] sm:$0xf] %vm723, %v928
      %v1220 = vld [vmem:[%s1199 + $0x20] sm:$0x1]
      %v1221 = vsel %vm734, %v929, %v1220
      %1222 = vst [vmem:[%s1199 + $0x20] sm:$0x1] %v1221
      %v1223 = vld [vmem:[%s1199 + $0x24] sm:$0xf]
      %v1224 = vsel %vm1201, %v936, %v1223
      %1225 = vst [vmem:[%s1199 + $0x24] sm:$0xf] %v1224
      %1226 = vst.msk [vmem:[%s1199 + $0x28] sm:$0xf] %vm723, %v945
      %v1227 = vld [vmem:[%s1199 + $0x2c] sm:$0x1]
      %v1228 = vsel %vm734, %v946, %v1227
      %1229 = vst [vmem:[%s1199 + $0x2c] sm:$0x1] %v1228
      %v1230 = vld [vmem:[%s1199 + $0x30] sm:$0xf]
      %v1231 = vsel %vm1201, %v953, %v1230
      %1232 = vst [vmem:[%s1199 + $0x30] sm:$0xf] %v1231
      %1233 = vst.msk [vmem:[%s1199 + $0x34] sm:$0xf] %vm723, %v962
      %v1234 = vld [vmem:[%s1199 + $0x38] sm:$0x1]
      %v1235 = vsel %vm734, %v963, %v1234
      %1236 = vst [vmem:[%s1199 + $0x38] sm:$0x1] %v1235
      %v1237 = vld [vmem:[%s1199 + $0x3c] sm:$0xf]
      %v1238 = vsel %vm1201, %v970, %v1237
      %1239 = vst [vmem:[%s1199 + $0x3c] sm:$0xf] %v1238
      %1240 = vst.msk [vmem:[%s1199 + $0x40] sm:$0xf] %vm723, %v979
      %v1241 = vld [vmem:[%s1199 + $0x44] sm:$0x1]
      %v1242 = vsel %vm734, %v980, %v1241
      %1243 = vst [vmem:[%s1199 + $0x44] sm:$0x1] %v1242
      %v1244 = vld [vmem:[%s1199 + $0x48] sm:$0xf]
      %v1245 = vsel %vm1201, %v987, %v1244
      %1246 = vst [vmem:[%s1199 + $0x48] sm:$0xf] %v1245
      %1247 = vst.msk [vmem:[%s1199 + $0x4c] sm:$0xf] %vm723, %v996
      %v1248 = vld [vmem:[%s1199 + $0x50] sm:$0x1]
      %v1249 = vsel %vm734, %v997, %v1248
      %1250 = vst [vmem:[%s1199 + $0x50] sm:$0x1] %v1249
      %v1251 = vld [vmem:[%s1199 + $0x54] sm:$0xf]
      %v1252 = vsel %vm1201, %v1004, %v1251
      %1253 = vst [vmem:[%s1199 + $0x54] sm:$0xf] %v1252
      %1254 = vst.msk [vmem:[%s1199 + $0x58] sm:$0xf] %vm723, %v1013
      %v1255 = vld [vmem:[%s1199 + $0x5c] sm:$0x1]
      %v1256 = vsel %vm734, %v1014, %v1255
      %1257 = vst [vmem:[%s1199 + $0x5c] sm:$0x1] %v1256
      %v1258 = vld [vmem:[%s1199 + $0x60] sm:$0xf]
      %v1259 = vsel %vm1201, %v1021, %v1258
      %1260 = vst [vmem:[%s1199 + $0x60] sm:$0xf] %v1259
      %1261 = vst.msk [vmem:[%s1199 + $0x64] sm:$0xf] %vm723, %v1030
      %v1262 = vld [vmem:[%s1199 + $0x68] sm:$0x1]
      %v1263 = vsel %vm734, %v1031, %v1262
      %1264 = vst [vmem:[%s1199 + $0x68] sm:$0x1] %v1263
      %v1265 = vld [vmem:[%s1199 + $0x6c] sm:$0xf]
      %v1266 = vsel %vm1201, %v1038, %v1265
      %1267 = vst [vmem:[%s1199 + $0x6c] sm:$0xf] %v1266
      %1268 = vst.msk [vmem:[%s1199 + $0x70] sm:$0xf] %vm723, %v1047
      %v1269 = vld [vmem:[%s1199 + $0x74] sm:$0x1]
      %v1270 = vsel %vm734, %v1048, %v1269
      %1271 = vst [vmem:[%s1199 + $0x74] sm:$0x1] %v1270
      %v1272 = vld [vmem:[%s1199 + $0x78] sm:$0xf]
      %v1273 = vsel %vm1201, %v1055, %v1272
      %1274 = vst [vmem:[%s1199 + $0x78] sm:$0xf] %v1273
      %1275 = vst.msk [vmem:[%s1199 + $0x7c] sm:$0xf] %vm723, %v1064
      %v1276 = vld [vmem:[%s1199 + $0x80] sm:$0x1]
      %v1277 = vsel %vm734, %v1065, %v1276
      %1278 = vst [vmem:[%s1199 + $0x80] sm:$0x1] %v1277
      %v1279 = vld [vmem:[%s1199 + $0x84] sm:$0xf]
      %v1280 = vsel %vm1201, %v1072, %v1279
      %1281 = vst [vmem:[%s1199 + $0x84] sm:$0xf] %v1280
      %1282 = vst.msk [vmem:[%s1199 + $0x88] sm:$0xf] %vm723, %v1081
      %v1283 = vld [vmem:[%s1199 + $0x8c] sm:$0x1]
      %v1284 = vsel %vm734, %v1082, %v1283
      %1285 = vst [vmem:[%s1199 + $0x8c] sm:$0x1] %v1284
      %v1286 = vld [vmem:[%s1199 + $0x90] sm:$0xf]
      %v1287 = vsel %vm1201, %v1089, %v1286
      %1288 = vst [vmem:[%s1199 + $0x90] sm:$0xf] %v1287
      %1289 = vst.msk [vmem:[%s1199 + $0x94] sm:$0xf] %vm723, %v1098
      %v1290 = vld [vmem:[%s1199 + $0x98] sm:$0x1]
      %v1291 = vsel %vm734, %v1099, %v1290
      %1292 = vst [vmem:[%s1199 + $0x98] sm:$0x1] %v1291
      %v1293 = vld [vmem:[%s1199 + $0x9c] sm:$0xf]
      %v1294 = vsel %vm1201, %v1106, %v1293
      %1295 = vst [vmem:[%s1199 + $0x9c] sm:$0xf] %v1294
      %1296 = vst.msk [vmem:[%s1199 + $0xa0] sm:$0xf] %vm723, %v1115
      %v1297 = vld [vmem:[%s1199 + $0xa4] sm:$0x1]
      %v1298 = vsel %vm734, %v1116, %v1297
      %1299 = vst [vmem:[%s1199 + $0xa4] sm:$0x1] %v1298
      %v1300 = vld [vmem:[%s1199 + $0xa8] sm:$0xf]
      %v1301 = vsel %vm1201, %v1123, %v1300
      %1302 = vst [vmem:[%s1199 + $0xa8] sm:$0xf] %v1301
      %1303 = vst.msk [vmem:[%s1199 + $0xac] sm:$0xf] %vm723, %v1132
      %v1304 = vld [vmem:[%s1199 + $0xb0] sm:$0x1]
      %v1305 = vsel %vm734, %v1133, %v1304
      %1306 = vst [vmem:[%s1199 + $0xb0] sm:$0x1] %v1305
      %v1307 = vld [vmem:[%s1199 + $0xb4] sm:$0xf]
      %v1308 = vsel %vm1201, %v1140, %v1307
      %1309 = vst [vmem:[%s1199 + $0xb4] sm:$0xf] %v1308
      %1310 = vst.msk [vmem:[%s1199 + $0xb8] sm:$0xf] %vm723, %v1149
      %v1311 = vld [vmem:[%s1199 + $0xbc] sm:$0x1]
      %v1312 = vsel %vm734, %v1150, %v1311
      %1313 = vst [vmem:[%s1199 + $0xbc] sm:$0x1] %v1312
      %v1314 = vld [vmem:[#allocation2] sm:$0xf]
      %v1315 = vld [vmem:[#allocation2 + $0x4] sm:$0xf]
      %v1316 = vld [vmem:[#allocation2 + $0xc] sm:$0xf]
      %v1317 = vld [vmem:[#allocation2 + $0x10] sm:$0xf]
      %v1318 = vld [vmem:[#allocation2 + $0x18] sm:$0xf]
      %v1319 = vld [vmem:[#allocation2 + $0x1c] sm:$0xf]
      %v1320 = vld [vmem:[#allocation2 + $0x24] sm:$0xf]
      %v1321 = vld [vmem:[#allocation2 + $0x28] sm:$0xf]
      %v1322 = vld [vmem:[#allocation2 + $0x30] sm:$0xf]
      %v1323 = vld [vmem:[#allocation2 + $0x34] sm:$0xf]
      %v1324 = vld [vmem:[#allocation2 + $0x3c] sm:$0xf]
      %v1325 = vld [vmem:[#allocation2 + $0x40] sm:$0xf]
      %v1326 = vld [vmem:[#allocation2 + $0x48] sm:$0xf]
      %v1327 = vld [vmem:[#allocation2 + $0x4c] sm:$0xf]
      %v1328 = vld [vmem:[#allocation2 + $0x54] sm:$0xf]
      %v1329 = vld [vmem:[#allocation2 + $0x58] sm:$0xf]
      %v1330 = vld [vmem:[#allocation2 + $0x60] sm:$0xf]
      %v1331 = vld [vmem:[#allocation2 + $0x64] sm:$0xf]
      %v1332 = vld [vmem:[#allocation2 + $0x6c] sm:$0xf]
      %v1333 = vld [vmem:[#allocation2 + $0x70] sm:$0xf]
      %v1334 = vld [vmem:[#allocation2 + $0x78] sm:$0xf]
      %v1335 = vld [vmem:[#allocation2 + $0x7c] sm:$0xf]
      %v1336 = vld [vmem:[#allocation2 + $0x84] sm:$0xf]
      %v1337 = vld [vmem:[#allocation2 + $0x88] sm:$0xf]
      %v1338 = vld [vmem:[#allocation2 + $0x90] sm:$0xf]
      %v1339 = vld [vmem:[#allocation2 + $0x94] sm:$0xf]
      %v1340 = vld [vmem:[#allocation2 + $0x9c] sm:$0xf]
      %v1341 = vld [vmem:[#allocation2 + $0xa0] sm:$0xf]
      %v1342 = vld [vmem:[#allocation2 + $0xa8] sm:$0xf]
      %v1343 = vld [vmem:[#allocation2 + $0xac] sm:$0xf]
      %v1344 = vld [vmem:[#allocation2 + $0xb4] sm:$0xf]
      %v1345 = vld [vmem:[#allocation2 + $0xb8] sm:$0xf]
      %v1346 = vld [vmem:[#allocation2 + $0xc0] sm:$0xf]
      %v1347 = vld [vmem:[#allocation2 + $0xc4] sm:$0xf]
      %v1348 = vld [vmem:[#allocation2 + $0xcc] sm:$0xf]
      %v1349 = vld [vmem:[#allocation2 + $0xd0] sm:$0xf]
      %1350 = vst.msk [vmem:[#allocation3] sm:$0xf] %vm723, %v1314
      %1351 = vst.msk [vmem:[#allocation3 + $0x4] sm:$0xf] %vm723, %v1315
      %1352 = vst.msk [vmem:[#allocation3 + $0x8] sm:$0xf] %vm723, %v1316
      %1353 = vst.msk [vmem:[#allocation3 + $0xc] sm:$0xf] %vm723, %v1317
      %1354 = vst.msk [vmem:[#allocation3 + $0x10] sm:$0xf] %vm723, %v1318
      %1355 = vst.msk [vmem:[#allocation3 + $0x14] sm:$0xf] %vm723, %v1319
      %1356 = vst.msk [vmem:[#allocation3 + $0x18] sm:$0xf] %vm723, %v1320
      %1357 = vst.msk [vmem:[#allocation3 + $0x1c] sm:$0xf] %vm723, %v1321
      %1358 = vst.msk [vmem:[#allocation3 + $0x20] sm:$0xf] %vm723, %v1322
      %1359 = vst.msk [vmem:[#allocation3 + $0x24] sm:$0xf] %vm723, %v1323
      %1360 = vst.msk [vmem:[#allocation3 + $0x28] sm:$0xf] %vm723, %v1324
      %1361 = vst.msk [vmem:[#allocation3 + $0x2c] sm:$0xf] %vm723, %v1325
      %1362 = vst.msk [vmem:[#allocation3 + $0x30] sm:$0xf] %vm723, %v1326
      %1363 = vst.msk [vmem:[#allocation3 + $0x34] sm:$0xf] %vm723, %v1327
      %1364 = vst.msk [vmem:[#allocation3 + $0x38] sm:$0xf] %vm723, %v1328
      %1365 = vst.msk [vmem:[#allocation3 + $0x3c] sm:$0xf] %vm723, %v1329
      %1366 = vst.msk [vmem:[#allocation3 + $0x40] sm:$0xf] %vm723, %v1330
      %1367 = vst.msk [vmem:[#allocation3 + $0x44] sm:$0xf] %vm723, %v1331
      %1368 = vst.msk [vmem:[#allocation3 + $0x48] sm:$0xf] %vm723, %v1332
      %1369 = vst.msk [vmem:[#allocation3 + $0x4c] sm:$0xf] %vm723, %v1333
      %1370 = vst.msk [vmem:[#allocation3 + $0x50] sm:$0xf] %vm723, %v1334
      %1371 = vst.msk [vmem:[#allocation3 + $0x54] sm:$0xf] %vm723, %v1335
      %1372 = vst.msk [vmem:[#allocation3 + $0x58] sm:$0xf] %vm723, %v1336
      %1373 = vst.msk [vmem:[#allocation3 + $0x5c] sm:$0xf] %vm723, %v1337
      %1374 = vst.msk [vmem:[#allocation3 + $0x60] sm:$0xf] %vm723, %v1338
      %1375 = vst.msk [vmem:[#allocation3 + $0x64] sm:$0xf] %vm723, %v1339
      %1376 = vst.msk [vmem:[#allocation3 + $0x68] sm:$0xf] %vm723, %v1340
      %1377 = vst.msk [vmem:[#allocation3 + $0x6c] sm:$0xf] %vm723, %v1341
      %1378 = vst.msk [vmem:[#allocation3 + $0x70] sm:$0xf] %vm723, %v1342
      %1379 = vst.msk [vmem:[#allocation3 + $0x74] sm:$0xf] %vm723, %v1343
      %1380 = vst.msk [vmem:[#allocation3 + $0x78] sm:$0xf] %vm723, %v1344
      %1381 = vst.msk [vmem:[#allocation3 + $0x7c] sm:$0xf] %vm723, %v1345
      %1382 = vst.msk [vmem:[#allocation3 + $0x80] sm:$0xf] %vm723, %v1346
      %1383 = vst.msk [vmem:[#allocation3 + $0x84] sm:$0xf] %vm723, %v1347
      %1384 = vst.msk [vmem:[#allocation3 + $0x88] sm:$0xf] %vm723, %v1348
      %1385 = vst.msk [vmem:[#allocation3 + $0x8c] sm:$0xf] %vm723, %v1349
      %v1386 = vld [vmem:[#allocation3] sm:$0xf]
      %v1387 = vld [vmem:[#allocation3 + $0x4] sm:$0xf]
      %v1388 = vld [vmem:[#allocation3 + $0x8] sm:$0xf]
      %v1389 = vld [vmem:[#allocation3 + $0xc] sm:$0xf]
      %v1390 = vld [vmem:[#allocation3 + $0x10] sm:$0xf]
      %v1391 = vld [vmem:[#allocation3 + $0x14] sm:$0xf]
      %v1392 = vld [vmem:[#allocation3 + $0x18] sm:$0xf]
      %v1393 = vld [vmem:[#allocation3 + $0x1c] sm:$0xf]
      %v1394 = vld [vmem:[#allocation3 + $0x20] sm:$0xf]
      %v1395 = vld [vmem:[#allocation3 + $0x24] sm:$0xf]
      %v1396 = vld [vmem:[#allocation3 + $0x28] sm:$0xf]
      %v1397 = vld [vmem:[#allocation3 + $0x2c] sm:$0xf]
      %v1398 = vld [vmem:[#allocation3 + $0x30] sm:$0xf]
      %v1399 = vld [vmem:[#allocation3 + $0x34] sm:$0xf]
      %v1400 = vld [vmem:[#allocation3 + $0x38] sm:$0xf]
      %v1401 = vld [vmem:[#allocation3 + $0x3c] sm:$0xf]
      %v1402 = vld [vmem:[#allocation3 + $0x40] sm:$0xf]
      %v1403 = vld [vmem:[#allocation3 + $0x44] sm:$0xf]
      %v1404 = vld [vmem:[#allocation3 + $0x48] sm:$0xf]
      %v1405 = vld [vmem:[#allocation3 + $0x4c] sm:$0xf]
      %v1406 = vld [vmem:[#allocation3 + $0x50] sm:$0xf]
      %v1407 = vld [vmem:[#allocation3 + $0x54] sm:$0xf]
      %v1408 = vld [vmem:[#allocation3 + $0x58] sm:$0xf]
      %v1409 = vld [vmem:[#allocation3 + $0x5c] sm:$0xf]
      %v1410 = vld [vmem:[#allocation3 + $0x60] sm:$0xf]
      %v1411 = vld [vmem:[#allocation3 + $0x64] sm:$0xf]
      %v1412 = vld [vmem:[#allocation3 + $0x68] sm:$0xf]
      %v1413 = vld [vmem:[#allocation3 + $0x6c] sm:$0xf]
      %v1414 = vld [vmem:[#allocation3 + $0x70] sm:$0xf]
      %v1415 = vld [vmem:[#allocation3 + $0x74] sm:$0xf]
      %v1416 = vld [vmem:[#allocation3 + $0x78] sm:$0xf]
      %v1417 = vld [vmem:[#allocation3 + $0x7c] sm:$0xf]
      %v1418 = vld [vmem:[%s4] sm:$0x3]
      %s1419 = scalar_lea.vmem [#allocation3], 8
      %v1420 = vld [vmem:[%s1419] sm:$0xf]
      %v1421 = vld [vmem:[%s1419 + $0x4] sm:$0xf]
      %v1422 = vld [vmem:[%s1419 + $0x8] sm:$0xf]
      %v1423 = vld [vmem:[%s1419 + $0xc] sm:$0xf]
      %v1424 = vld [vmem:[%s1419 + $0x10] sm:$0xf]
      %v1425 = vld [vmem:[%s1419 + $0x14] sm:$0xf]
      %v1426 = vld [vmem:[%s1419 + $0x18] sm:$0xf]
      %v1427 = vld [vmem:[%s1419 + $0x1c] sm:$0xf]
      %v1428 = vld [vmem:[%s1419 + $0x20] sm:$0xf]
      %v1429 = vld [vmem:[%s1419 + $0x24] sm:$0xf]
      %v1430 = vld [vmem:[%s1419 + $0x28] sm:$0xf]
      %v1431 = vld [vmem:[%s1419 + $0x2c] sm:$0xf]
      %v1432 = vld [vmem:[%s1419 + $0x30] sm:$0xf]
      %v1433 = vld [vmem:[%s1419 + $0x34] sm:$0xf]
      %v1434 = vld [vmem:[%s1419 + $0x38] sm:$0xf]
      %v1435 = vld [vmem:[%s1419 + $0x3c] sm:$0xf]
      %v1436 = vld [vmem:[%s1419 + $0x40] sm:$0xf]
      %v1437 = vld [vmem:[%s1419 + $0x44] sm:$0xf]
      %v1438 = vld [vmem:[%s1419 + $0x48] sm:$0xf]
      %v1439 = vld [vmem:[%s1419 + $0x4c] sm:$0xf]
      %v1440 = vld [vmem:[%s1419 + $0x50] sm:$0xf]
      %v1441 = vld [vmem:[%s1419 + $0x54] sm:$0xf]
      %v1442 = vld [vmem:[%s1419 + $0x58] sm:$0xf]
      %v1443 = vld [vmem:[%s1419 + $0x5c] sm:$0xf]
      %v1444 = vld [vmem:[%s1419 + $0x60] sm:$0xf]
      %v1445 = vld [vmem:[%s1419 + $0x64] sm:$0xf]
      %v1446 = vld [vmem:[%s1419 + $0x68] sm:$0xf]
      %v1447 = vld [vmem:[%s1419 + $0x6c] sm:$0xf]
      %v1448 = vld [vmem:[%s1419 + $0x70] sm:$0xf]
      %v1449 = vld [vmem:[%s1419 + $0x74] sm:$0xf]
      %v1450 = vld [vmem:[%s1419 + $0x78] sm:$0xf]
      %v1451 = vld [vmem:[%s1419 + $0x7c] sm:$0xf]
      %s1452 = scalar_lea.vmem %s4, 6
      %v1453 = vld [vmem:[%s1452] sm:$0x3]
      %v1486 = vunpack.c.l.b16 %v1420
      %v1487 = vunpack.c.l.b16 %v1421
      %v1488 = vunpack.c.l.b16 %v1422
      %v1489 = vunpack.c.l.b16 %v1423
      %v1490 = vunpack.c.l.b16 %v1424
      %v1491 = vunpack.c.l.b16 %v1425
      %v1492 = vunpack.c.l.b16 %v1426
      %v1493 = vunpack.c.l.b16 %v1427
      %v1494 = vunpack.c.l.b16 %v1428
      %v1495 = vunpack.c.l.b16 %v1429
      %v1496 = vunpack.c.l.b16 %v1430
      %v1497 = vunpack.c.l.b16 %v1431
      %v1498 = vunpack.c.l.b16 %v1432
      %v1499 = vunpack.c.l.b16 %v1433
      %v1500 = vunpack.c.l.b16 %v1434
      %v1501 = vunpack.c.l.b16 %v1435
      %v1502 = vunpack.c.l.b16 %v1436
      %v1503 = vunpack.c.l.b16 %v1437
      %v1504 = vunpack.c.l.b16 %v1438
      %v1505 = vunpack.c.l.b16 %v1439
      %v1506 = vunpack.c.l.b16 %v1440
      %v1507 = vunpack.c.l.b16 %v1441
      %v1508 = vunpack.c.l.b16 %v1442
      %v1509 = vunpack.c.l.b16 %v1443
      %v1510 = vunpack.c.l.b16 %v1444
      %v1511 = vunpack.c.l.b16 %v1445
      %v1512 = vunpack.c.l.b16 %v1446
      %v1513 = vunpack.c.l.b16 %v1447
      %v1514 = vunpack.c.l.b16 %v1448
      %v1515 = vunpack.c.l.b16 %v1449
      %v1516 = vunpack.c.l.b16 %v1450
      %v1517 = vunpack.c.l.b16 %v1451
      %v1518 = vpack.c.b16 %v1487, %v1486
      %v1519 = vpack.c.b16 %v1489, %v1488
      %v1520 = vpack.c.b16 %v1491, %v1490
      %v1521 = vpack.c.b16 %v1493, %v1492
      %v1522 = vpack.c.b16 %v1495, %v1494
      %v1523 = vpack.c.b16 %v1497, %v1496
      %v1524 = vpack.c.b16 %v1499, %v1498
      %v1525 = vpack.c.b16 %v1501, %v1500
      %v1526 = vpack.c.b16 %v1503, %v1502
      %v1527 = vpack.c.b16 %v1505, %v1504
      %v1528 = vpack.c.b16 %v1507, %v1506
      %v1529 = vpack.c.b16 %v1509, %v1508
      %v1530 = vpack.c.b16 %v1511, %v1510
      %v1531 = vpack.c.b16 %v1513, %v1512
      %v1532 = vpack.c.b16 %v1515, %v1514
      %v1533 = vpack.c.b16 %v1517, %v1516
      %vm1534 = vcmask 31744
      %v1536 = vsel %vm1534, %v1518, 0
      %v1539 = vsel %vm1534, %v1519, 0
      %v1542 = vsel %vm1534, %v1520, 0
      %v1545 = vsel %vm1534, %v1521, 0
      %v1548 = vsel %vm1534, %v1522, 0
      %v1551 = vsel %vm1534, %v1523, 0
      %v1554 = vsel %vm1534, %v1524, 0
      %v1557 = vsel %vm1534, %v1525, 0
      %v1560 = vsel %vm1534, %v1526, 0
      %v1563 = vsel %vm1534, %v1527, 0
      %v1566 = vsel %vm1534, %v1528, 0
      %v1569 = vsel %vm1534, %v1529, 0
      %v1572 = vsel %vm1534, %v1530, 0
      %v1575 = vsel %vm1534, %v1531, 0
      %v1578 = vsel %vm1534, %v1532, 0
      %v1581 = vsel %vm1534, %v1533, 0
      %vm1583 = vcmask 1041408
      %v1585 = vsel %vm1583, %v1453, 0
      %1587 = vmatpush.bf16.msra.mxu0 0
      %1588 = vmatpush.bf16.msra.mxu0 0
      %1589 = vmatpush.bf16.msra.mxu0 0
      %1590 = vmatpush.bf16.msra.mxu0 0
      %1591 = vmatpush.bf16.msra.mxu0 0
      %1592 = vmatpush.bf16.msra.mxu0 0
      %1593 = vmatpush.bf16.msra.mxu0 0
      %1594 = vmatpush.bf16.msra.mxu0 %v1585
      %1595 = vmatmul.bf16.gmra.mxu0 %v1536
      %v1596 = vpop.f32.mrf.mxu0
      %v1597 = vadd.f32 0.0, %v1596
      %v1598 = vpop.f32.mrf.mxu0
      %v1599 = vadd.f32 0.0, %v1598
      %1600 = vmatmul.bf16.gmra.mxu0 %v1539
      %v1601 = vpop.f32.mrf.mxu0
      %v1602 = vadd.f32 0.0, %v1601
      %v1603 = vpop.f32.mrf.mxu0
      %v1604 = vadd.f32 0.0, %v1603
      %1605 = vmatmul.bf16.gmra.mxu0 %v1542
      %v1606 = vpop.f32.mrf.mxu0
      %v1607 = vadd.f32 0.0, %v1606
      %v1608 = vpop.f32.mrf.mxu0
      %v1609 = vadd.f32 0.0, %v1608
      %1610 = vmatmul.bf16.gmra.mxu0 %v1545
      %v1611 = vpop.f32.mrf.mxu0
      %v1612 = vadd.f32 0.0, %v1611
      %v1613 = vpop.f32.mrf.mxu0
      %v1614 = vadd.f32 0.0, %v1613
      %1615 = vmatmul.bf16.gmra.mxu0 %v1548
      %v1616 = vpop.f32.mrf.mxu0
      %v1617 = vadd.f32 0.0, %v1616
      %v1618 = vpop.f32.mrf.mxu0
      %v1619 = vadd.f32 0.0, %v1618
      %1620 = vmatmul.bf16.gmra.mxu0 %v1551
      %v1621 = vpop.f32.mrf.mxu0
      %v1622 = vadd.f32 0.0, %v1621
      %v1623 = vpop.f32.mrf.mxu0
      %v1624 = vadd.f32 0.0, %v1623
      %1625 = vmatmul.bf16.gmra.mxu0 %v1554
      %v1626 = vpop.f32.mrf.mxu0
      %v1627 = vadd.f32 0.0, %v1626
      %v1628 = vpop.f32.mrf.mxu0
      %v1629 = vadd.f32 0.0, %v1628
      %1630 = vmatmul.bf16.gmra.mxu0 %v1557
      %v1631 = vpop.f32.mrf.mxu0
      %v1632 = vadd.f32 0.0, %v1631
      %v1633 = vpop.f32.mrf.mxu0
      %v1634 = vadd.f32 0.0, %v1633
      %1635 = vmatmul.bf16.gmra.mxu0 %v1560
      %v1636 = vpop.f32.mrf.mxu0
      %v1637 = vadd.f32 0.0, %v1636
      %v1638 = vpop.f32.mrf.mxu0
      %v1639 = vadd.f32 0.0, %v1638
      %1640 = vmatmul.bf16.gmra.mxu0 %v1563
      %v1641 = vpop.f32.mrf.mxu0
      %v1642 = vadd.f32 0.0, %v1641
      %v1643 = vpop.f32.mrf.mxu0
      %v1644 = vadd.f32 0.0, %v1643
      %1645 = vmatmul.bf16.gmra.mxu0 %v1566
      %v1646 = vpop.f32.mrf.mxu0
      %v1647 = vadd.f32 0.0, %v1646
      %v1648 = vpop.f32.mrf.mxu0
      %v1649 = vadd.f32 0.0, %v1648
      %1650 = vmatmul.bf16.gmra.mxu0 %v1569
      %v1651 = vpop.f32.mrf.mxu0
      %v1652 = vadd.f32 0.0, %v1651
      %v1653 = vpop.f32.mrf.mxu0
      %v1654 = vadd.f32 0.0, %v1653
      %1655 = vmatmul.bf16.gmra.mxu0 %v1572
      %v1656 = vpop.f32.mrf.mxu0
      %v1657 = vadd.f32 0.0, %v1656
      %v1658 = vpop.f32.mrf.mxu0
      %v1659 = vadd.f32 0.0, %v1658
      %1660 = vmatmul.bf16.gmra.mxu0 %v1575
      %v1661 = vpop.f32.mrf.mxu0
      %v1662 = vadd.f32 0.0, %v1661
      %v1663 = vpop.f32.mrf.mxu0
      %v1664 = vadd.f32 0.0, %v1663
      %1665 = vmatmul.bf16.gmra.mxu0 %v1578
      %v1666 = vpop.f32.mrf.mxu0
      %v1667 = vadd.f32 0.0, %v1666
      %v1668 = vpop.f32.mrf.mxu0
      %v1669 = vadd.f32 0.0, %v1668
      %1670 = vmatmul.bf16.gmra.mxu0 %v1581
      %v1671 = vpop.f32.mrf.mxu0
      %v1672 = vadd.f32 0.0, %v1671
      %v1673 = vpop.f32.mrf.mxu0
      %v1674 = vadd.f32 0.0, %v1673
      %1675 = vdwg.mxu0
      %v1708 = vunpack.c.l.b16 %v1386
      %v1709 = vunpack.c.l.b16 %v1387
      %v1710 = vunpack.c.l.b16 %v1388
      %v1711 = vunpack.c.l.b16 %v1389
      %v1712 = vunpack.c.l.b16 %v1390
      %v1713 = vunpack.c.l.b16 %v1391
      %v1714 = vunpack.c.l.b16 %v1392
      %v1715 = vunpack.c.l.b16 %v1393
      %v1716 = vunpack.c.l.b16 %v1394
      %v1717 = vunpack.c.l.b16 %v1395
      %v1718 = vunpack.c.l.b16 %v1396
      %v1719 = vunpack.c.l.b16 %v1397
      %v1720 = vunpack.c.l.b16 %v1398
      %v1721 = vunpack.c.l.b16 %v1399
      %v1722 = vunpack.c.l.b16 %v1400
      %v1723 = vunpack.c.l.b16 %v1401
      %v1724 = vunpack.c.l.b16 %v1402
      %v1725 = vunpack.c.l.b16 %v1403
      %v1726 = vunpack.c.l.b16 %v1404
      %v1727 = vunpack.c.l.b16 %v1405
      %v1728 = vunpack.c.l.b16 %v1406
      %v1729 = vunpack.c.l.b16 %v1407
      %v1730 = vunpack.c.l.b16 %v1408
      %v1731 = vunpack.c.l.b16 %v1409
      %v1732 = vunpack.c.l.b16 %v1410
      %v1733 = vunpack.c.l.b16 %v1411
      %v1734 = vunpack.c.l.b16 %v1412
      %v1735 = vunpack.c.l.b16 %v1413
      %v1736 = vunpack.c.l.b16 %v1414
      %v1737 = vunpack.c.l.b16 %v1415
      %v1738 = vunpack.c.l.b16 %v1416
      %v1739 = vunpack.c.l.b16 %v1417
      %v1740 = vpack.c.b16 %v1709, %v1708
      %v1741 = vpack.c.b16 %v1711, %v1710
      %v1742 = vpack.c.b16 %v1713, %v1712
      %v1743 = vpack.c.b16 %v1715, %v1714
      %v1744 = vpack.c.b16 %v1717, %v1716
      %v1745 = vpack.c.b16 %v1719, %v1718
      %v1746 = vpack.c.b16 %v1721, %v1720
      %v1747 = vpack.c.b16 %v1723, %v1722
      %v1748 = vpack.c.b16 %v1725, %v1724
      %v1749 = vpack.c.b16 %v1727, %v1726
      %v1750 = vpack.c.b16 %v1729, %v1728
      %v1751 = vpack.c.b16 %v1731, %v1730
      %v1752 = vpack.c.b16 %v1733, %v1732
      %v1753 = vpack.c.b16 %v1735, %v1734
      %v1754 = vpack.c.b16 %v1737, %v1736
      %v1755 = vpack.c.b16 %v1739, %v1738
      %v1757 = vsel %vm1534, %v1740, 0
      %v1760 = vsel %vm1534, %v1741, 0
      %v1763 = vsel %vm1534, %v1742, 0
      %v1766 = vsel %vm1534, %v1743, 0
      %v1769 = vsel %vm1534, %v1744, 0
      %v1772 = vsel %vm1534, %v1745, 0
      %v1775 = vsel %vm1534, %v1746, 0
      %v1778 = vsel %vm1534, %v1747, 0
      %v1781 = vsel %vm1534, %v1748, 0
      %v1784 = vsel %vm1534, %v1749, 0
      %v1787 = vsel %vm1534, %v1750, 0
      %v1790 = vsel %vm1534, %v1751, 0
      %v1793 = vsel %vm1534, %v1752, 0
      %v1796 = vsel %vm1534, %v1753, 0
      %v1799 = vsel %vm1534, %v1754, 0
      %v1802 = vsel %vm1534, %v1755, 0
      %v1805 = vsel %vm1583, %v1418, 0
      %1807 = vmatpush.bf16.msra.mxu0 0
      %1808 = vmatpush.bf16.msra.mxu0 0
      %1809 = vmatpush.bf16.msra.mxu0 0
      %1810 = vmatpush.bf16.msra.mxu0 0
      %1811 = vmatpush.bf16.msra.mxu0 0
      %1812 = vmatpush.bf16.msra.mxu0 0
      %1813 = vmatpush.bf16.msra.mxu0 0
      %1814 = vmatpush.bf16.msra.mxu0 %v1805
      %1815 = vmatmul.bf16.gmra.mxu0 %v1757
      %v1816 = vpop.f32.mrf.mxu0
      %v1817 = vadd.f32 %v1597, %v1816
      %v1818 = vpop.f32.mrf.mxu0
      %v1819 = vadd.f32 %v1599, %v1818
      %1820 = vmatmul.bf16.gmra.mxu0 %v1760
      %v1821 = vpop.f32.mrf.mxu0
      %v1822 = vadd.f32 %v1602, %v1821
      %v1823 = vpop.f32.mrf.mxu0
      %v1824 = vadd.f32 %v1604, %v1823
      %1825 = vmatmul.bf16.gmra.mxu0 %v1763
      %v1826 = vpop.f32.mrf.mxu0
      %v1827 = vadd.f32 %v1607, %v1826
      %v1828 = vpop.f32.mrf.mxu0
      %v1829 = vadd.f32 %v1609, %v1828
      %1830 = vmatmul.bf16.gmra.mxu0 %v1766
      %v1831 = vpop.f32.mrf.mxu0
      %v1832 = vadd.f32 %v1612, %v1831
      %v1833 = vpop.f32.mrf.mxu0
      %v1834 = vadd.f32 %v1614, %v1833
      %1835 = vmatmul.bf16.gmra.mxu0 %v1769
      %v1836 = vpop.f32.mrf.mxu0
      %v1837 = vadd.f32 %v1617, %v1836
      %v1838 = vpop.f32.mrf.mxu0
      %v1839 = vadd.f32 %v1619, %v1838
      %1840 = vmatmul.bf16.gmra.mxu0 %v1772
      %v1841 = vpop.f32.mrf.mxu0
      %v1842 = vadd.f32 %v1622, %v1841
      %v1843 = vpop.f32.mrf.mxu0
      %v1844 = vadd.f32 %v1624, %v1843
      %1845 = vmatmul.bf16.gmra.mxu0 %v1775
      %v1846 = vpop.f32.mrf.mxu0
      %v1847 = vadd.f32 %v1627, %v1846
      %v1848 = vpop.f32.mrf.mxu0
      %v1849 = vadd.f32 %v1629, %v1848
      %1850 = vmatmul.bf16.gmra.mxu0 %v1778
      %v1851 = vpop.f32.mrf.mxu0
      %v1852 = vadd.f32 %v1632, %v1851
      %v1853 = vpop.f32.mrf.mxu0
      %v1854 = vadd.f32 %v1634, %v1853
      %1855 = vmatmul.bf16.gmra.mxu0 %v1781
      %v1856 = vpop.f32.mrf.mxu0
      %v1857 = vadd.f32 %v1637, %v1856
      %v1858 = vpop.f32.mrf.mxu0
      %v1859 = vadd.f32 %v1639, %v1858
      %1860 = vmatmul.bf16.gmra.mxu0 %v1784
      %v1861 = vpop.f32.mrf.mxu0
      %v1862 = vadd.f32 %v1642, %v1861
      %v1863 = vpop.f32.mrf.mxu0
      %v1864 = vadd.f32 %v1644, %v1863
      %1865 = vmatmul.bf16.gmra.mxu0 %v1787
      %v1866 = vpop.f32.mrf.mxu0
      %v1867 = vadd.f32 %v1647, %v1866
      %v1868 = vpop.f32.mrf.mxu0
      %v1869 = vadd.f32 %v1649, %v1868
      %1870 = vmatmul.bf16.gmra.mxu0 %v1790
      %v1871 = vpop.f32.mrf.mxu0
      %v1872 = vadd.f32 %v1652, %v1871
      %v1873 = vpop.f32.mrf.mxu0
      %v1874 = vadd.f32 %v1654, %v1873
      %1875 = vmatmul.bf16.gmra.mxu0 %v1793
      %v1876 = vpop.f32.mrf.mxu0
      %v1877 = vadd.f32 %v1657, %v1876
      %v1878 = vpop.f32.mrf.mxu0
      %v1879 = vadd.f32 %v1659, %v1878
      %1880 = vmatmul.bf16.gmra.mxu0 %v1796
      %v1881 = vpop.f32.mrf.mxu0
      %v1882 = vadd.f32 %v1662, %v1881
      %v1883 = vpop.f32.mrf.mxu0
      %v1884 = vadd.f32 %v1664, %v1883
      %1885 = vmatmul.bf16.gmra.mxu0 %v1799
      %v1886 = vpop.f32.mrf.mxu0
      %v1887 = vadd.f32 %v1667, %v1886
      %v1888 = vpop.f32.mrf.mxu0
      %v1889 = vadd.f32 %v1669, %v1888
      %1890 = vmatmul.bf16.gmra.mxu0 %v1802
      %v1891 = vpop.f32.mrf.mxu0
      %v1892 = vadd.f32 %v1672, %v1891
      %v1893 = vpop.f32.mrf.mxu0
      %v1894 = vadd.f32 %v1674, %v1893
      %1895 = vdwg.mxu0
      %s1896 = scalar_lea.vmem [#allocation3], 16
      %v1897 = vld [vmem:[%s1896] sm:$0xf]
      %v1898 = vld [vmem:[%s1896 + $0x4] sm:$0xf]
      %v1899 = vld [vmem:[%s1896 + $0x8] sm:$0xf]
      %v1900 = vld [vmem:[%s1896 + $0xc] sm:$0xf]
      %v1901 = vld [vmem:[%s1896 + $0x10] sm:$0xf]
      %v1902 = vld [vmem:[%s1896 + $0x14] sm:$0xf]
      %v1903 = vld [vmem:[%s1896 + $0x18] sm:$0xf]
      %v1904 = vld [vmem:[%s1896 + $0x1c] sm:$0xf]
      %v1905 = vld [vmem:[%s1896 + $0x20] sm:$0xf]
      %v1906 = vld [vmem:[%s1896 + $0x24] sm:$0xf]
      %v1907 = vld [vmem:[%s1896 + $0x28] sm:$0xf]
      %v1908 = vld [vmem:[%s1896 + $0x2c] sm:$0xf]
      %v1909 = vld [vmem:[%s1896 + $0x30] sm:$0xf]
      %v1910 = vld [vmem:[%s1896 + $0x34] sm:$0xf]
      %v1911 = vld [vmem:[%s1896 + $0x38] sm:$0xf]
      %v1912 = vld [vmem:[%s1896 + $0x3c] sm:$0xf]
      %v1913 = vld [vmem:[%s1896 + $0x40] sm:$0xf]
      %v1914 = vld [vmem:[%s1896 + $0x44] sm:$0xf]
      %v1915 = vld [vmem:[%s1896 + $0x48] sm:$0xf]
      %v1916 = vld [vmem:[%s1896 + $0x4c] sm:$0xf]
      %v1917 = vld [vmem:[%s1896 + $0x50] sm:$0xf]
      %v1918 = vld [vmem:[%s1896 + $0x54] sm:$0xf]
      %v1919 = vld [vmem:[%s1896 + $0x58] sm:$0xf]
      %v1920 = vld [vmem:[%s1896 + $0x5c] sm:$0xf]
      %v1921 = vld [vmem:[%s1896 + $0x60] sm:$0xf]
      %v1922 = vld [vmem:[%s1896 + $0x64] sm:$0xf]
      %v1923 = vld [vmem:[%s1896 + $0x68] sm:$0xf]
      %v1924 = vld [vmem:[%s1896 + $0x6c] sm:$0xf]
      %v1925 = vld [vmem:[%s1896 + $0x70] sm:$0xf]
      %v1926 = vld [vmem:[%s1896 + $0x74] sm:$0xf]
      %v1927 = vld [vmem:[%s1896 + $0x78] sm:$0xf]
      %v1928 = vld [vmem:[%s1896 + $0x7c] sm:$0xf]
      %s1929 = scalar_lea.vmem %s4, 12
      %v1930 = vld [vmem:[%s1929] sm:$0x3]
      %v1963 = vunpack.c.l.b16 %v1897
      %v1964 = vunpack.c.l.b16 %v1898
      %v1965 = vunpack.c.l.b16 %v1899
      %v1966 = vunpack.c.l.b16 %v1900
      %v1967 = vunpack.c.l.b16 %v1901
      %v1968 = vunpack.c.l.b16 %v1902
      %v1969 = vunpack.c.l.b16 %v1903
      %v1970 = vunpack.c.l.b16 %v1904
      %v1971 = vunpack.c.l.b16 %v1905
      %v1972 = vunpack.c.l.b16 %v1906
      %v1973 = vunpack.c.l.b16 %v1907
      %v1974 = vunpack.c.l.b16 %v1908
      %v1975 = vunpack.c.l.b16 %v1909
      %v1976 = vunpack.c.l.b16 %v1910
      %v1977 = vunpack.c.l.b16 %v1911
      %v1978 = vunpack.c.l.b16 %v1912
      %v1979 = vunpack.c.l.b16 %v1913
      %v1980 = vunpack.c.l.b16 %v1914
      %v1981 = vunpack.c.l.b16 %v1915
      %v1982 = vunpack.c.l.b16 %v1916
      %v1983 = vunpack.c.l.b16 %v1917
      %v1984 = vunpack.c.l.b16 %v1918
      %v1985 = vunpack.c.l.b16 %v1919
      %v1986 = vunpack.c.l.b16 %v1920
      %v1987 = vunpack.c.l.b16 %v1921
      %v1988 = vunpack.c.l.b16 %v1922
      %v1989 = vunpack.c.l.b16 %v1923
      %v1990 = vunpack.c.l.b16 %v1924
      %v1991 = vunpack.c.l.b16 %v1925
      %v1992 = vunpack.c.l.b16 %v1926
      %v1993 = vunpack.c.l.b16 %v1927
      %v1994 = vunpack.c.l.b16 %v1928
      %v1995 = vpack.c.b16 %v1964, %v1963
      %v1996 = vpack.c.b16 %v1966, %v1965
      %v1997 = vpack.c.b16 %v1968, %v1967
      %v1998 = vpack.c.b16 %v1970, %v1969
      %v1999 = vpack.c.b16 %v1972, %v1971
      %v2000 = vpack.c.b16 %v1974, %v1973
      %v2001 = vpack.c.b16 %v1976, %v1975
      %v2002 = vpack.c.b16 %v1978, %v1977
      %v2003 = vpack.c.b16 %v1980, %v1979
      %v2004 = vpack.c.b16 %v1982, %v1981
      %v2005 = vpack.c.b16 %v1984, %v1983
      %v2006 = vpack.c.b16 %v1986, %v1985
      %v2007 = vpack.c.b16 %v1988, %v1987
      %v2008 = vpack.c.b16 %v1990, %v1989
      %v2009 = vpack.c.b16 %v1992, %v1991
      %v2010 = vpack.c.b16 %v1994, %v1993
      %v2012 = vsel %vm1534, %v1995, 0
      %v2015 = vsel %vm1534, %v1996, 0
      %v2018 = vsel %vm1534, %v1997, 0
      %v2021 = vsel %vm1534, %v1998, 0
      %v2024 = vsel %vm1534, %v1999, 0
      %v2027 = vsel %vm1534, %v2000, 0
      %v2030 = vsel %vm1534, %v2001, 0
      %v2033 = vsel %vm1534, %v2002, 0
      %v2036 = vsel %vm1534, %v2003, 0
      %v2039 = vsel %vm1534, %v2004, 0
      %v2042 = vsel %vm1534, %v2005, 0
      %v2045 = vsel %vm1534, %v2006, 0
      %v2048 = vsel %vm1534, %v2007, 0
      %v2051 = vsel %vm1534, %v2008, 0
      %v2054 = vsel %vm1534, %v2009, 0
      %v2057 = vsel %vm1534, %v2010, 0
      %v2060 = vsel %vm1583, %v1930, 0
      %2062 = vmatpush.bf16.msra.mxu0 0
      %2063 = vmatpush.bf16.msra.mxu0 0
      %2064 = vmatpush.bf16.msra.mxu0 0
      %2065 = vmatpush.bf16.msra.mxu0 0
      %2066 = vmatpush.bf16.msra.mxu0 0
      %2067 = vmatpush.bf16.msra.mxu0 0
      %2068 = vmatpush.bf16.msra.mxu0 0
      %2069 = vmatpush.bf16.msra.mxu0 %v2060
      %2070 = vmatmul.bf16.gmra.mxu0 %v2012
      %v2071 = vpop.f32.mrf.mxu0
      %v2072 = vadd.f32 0.0, %v2071
      %v2073 = vpop.f32.mrf.mxu0
      %v2074 = vadd.f32 0.0, %v2073
      %2075 = vmatmul.bf16.gmra.mxu0 %v2015
      %v2076 = vpop.f32.mrf.mxu0
      %v2077 = vadd.f32 0.0, %v2076
      %v2078 = vpop.f32.mrf.mxu0
      %v2079 = vadd.f32 0.0, %v2078
      %2080 = vmatmul.bf16.gmra.mxu0 %v2018
      %v2081 = vpop.f32.mrf.mxu0
      %v2082 = vadd.f32 0.0, %v2081
      %v2083 = vpop.f32.mrf.mxu0
      %v2084 = vadd.f32 0.0, %v2083
      %2085 = vmatmul.bf16.gmra.mxu0 %v2021
      %v2086 = vpop.f32.mrf.mxu0
      %v2087 = vadd.f32 0.0, %v2086
      %v2088 = vpop.f32.mrf.mxu0
      %v2089 = vadd.f32 0.0, %v2088
      %2090 = vmatmul.bf16.gmra.mxu0 %v2024
      %v2091 = vpop.f32.mrf.mxu0
      %v2092 = vadd.f32 0.0, %v2091
      %v2093 = vpop.f32.mrf.mxu0
      %v2094 = vadd.f32 0.0, %v2093
      %2095 = vmatmul.bf16.gmra.mxu0 %v2027
      %v2096 = vpop.f32.mrf.mxu0
      %v2097 = vadd.f32 0.0, %v2096
      %v2098 = vpop.f32.mrf.mxu0
      %v2099 = vadd.f32 0.0, %v2098
      %2100 = vmatmul.bf16.gmra.mxu0 %v2030
      %v2101 = vpop.f32.mrf.mxu0
      %v2102 = vadd.f32 0.0, %v2101
      %v2103 = vpop.f32.mrf.mxu0
      %v2104 = vadd.f32 0.0, %v2103
      %2105 = vmatmul.bf16.gmra.mxu0 %v2033
      %v2106 = vpop.f32.mrf.mxu0
      %v2107 = vadd.f32 0.0, %v2106
      %v2108 = vpop.f32.mrf.mxu0
      %v2109 = vadd.f32 0.0, %v2108
      %2110 = vmatmul.bf16.gmra.mxu0 %v2036
      %v2111 = vpop.f32.mrf.mxu0
      %v2112 = vadd.f32 0.0, %v2111
      %v2113 = vpop.f32.mrf.mxu0
      %v2114 = vadd.f32 0.0, %v2113
      %2115 = vmatmul.bf16.gmra.mxu0 %v2039
      %v2116 = vpop.f32.mrf.mxu0
      %v2117 = vadd.f32 0.0, %v2116
      %v2118 = vpop.f32.mrf.mxu0
      %v2119 = vadd.f32 0.0, %v2118
      %2120 = vmatmul.bf16.gmra.mxu0 %v2042
      %v2121 = vpop.f32.mrf.mxu0
      %v2122 = vadd.f32 0.0, %v2121
      %v2123 = vpop.f32.mrf.mxu0
      %v2124 = vadd.f32 0.0, %v2123
      %2125 = vmatmul.bf16.gmra.mxu0 %v2045
      %v2126 = vpop.f32.mrf.mxu0
      %v2127 = vadd.f32 0.0, %v2126
      %v2128 = vpop.f32.mrf.mxu0
      %v2129 = vadd.f32 0.0, %v2128
      %2130 = vmatmul.bf16.gmra.mxu0 %v2048
      %v2131 = vpop.f32.mrf.mxu0
      %v2132 = vadd.f32 0.0, %v2131
      %v2133 = vpop.f32.mrf.mxu0
      %v2134 = vadd.f32 0.0, %v2133
      %2135 = vmatmul.bf16.gmra.mxu0 %v2051
      %v2136 = vpop.f32.mrf.mxu0
      %v2137 = vadd.f32 0.0, %v2136
      %v2138 = vpop.f32.mrf.mxu0
      %v2139 = vadd.f32 0.0, %v2138
      %2140 = vmatmul.bf16.gmra.mxu0 %v2054
      %v2141 = vpop.f32.mrf.mxu0
      %v2142 = vadd.f32 0.0, %v2141
      %v2143 = vpop.f32.mrf.mxu0
      %v2144 = vadd.f32 0.0, %v2143
      %2145 = vmatmul.bf16.gmra.mxu0 %v2057
      %v2146 = vpop.f32.mrf.mxu0
      %v2147 = vadd.f32 0.0, %v2146
      %v2148 = vpop.f32.mrf.mxu0
      %v2149 = vadd.f32 0.0, %v2148
      %2150 = vdwg.mxu0
      %v2151 = vadd.f32 %v1817, %v2072
      %v2152 = vadd.f32 %v1819, %v2074
      %v2153 = vadd.f32 %v1822, %v2077
      %v2154 = vadd.f32 %v1824, %v2079
      %v2155 = vadd.f32 %v1827, %v2082
      %v2156 = vadd.f32 %v1829, %v2084
      %v2157 = vadd.f32 %v1832, %v2087
      %v2158 = vadd.f32 %v1834, %v2089
      %v2159 = vadd.f32 %v1837, %v2092
      %v2160 = vadd.f32 %v1839, %v2094
      %v2161 = vadd.f32 %v1842, %v2097
      %v2162 = vadd.f32 %v1844, %v2099
      %v2163 = vadd.f32 %v1847, %v2102
      %v2164 = vadd.f32 %v1849, %v2104
      %v2165 = vadd.f32 %v1852, %v2107
      %v2166 = vadd.f32 %v1854, %v2109
      %v2167 = vadd.f32 %v1857, %v2112
      %v2168 = vadd.f32 %v1859, %v2114
      %v2169 = vadd.f32 %v1862, %v2117
      %v2170 = vadd.f32 %v1864, %v2119
      %v2171 = vadd.f32 %v1867, %v2122
      %v2172 = vadd.f32 %v1869, %v2124
      %v2173 = vadd.f32 %v1872, %v2127
      %v2174 = vadd.f32 %v1874, %v2129
      %v2175 = vadd.f32 %v1877, %v2132
      %v2176 = vadd.f32 %v1879, %v2134
      %v2177 = vadd.f32 %v1882, %v2137
      %v2178 = vadd.f32 %v1884, %v2139
      %v2179 = vadd.f32 %v1887, %v2142
      %v2180 = vadd.f32 %v1889, %v2144
      %v2181 = vadd.f32 %v1892, %v2147
      %v2182 = vadd.f32 %v1894, %v2149
      %v2183 = vld [vmem:[#allocation2] sm:$0xf]
      %v2184 = vld [vmem:[#allocation2 + $0x4] sm:$0xf]
      %v2185 = vld [vmem:[#allocation2 + $0x8] sm:$0x1]
      %v2186 = vld [vmem:[#allocation2 + $0xc] sm:$0xf]
      %v2187 = vld [vmem:[#allocation2 + $0x10] sm:$0xf]
      %v2188 = vld [vmem:[#allocation2 + $0x14] sm:$0x1]
      %v2189 = vld [vmem:[#allocation2 + $0x18] sm:$0xf]
      %v2190 = vld [vmem:[#allocation2 + $0x1c] sm:$0xf]
      %v2191 = vld [vmem:[#allocation2 + $0x20] sm:$0x1]
      %v2192 = vld [vmem:[#allocation2 + $0x24] sm:$0xf]
      %v2193 = vld [vmem:[#allocation2 + $0x28] sm:$0xf]
      %v2194 = vld [vmem:[#allocation2 + $0x2c] sm:$0x1]
      %v2195 = vld [vmem:[#allocation2 + $0x30] sm:$0xf]
      %v2196 = vld [vmem:[#allocation2 + $0x34] sm:$0xf]
      %v2197 = vld [vmem:[#allocation2 + $0x38] sm:$0x1]
      %v2198 = vld [vmem:[#allocation2 + $0x3c] sm:$0xf]
      %v2199 = vld [vmem:[#allocation2 + $0x40] sm:$0xf]
      %v2200 = vld [vmem:[#allocation2 + $0x44] sm:$0x1]
      %v2201 = vld [vmem:[#allocation2 + $0x48] sm:$0xf]
      %v2202 = vld [vmem:[#allocation2 + $0x4c] sm:$0xf]
      %v2203 = vld [vmem:[#allocation2 + $0x50] sm:$0x1]
      %v2204 = vld [vmem:[#allocation2 + $0x54] sm:$0xf]
      %v2205 = vld [vmem:[#allocation2 + $0x58] sm:$0xf]
      %v2206 = vld [vmem:[#allocation2 + $0x5c] sm:$0x1]
      %v2207 = vld [vmem:[#allocation2 + $0x60] sm:$0xf]
      %v2208 = vld [vmem:[#allocation2 + $0x64] sm:$0xf]
      %v2209 = vld [vmem:[#allocation2 + $0x68] sm:$0x1]
      %v2210 = vld [vmem:[#allocation2 + $0x6c] sm:$0xf]
      %v2211 = vld [vmem:[#allocation2 + $0x70] sm:$0xf]
      %v2212 = vld [vmem:[#allocation2 + $0x74] sm:$0x1]
      %v2213 = vld [vmem:[#allocation2 + $0x78] sm:$0xf]
      %v2214 = vld [vmem:[#allocation2 + $0x7c] sm:$0xf]
      %v2215 = vld [vmem:[#allocation2 + $0x80] sm:$0x1]
      %v2216 = vld [vmem:[#allocation2 + $0x84] sm:$0xf]
      %v2217 = vld [vmem:[#allocation2 + $0x88] sm:$0xf]
      %v2218 = vld [vmem:[#allocation2 + $0x8c] sm:$0x1]
      %v2219 = vld [vmem:[#allocation2 + $0x90] sm:$0xf]
      %v2220 = vld [vmem:[#allocation2 + $0x94] sm:$0xf]
      %v2221 = vld [vmem:[#allocation2 + $0x98] sm:$0x1]
      %v2222 = vld [vmem:[#allocation2 + $0x9c] sm:$0xf]
      %v2223 = vld [vmem:[#allocation2 + $0xa0] sm:$0xf]
      %v2224 = vld [vmem:[#allocation2 + $0xa4] sm:$0x1]
      %v2225 = vld [vmem:[#allocation2 + $0xa8] sm:$0xf]
      %v2226 = vld [vmem:[#allocation2 + $0xac] sm:$0xf]
      %v2227 = vld [vmem:[#allocation2 + $0xb0] sm:$0x1]
      %v2228 = vld [vmem:[#allocation2 + $0xb4] sm:$0xf]
      %v2229 = vld [vmem:[#allocation2 + $0xb8] sm:$0xf]
      %v2230 = vld [vmem:[#allocation2 + $0xbc] sm:$0x1]
      %v2231 = vld [vmem:[#allocation2 + $0xc0] sm:$0xf]
      %v2232 = vld [vmem:[#allocation2 + $0xc4] sm:$0xf]
      %v2233 = vld [vmem:[#allocation2 + $0xc8] sm:$0x1]
      %v2234 = vld [vmem:[#allocation2 + $0xcc] sm:$0xf]
      %v2235 = vld [vmem:[#allocation2 + $0xd0] sm:$0xf]
      %v2236 = vld [vmem:[#allocation2 + $0xd4] sm:$0x1]
      %vm2237 = vsmask.f32 3328
      %vm2238 = vsmask.f32 7440
      %vm2239 = vmor %vm2237, %vm2238
      %v2241 = vshrl.u32 %v2183, 16
      %v2243 = vrot.slane %v2241, 4
      %v2244 = vshll.u32 %v2183, 16
      %v2246 = vrot.slane %v2244, 5
      %v2247 = vor.u32 %v2243, %v2246
      %v2248 = vrot.slane %v2247, 4
      %v2250 = vshll.u32 %v2184, 16
      %v2252 = vrot.slane %v2250, 5
      %v2253 = vsel %vm2239, %v2248, %v2252
      %v2254 = vshrl.u32 %v2184, 16
      %v2256 = vrot.slane %v2254, 4
      %v2257 = vor.u32 %v2256, %v2252
      %v2258 = vrot.slane %v2257, 4
      %v2260 = vshll.u32 %v2185, 16
      %v2262 = vrot.slane %v2260, 5
      %v2263 = vsel %vm2239, %v2258, %v2262
      %v2265 = vshrl.u32 %v2186, 16
      %v2267 = vrot.slane %v2265, 4
      %v2268 = vshll.u32 %v2186, 16
      %v2270 = vrot.slane %v2268, 5
      %v2271 = vor.u32 %v2267, %v2270
      %v2272 = vrot.slane %v2271, 4
      %v2274 = vshll.u32 %v2187, 16
      %v2276 = vrot.slane %v2274, 5
      %v2277 = vsel %vm2239, %v2272, %v2276
      %v2278 = vshrl.u32 %v2187, 16
      %v2280 = vrot.slane %v2278, 4
      %v2281 = vor.u32 %v2280, %v2276
      %v2282 = vrot.slane %v2281, 4
      %v2284 = vshll.u32 %v2188, 16
      %v2286 = vrot.slane %v2284, 5
      %v2287 = vsel %vm2239, %v2282, %v2286
      %v2289 = vshrl.u32 %v2189, 16
      %v2291 = vrot.slane %v2289, 4
      %v2292 = vshll.u32 %v2189, 16
      %v2294 = vrot.slane %v2292, 5
      %v2295 = vor.u32 %v2291, %v2294
      %v2296 = vrot.slane %v2295, 4
      %v2298 = vshll.u32 %v2190, 16
      %v2300 = vrot.slane %v2298, 5
      %v2301 = vsel %vm2239, %v2296, %v2300
      %v2302 = vshrl.u32 %v2190, 16
      %v2304 = vrot.slane %v2302, 4
      %v2305 = vor.u32 %v2304, %v2300
      %v2306 = vrot.slane %v2305, 4
      %v2308 = vshll.u32 %v2191, 16
      %v2310 = vrot.slane %v2308, 5
      %v2311 = vsel %vm2239, %v2306, %v2310
      %v2313 = vshrl.u32 %v2192, 16
      %v2315 = vrot.slane %v2313, 4
      %v2316 = vshll.u32 %v2192, 16
      %v2318 = vrot.slane %v2316, 5
      %v2319 = vor.u32 %v2315, %v2318
      %v2320 = vrot.slane %v2319, 4
      %v2322 = vshll.u32 %v2193, 16
      %v2324 = vrot.slane %v2322, 5
      %v2325 = vsel %vm2239, %v2320, %v2324
      %v2326 = vshrl.u32 %v2193, 16
      %v2328 = vrot.slane %v2326, 4
      %v2329 = vor.u32 %v2328, %v2324
      %v2330 = vrot.slane %v2329, 4
      %v2332 = vshll.u32 %v2194, 16
      %v2334 = vrot.slane %v2332, 5
      %v2335 = vsel %vm2239, %v2330, %v2334
      %v2337 = vshrl.u32 %v2195, 16
      %v2339 = vrot.slane %v2337, 4
      %v2340 = vshll.u32 %v2195, 16
      %v2342 = vrot.slane %v2340, 5
      %v2343 = vor.u32 %v2339, %v2342
      %v2344 = vrot.slane %v2343, 4
      %v2346 = vshll.u32 %v2196, 16
      %v2348 = vrot.slane %v2346, 5
      %v2349 = vsel %vm2239, %v2344, %v2348
      %v2350 = vshrl.u32 %v2196, 16
      %v2352 = vrot.slane %v2350, 4
      %v2353 = vor.u32 %v2352, %v2348
      %v2354 = vrot.slane %v2353, 4
      %v2356 = vshll.u32 %v2197, 16
      %v2358 = vrot.slane %v2356, 5
      %v2359 = vsel %vm2239, %v2354, %v2358
      %v2361 = vshrl.u32 %v2198, 16
      %v2363 = vrot.slane %v2361, 4
      %v2364 = vshll.u32 %v2198, 16
      %v2366 = vrot.slane %v2364, 5
      %v2367 = vor.u32 %v2363, %v2366
      %v2368 = vrot.slane %v2367, 4
      %v2370 = vshll.u32 %v2199, 16
      %v2372 = vrot.slane %v2370, 5
      %v2373 = vsel %vm2239, %v2368, %v2372
      %v2374 = vshrl.u32 %v2199, 16
      %v2376 = vrot.slane %v2374, 4
      %v2377 = vor.u32 %v2376, %v2372
      %v2378 = vrot.slane %v2377, 4
      %v2380 = vshll.u32 %v2200, 16
      %v2382 = vrot.slane %v2380, 5
      %v2383 = vsel %vm2239, %v2378, %v2382
      %v2385 = vshrl.u32 %v2201, 16
      %v2387 = vrot.slane %v2385, 4
      %v2388 = vshll.u32 %v2201, 16
      %v2390 = vrot.slane %v2388, 5
      %v2391 = vor.u32 %v2387, %v2390
      %v2392 = vrot.slane %v2391, 4
      %v2394 = vshll.u32 %v2202, 16
      %v2396 = vrot.slane %v2394, 5
      %v2397 = vsel %vm2239, %v2392, %v2396
      %v2398 = vshrl.u32 %v2202, 16
      %v2400 = vrot.slane %v2398, 4
      %v2401 = vor.u32 %v2400, %v2396
      %v2402 = vrot.slane %v2401, 4
      %v2404 = vshll.u32 %v2203, 16
      %v2406 = vrot.slane %v2404, 5
      %v2407 = vsel %vm2239, %v2402, %v2406
      %v2409 = vshrl.u32 %v2204, 16
      %v2411 = vrot.slane %v2409, 4
      %v2412 = vshll.u32 %v2204, 16
      %v2414 = vrot.slane %v2412, 5
      %v2415 = vor.u32 %v2411, %v2414
      %v2416 = vrot.slane %v2415, 4
      %v2418 = vshll.u32 %v2205, 16
      %v2420 = vrot.slane %v2418, 5
      %v2421 = vsel %vm2239, %v2416, %v2420
      %v2422 = vshrl.u32 %v2205, 16
      %v2424 = vrot.slane %v2422, 4
      %v2425 = vor.u32 %v2424, %v2420
      %v2426 = vrot.slane %v2425, 4
      %v2428 = vshll.u32 %v2206, 16
      %v2430 = vrot.slane %v2428, 5
      %v2431 = vsel %vm2239, %v2426, %v2430
      %v2433 = vshrl.u32 %v2207, 16
      %v2435 = vrot.slane %v2433, 4
      %v2436 = vshll.u32 %v2207, 16
      %v2438 = vrot.slane %v2436, 5
      %v2439 = vor.u32 %v2435, %v2438
      %v2440 = vrot.slane %v2439, 4
      %v2442 = vshll.u32 %v2208, 16
      %v2444 = vrot.slane %v2442, 5
      %v2445 = vsel %vm2239, %v2440, %v2444
      %v2446 = vshrl.u32 %v2208, 16
      %v2448 = vrot.slane %v2446, 4
      %v2449 = vor.u32 %v2448, %v2444
      %v2450 = vrot.slane %v2449, 4
      %v2452 = vshll.u32 %v2209, 16
      %v2454 = vrot.slane %v2452, 5
      %v2455 = vsel %vm2239, %v2450, %v2454
      %v2457 = vshrl.u32 %v2210, 16
      %v2459 = vrot.slane %v2457, 4
      %v2460 = vshll.u32 %v2210, 16
      %v2462 = vrot.slane %v2460, 5
      %v2463 = vor.u32 %v2459, %v2462
      %v2464 = vrot.slane %v2463, 4
      %v2466 = vshll.u32 %v2211, 16
      %v2468 = vrot.slane %v2466, 5
      %v2469 = vsel %vm2239, %v2464, %v2468
      %v2470 = vshrl.u32 %v2211, 16
      %v2472 = vrot.slane %v2470, 4
      %v2473 = vor.u32 %v2472, %v2468
      %v2474 = vrot.slane %v2473, 4
      %v2476 = vshll.u32 %v2212, 16
      %v2478 = vrot.slane %v2476, 5
      %v2479 = vsel %vm2239, %v2474, %v2478
      %v2481 = vshrl.u32 %v2213, 16
      %v2483 = vrot.slane %v2481, 4
      %v2484 = vshll.u32 %v2213, 16
      %v2486 = vrot.slane %v2484, 5
      %v2487 = vor.u32 %v2483, %v2486
      %v2488 = vrot.slane %v2487, 4
      %v2490 = vshll.u32 %v2214, 16
      %v2492 = vrot.slane %v2490, 5
      %v2493 = vsel %vm2239, %v2488, %v2492
      %v2494 = vshrl.u32 %v2214, 16
      %v2496 = vrot.slane %v2494, 4
      %v2497 = vor.u32 %v2496, %v2492
      %v2498 = vrot.slane %v2497, 4
      %v2500 = vshll.u32 %v2215, 16
      %v2502 = vrot.slane %v2500, 5
      %v2503 = vsel %vm2239, %v2498, %v2502
      %v2505 = vshrl.u32 %v2216, 16
      %v2507 = vrot.slane %v2505, 4
      %v2508 = vshll.u32 %v2216, 16
      %v2510 = vrot.slane %v2508, 5
      %v2511 = vor.u32 %v2507, %v2510
      %v2512 = vrot.slane %v2511, 4
      %v2514 = vshll.u32 %v2217, 16
      %v2516 = vrot.slane %v2514, 5
      %v2517 = vsel %vm2239, %v2512, %v2516
      %v2518 = vshrl.u32 %v2217, 16
      %v2520 = vrot.slane %v2518, 4
      %v2521 = vor.u32 %v2520, %v2516
      %v2522 = vrot.slane %v2521, 4
      %v2524 = vshll.u32 %v2218, 16
      %v2526 = vrot.slane %v2524, 5
      %v2527 = vsel %vm2239, %v2522, %v2526
      %v2529 = vshrl.u32 %v2219, 16
      %v2531 = vrot.slane %v2529, 4
      %v2532 = vshll.u32 %v2219, 16
      %v2534 = vrot.slane %v2532, 5
      %v2535 = vor.u32 %v2531, %v2534
      %v2536 = vrot.slane %v2535, 4
      %v2538 = vshll.u32 %v2220, 16
      %v2540 = vrot.slane %v2538, 5
      %v2541 = vsel %vm2239, %v2536, %v2540
      %v2542 = vshrl.u32 %v2220, 16
      %v2544 = vrot.slane %v2542, 4
      %v2545 = vor.u32 %v2544, %v2540
      %v2546 = vrot.slane %v2545, 4
      %v2548 = vshll.u32 %v2221, 16
      %v2550 = vrot.slane %v2548, 5
      %v2551 = vsel %vm2239, %v2546, %v2550
      %v2553 = vshrl.u32 %v2222, 16
      %v2555 = vrot.slane %v2553, 4
      %v2556 = vshll.u32 %v2222, 16
      %v2558 = vrot.slane %v2556, 5
      %v2559 = vor.u32 %v2555, %v2558
      %v2560 = vrot.slane %v2559, 4
      %v2562 = vshll.u32 %v2223, 16
      %v2564 = vrot.slane %v2562, 5
      %v2565 = vsel %vm2239, %v2560, %v2564
      %v2566 = vshrl.u32 %v2223, 16
      %v2568 = vrot.slane %v2566, 4
      %v2569 = vor.u32 %v2568, %v2564
      %v2570 = vrot.slane %v2569, 4
      %v2572 = vshll.u32 %v2224, 16
      %v2574 = vrot.slane %v2572, 5
      %v2575 = vsel %vm2239, %v2570, %v2574
      %v2577 = vshrl.u32 %v2225, 16
      %v2579 = vrot.slane %v2577, 4
      %v2580 = vshll.u32 %v2225, 16
      %v2582 = vrot.slane %v2580, 5
      %v2583 = vor.u32 %v2579, %v2582
      %v2584 = vrot.slane %v2583, 4
      %v2586 = vshll.u32 %v2226, 16
      %v2588 = vrot.slane %v2586, 5
      %v2589 = vsel %vm2239, %v2584, %v2588
      %v2590 = vshrl.u32 %v2226, 16
      %v2592 = vrot.slane %v2590, 4
      %v2593 = vor.u32 %v2592, %v2588
      %v2594 = vrot.slane %v2593, 4
      %v2596 = vshll.u32 %v2227, 16
      %v2598 = vrot.slane %v2596, 5
      %v2599 = vsel %vm2239, %v2594, %v2598
      %v2601 = vshrl.u32 %v2228, 16
      %v2603 = vrot.slane %v2601, 4
      %v2604 = vshll.u32 %v2228, 16
      %v2606 = vrot.slane %v2604, 5
      %v2607 = vor.u32 %v2603, %v2606
      %v2608 = vrot.slane %v2607, 4
      %v2610 = vshll.u32 %v2229, 16
      %v2612 = vrot.slane %v2610, 5
      %v2613 = vsel %vm2239, %v2608, %v2612
      %v2614 = vshrl.u32 %v2229, 16
      %v2616 = vrot.slane %v2614, 4
      %v2617 = vor.u32 %v2616, %v2612
      %v2618 = vrot.slane %v2617, 4
      %v2620 = vshll.u32 %v2230, 16
      %v2622 = vrot.slane %v2620, 5
      %v2623 = vsel %vm2239, %v2618, %v2622
      %v2625 = vshrl.u32 %v2231, 16
      %v2627 = vrot.slane %v2625, 4
      %v2628 = vshll.u32 %v2231, 16
      %v2630 = vrot.slane %v2628, 5
      %v2631 = vor.u32 %v2627, %v2630
      %v2632 = vrot.slane %v2631, 4
      %v2634 = vshll.u32 %v2232, 16
      %v2636 = vrot.slane %v2634, 5
      %v2637 = vsel %vm2239, %v2632, %v2636
      %v2638 = vshrl.u32 %v2232, 16
      %v2640 = vrot.slane %v2638, 4
      %v2641 = vor.u32 %v2640, %v2636
      %v2642 = vrot.slane %v2641, 4
      %v2644 = vshll.u32 %v2233, 16
      %v2646 = vrot.slane %v2644, 5
      %v2647 = vsel %vm2239, %v2642, %v2646
      %v2649 = vshrl.u32 %v2234, 16
      %v2651 = vrot.slane %v2649, 4
      %v2652 = vshll.u32 %v2234, 16
      %v2654 = vrot.slane %v2652, 5
      %v2655 = vor.u32 %v2651, %v2654
      %v2656 = vrot.slane %v2655, 4
      %v2658 = vshll.u32 %v2235, 16
      %v2660 = vrot.slane %v2658, 5
      %v2661 = vsel %vm2239, %v2656, %v2660
      %v2662 = vshrl.u32 %v2235, 16
      %v2664 = vrot.slane %v2662, 4
      %v2665 = vor.u32 %v2664, %v2660
      %v2666 = vrot.slane %v2665, 4
      %v2668 = vshll.u32 %v2236, 16
      %v2670 = vrot.slane %v2668, 5
      %v2671 = vsel %vm2239, %v2666, %v2670
      %2708 = vst.msk [vmem:[#allocation3] sm:$0xf] %vm723, %v2253
      %2709 = vst.msk [vmem:[#allocation3 + $0x4] sm:$0xf] %vm723, %v2263
      %2710 = vst.msk [vmem:[#allocation3 + $0x8] sm:$0xf] %vm723, %v2277
      %2711 = vst.msk [vmem:[#allocation3 + $0xc] sm:$0xf] %vm723, %v2287
      %2712 = vst.msk [vmem:[#allocation3 + $0x10] sm:$0xf] %vm723, %v2301
      %2713 = vst.msk [vmem:[#allocation3 + $0x14] sm:$0xf] %vm723, %v2311
      %2714 = vst.msk [vmem:[#allocation3 + $0x18] sm:$0xf] %vm723, %v2325
      %2715 = vst.msk [vmem:[#allocation3 + $0x1c] sm:$0xf] %vm723, %v2335
      %2716 = vst.msk [vmem:[#allocation3 + $0x20] sm:$0xf] %vm723, %v2349
      %2717 = vst.msk [vmem:[#allocation3 + $0x24] sm:$0xf] %vm723, %v2359
      %2718 = vst.msk [vmem:[#allocation3 + $0x28] sm:$0xf] %vm723, %v2373
      %2719 = vst.msk [vmem:[#allocation3 + $0x2c] sm:$0xf] %vm723, %v2383
      %2720 = vst.msk [vmem:[#allocation3 + $0x30] sm:$0xf] %vm723, %v2397
      %2721 = vst.msk [vmem:[#allocation3 + $0x34] sm:$0xf] %vm723, %v2407
      %2722 = vst.msk [vmem:[#allocation3 + $0x38] sm:$0xf] %vm723, %v2421
      %2723 = vst.msk [vmem:[#allocation3 + $0x3c] sm:$0xf] %vm723, %v2431
      %2724 = vst.msk [vmem:[#allocation3 + $0x40] sm:$0xf] %vm723, %v2445
      %2725 = vst.msk [vmem:[#allocation3 + $0x44] sm:$0xf] %vm723, %v2455
      %2726 = vst.msk [vmem:[#allocation3 + $0x48] sm:$0xf] %vm723, %v2469
      %2727 = vst.msk [vmem:[#allocation3 + $0x4c] sm:$0xf] %vm723, %v2479
      %2728 = vst.msk [vmem:[#allocation3 + $0x50] sm:$0xf] %vm723, %v2493
      %2729 = vst.msk [vmem:[#allocation3 + $0x54] sm:$0xf] %vm723, %v2503
      %2730 = vst.msk [vmem:[#allocation3 + $0x58] sm:$0xf] %vm723, %v2517
      %2731 = vst.msk [vmem:[#allocation3 + $0x5c] sm:$0xf] %vm723, %v2527
      %2732 = vst.msk [vmem:[#allocation3 + $0x60] sm:$0xf] %vm723, %v2541
      %2733 = vst.msk [vmem:[#allocation3 + $0x64] sm:$0xf] %vm723, %v2551
      %2734 = vst.msk [vmem:[#allocation3 + $0x68] sm:$0xf] %vm723, %v2565
      %2735 = vst.msk [vmem:[#allocation3 + $0x6c] sm:$0xf] %vm723, %v2575
      %2736 = vst.msk [vmem:[#allocation3 + $0x70] sm:$0xf] %vm723, %v2589
      %2737 = vst.msk [vmem:[#allocation3 + $0x74] sm:$0xf] %vm723, %v2599
      %2738 = vst.msk [vmem:[#allocation3 + $0x78] sm:$0xf] %vm723, %v2613
      %2739 = vst.msk [vmem:[#allocation3 + $0x7c] sm:$0xf] %vm723, %v2623
      %2740 = vst.msk [vmem:[#allocation3 + $0x80] sm:$0xf] %vm723, %v2637
      %2741 = vst.msk [vmem:[#allocation3 + $0x84] sm:$0xf] %vm723, %v2647
      %2742 = vst.msk [vmem:[#allocation3 + $0x88] sm:$0xf] %vm723, %v2661
      %2743 = vst.msk [vmem:[#allocation3 + $0x8c] sm:$0xf] %vm723, %v2671
      %v2744 = vld [vmem:[#allocation3] sm:$0xf]
      %v2745 = vld [vmem:[#allocation3 + $0x4] sm:$0xf]
      %v2746 = vld [vmem:[#allocation3 + $0x8] sm:$0xf]
      %v2747 = vld [vmem:[#allocation3 + $0xc] sm:$0xf]
      %v2748 = vld [vmem:[#allocation3 + $0x10] sm:$0xf]
      %v2749 = vld [vmem:[#allocation3 + $0x14] sm:$0xf]
      %v2750 = vld [vmem:[#allocation3 + $0x18] sm:$0xf]
      %v2751 = vld [vmem:[#allocation3 + $0x1c] sm:$0xf]
      %v2752 = vld [vmem:[#allocation3 + $0x20] sm:$0xf]
      %v2753 = vld [vmem:[#allocation3 + $0x24] sm:$0xf]
      %v2754 = vld [vmem:[#allocation3 + $0x28] sm:$0xf]
      %v2755 = vld [vmem:[#allocation3 + $0x2c] sm:$0xf]
      %v2756 = vld [vmem:[#allocation3 + $0x30] sm:$0xf]
      %v2757 = vld [vmem:[#allocation3 + $0x34] sm:$0xf]
      %v2758 = vld [vmem:[#allocation3 + $0x38] sm:$0xf]
      %v2759 = vld [vmem:[#allocation3 + $0x3c] sm:$0xf]
      %v2760 = vld [vmem:[#allocation3 + $0x40] sm:$0xf]
      %v2761 = vld [vmem:[#allocation3 + $0x44] sm:$0xf]
      %v2762 = vld [vmem:[#allocation3 + $0x48] sm:$0xf]
      %v2763 = vld [vmem:[#allocation3 + $0x4c] sm:$0xf]
      %v2764 = vld [vmem:[#allocation3 + $0x50] sm:$0xf]
      %v2765 = vld [vmem:[#allocation3 + $0x54] sm:$0xf]
      %v2766 = vld [vmem:[#allocation3 + $0x58] sm:$0xf]
      %v2767 = vld [vmem:[#allocation3 + $0x5c] sm:$0xf]
      %v2768 = vld [vmem:[#allocation3 + $0x60] sm:$0xf]
      %v2769 = vld [vmem:[#allocation3 + $0x64] sm:$0xf]
      %v2770 = vld [vmem:[#allocation3 + $0x68] sm:$0xf]
      %v2771 = vld [vmem:[#allocation3 + $0x6c] sm:$0xf]
      %v2772 = vld [vmem:[#allocation3 + $0x70] sm:$0xf]
      %v2773 = vld [vmem:[#allocation3 + $0x74] sm:$0xf]
      %v2774 = vld [vmem:[#allocation3 + $0x78] sm:$0xf]
      %v2775 = vld [vmem:[#allocation3 + $0x7c] sm:$0xf]
      %s2776 = scalar_lea.vmem %s4, 2
      %v2777 = vld [vmem:[%s2776] sm:$0x3]
      %v2810 = vunpack.c.l.b16 %v2744
      %v2811 = vunpack.c.l.b16 %v2745
      %v2812 = vunpack.c.l.b16 %v2746
      %v2813 = vunpack.c.l.b16 %v2747
      %v2814 = vunpack.c.l.b16 %v2748
      %v2815 = vunpack.c.l.b16 %v2749
      %v2816 = vunpack.c.l.b16 %v2750
      %v2817 = vunpack.c.l.b16 %v2751
      %v2818 = vunpack.c.l.b16 %v2752
      %v2819 = vunpack.c.l.b16 %v2753
      %v2820 = vunpack.c.l.b16 %v2754
      %v2821 = vunpack.c.l.b16 %v2755
      %v2822 = vunpack.c.l.b16 %v2756
      %v2823 = vunpack.c.l.b16 %v2757
      %v2824 = vunpack.c.l.b16 %v2758
      %v2825 = vunpack.c.l.b16 %v2759
      %v2826 = vunpack.c.l.b16 %v2760
      %v2827 = vunpack.c.l.b16 %v2761
      %v2828 = vunpack.c.l.b16 %v2762
      %v2829 = vunpack.c.l.b16 %v2763
      %v2830 = vunpack.c.l.b16 %v2764
      %v2831 = vunpack.c.l.b16 %v2765
      %v2832 = vunpack.c.l.b16 %v2766
      %v2833 = vunpack.c.l.b16 %v2767
      %v2834 = vunpack.c.l.b16 %v2768
      %v2835 = vunpack.c.l.b16 %v2769
      %v2836 = vunpack.c.l.b16 %v2770
      %v2837 = vunpack.c.l.b16 %v2771
      %v2838 = vunpack.c.l.b16 %v2772
      %v2839 = vunpack.c.l.b16 %v2773
      %v2840 = vunpack.c.l.b16 %v2774
      %v2841 = vunpack.c.l.b16 %v2775
      %v2842 = vpack.c.b16 %v2811, %v2810
      %v2843 = vpack.c.b16 %v2813, %v2812
      %v2844 = vpack.c.b16 %v2815, %v2814
      %v2845 = vpack.c.b16 %v2817, %v2816
      %v2846 = vpack.c.b16 %v2819, %v2818
      %v2847 = vpack.c.b16 %v2821, %v2820
      %v2848 = vpack.c.b16 %v2823, %v2822
      %v2849 = vpack.c.b16 %v2825, %v2824
      %v2850 = vpack.c.b16 %v2827, %v2826
      %v2851 = vpack.c.b16 %v2829, %v2828
      %v2852 = vpack.c.b16 %v2831, %v2830
      %v2853 = vpack.c.b16 %v2833, %v2832
      %v2854 = vpack.c.b16 %v2835, %v2834
      %v2855 = vpack.c.b16 %v2837, %v2836
      %v2856 = vpack.c.b16 %v2839, %v2838
      %v2857 = vpack.c.b16 %v2841, %v2840
      %v2859 = vsel %vm1534, %v2842, 0
      %v2862 = vsel %vm1534, %v2843, 0
      %v2865 = vsel %vm1534, %v2844, 0
      %v2868 = vsel %vm1534, %v2845, 0
      %v2871 = vsel %vm1534, %v2846, 0
      %v2874 = vsel %vm1534, %v2847, 0
      %v2877 = vsel %vm1534, %v2848, 0
      %v2880 = vsel %vm1534, %v2849, 0
      %v2883 = vsel %vm1534, %v2850, 0
      %v2886 = vsel %vm1534, %v2851, 0
      %v2889 = vsel %vm1534, %v2852, 0
      %v2892 = vsel %vm1534, %v2853, 0
      %v2895 = vsel %vm1534, %v2854, 0
      %v2898 = vsel %vm1534, %v2855, 0
      %v2901 = vsel %vm1534, %v2856, 0
      %v2904 = vsel %vm1534, %v2857, 0
      %v2907 = vsel %vm1583, %v2777, 0
      %2909 = vmatpush.bf16.msra.mxu0 0
      %2910 = vmatpush.bf16.msra.mxu0 0
      %2911 = vmatpush.bf16.msra.mxu0 0
      %2912 = vmatpush.bf16.msra.mxu0 0
      %2913 = vmatpush.bf16.msra.mxu0 0
      %2914 = vmatpush.bf16.msra.mxu0 0
      %2915 = vmatpush.bf16.msra.mxu0 0
      %2916 = vmatpush.bf16.msra.mxu0 %v2907
      %2917 = vmatmul.bf16.gmra.mxu0 %v2859
      %v2918 = vpop.f32.mrf.mxu0
      %v2919 = vadd.f32 0.0, %v2918
      %v2920 = vpop.f32.mrf.mxu0
      %v2921 = vadd.f32 0.0, %v2920
      %2922 = vmatmul.bf16.gmra.mxu0 %v2862
      %v2923 = vpop.f32.mrf.mxu0
      %v2924 = vadd.f32 0.0, %v2923
      %v2925 = vpop.f32.mrf.mxu0
      %v2926 = vadd.f32 0.0, %v2925
      %2927 = vmatmul.bf16.gmra.mxu0 %v2865
      %v2928 = vpop.f32.mrf.mxu0
      %v2929 = vadd.f32 0.0, %v2928
      %v2930 = vpop.f32.mrf.mxu0
      %v2931 = vadd.f32 0.0, %v2930
      %2932 = vmatmul.bf16.gmra.mxu0 %v2868
      %v2933 = vpop.f32.mrf.mxu0
      %v2934 = vadd.f32 0.0, %v2933
      %v2935 = vpop.f32.mrf.mxu0
      %v2936 = vadd.f32 0.0, %v2935
      %2937 = vmatmul.bf16.gmra.mxu0 %v2871
      %v2938 = vpop.f32.mrf.mxu0
      %v2939 = vadd.f32 0.0, %v2938
      %v2940 = vpop.f32.mrf.mxu0
      %v2941 = vadd.f32 0.0, %v2940
      %2942 = vmatmul.bf16.gmra.mxu0 %v2874
      %v2943 = vpop.f32.mrf.mxu0
      %v2944 = vadd.f32 0.0, %v2943
      %v2945 = vpop.f32.mrf.mxu0
      %v2946 = vadd.f32 0.0, %v2945
      %2947 = vmatmul.bf16.gmra.mxu0 %v2877
      %v2948 = vpop.f32.mrf.mxu0
      %v2949 = vadd.f32 0.0, %v2948
      %v2950 = vpop.f32.mrf.mxu0
      %v2951 = vadd.f32 0.0, %v2950
      %2952 = vmatmul.bf16.gmra.mxu0 %v2880
      %v2953 = vpop.f32.mrf.mxu0
      %v2954 = vadd.f32 0.0, %v2953
      %v2955 = vpop.f32.mrf.mxu0
      %v2956 = vadd.f32 0.0, %v2955
      %2957 = vmatmul.bf16.gmra.mxu0 %v2883
      %v2958 = vpop.f32.mrf.mxu0
      %v2959 = vadd.f32 0.0, %v2958
      %v2960 = vpop.f32.mrf.mxu0
      %v2961 = vadd.f32 0.0, %v2960
      %2962 = vmatmul.bf16.gmra.mxu0 %v2886
      %v2963 = vpop.f32.mrf.mxu0
      %v2964 = vadd.f32 0.0, %v2963
      %v2965 = vpop.f32.mrf.mxu0
      %v2966 = vadd.f32 0.0, %v2965
      %2967 = vmatmul.bf16.gmra.mxu0 %v2889
      %v2968 = vpop.f32.mrf.mxu0
      %v2969 = vadd.f32 0.0, %v2968
      %v2970 = vpop.f32.mrf.mxu0
      %v2971 = vadd.f32 0.0, %v2970
      %2972 = vmatmul.bf16.gmra.mxu0 %v2892
      %v2973 = vpop.f32.mrf.mxu0
      %v2974 = vadd.f32 0.0, %v2973
      %v2975 = vpop.f32.mrf.mxu0
      %v2976 = vadd.f32 0.0, %v2975
      %2977 = vmatmul.bf16.gmra.mxu0 %v2895
      %v2978 = vpop.f32.mrf.mxu0
      %v2979 = vadd.f32 0.0, %v2978
      %v2980 = vpop.f32.mrf.mxu0
      %v2981 = vadd.f32 0.0, %v2980
      %2982 = vmatmul.bf16.gmra.mxu0 %v2898
      %v2983 = vpop.f32.mrf.mxu0
      %v2984 = vadd.f32 0.0, %v2983
      %v2985 = vpop.f32.mrf.mxu0
      %v2986 = vadd.f32 0.0, %v2985
      %2987 = vmatmul.bf16.gmra.mxu0 %v2901
      %v2988 = vpop.f32.mrf.mxu0
      %v2989 = vadd.f32 0.0, %v2988
      %v2990 = vpop.f32.mrf.mxu0
      %v2991 = vadd.f32 0.0, %v2990
      %2992 = vmatmul.bf16.gmra.mxu0 %v2904
      %v2993 = vpop.f32.mrf.mxu0
      %v2994 = vadd.f32 0.0, %v2993
      %v2995 = vpop.f32.mrf.mxu0
      %v2996 = vadd.f32 0.0, %v2995
      %2997 = vdwg.mxu0
      %v2998 = vadd.f32 %v2151, %v2919
      %v2999 = vadd.f32 %v2152, %v2921
      %v3000 = vadd.f32 %v2153, %v2924
      %v3001 = vadd.f32 %v2154, %v2926
      %v3002 = vadd.f32 %v2155, %v2929
      %v3003 = vadd.f32 %v2156, %v2931
      %v3004 = vadd.f32 %v2157, %v2934
      %v3005 = vadd.f32 %v2158, %v2936
      %v3006 = vadd.f32 %v2159, %v2939
      %v3007 = vadd.f32 %v2160, %v2941
      %v3008 = vadd.f32 %v2161, %v2944
      %v3009 = vadd.f32 %v2162, %v2946
      %v3010 = vadd.f32 %v2163, %v2949
      %v3011 = vadd.f32 %v2164, %v2951
      %v3012 = vadd.f32 %v2165, %v2954
      %v3013 = vadd.f32 %v2166, %v2956
      %v3014 = vadd.f32 %v2167, %v2959
      %v3015 = vadd.f32 %v2168, %v2961
      %v3016 = vadd.f32 %v2169, %v2964
      %v3017 = vadd.f32 %v2170, %v2966
      %v3018 = vadd.f32 %v2171, %v2969
      %v3019 = vadd.f32 %v2172, %v2971
      %v3020 = vadd.f32 %v2173, %v2974
      %v3021 = vadd.f32 %v2174, %v2976
      %v3022 = vadd.f32 %v2175, %v2979
      %v3023 = vadd.f32 %v2176, %v2981
      %v3024 = vadd.f32 %v2177, %v2984
      %v3025 = vadd.f32 %v2178, %v2986
      %v3026 = vadd.f32 %v2179, %v2989
      %v3027 = vadd.f32 %v2180, %v2991
      %v3028 = vadd.f32 %v2181, %v2994
      %v3029 = vadd.f32 %v2182, %v2996
      %v3030 = vld [vmem:[%s1419] sm:$0xf]
      %v3031 = vld [vmem:[%s1419 + $0x4] sm:$0xf]
      %v3032 = vld [vmem:[%s1419 + $0x8] sm:$0xf]
      %v3033 = vld [vmem:[%s1419 + $0xc] sm:$0xf]
      %v3034 = vld [vmem:[%s1419 + $0x10] sm:$0xf]
      %v3035 = vld [vmem:[%s1419 + $0x14] sm:$0xf]
      %v3036 = vld [vmem:[%s1419 + $0x18] sm:$0xf]
      %v3037 = vld [vmem:[%s1419 + $0x1c] sm:$0xf]
      %v3038 = vld [vmem:[%s1419 + $0x20] sm:$0xf]
      %v3039 = vld [vmem:[%s1419 + $0x24] sm:$0xf]
      %v3040 = vld [vmem:[%s1419 + $0x28] sm:$0xf]
      %v3041 = vld [vmem:[%s1419 + $0x2c] sm:$0xf]
      %v3042 = vld [vmem:[%s1419 + $0x30] sm:$0xf]
      %v3043 = vld [vmem:[%s1419 + $0x34] sm:$0xf]
      %v3044 = vld [vmem:[%s1419 + $0x38] sm:$0xf]
      %v3045 = vld [vmem:[%s1419 + $0x3c] sm:$0xf]
      %v3046 = vld [vmem:[%s1419 + $0x40] sm:$0xf]
      %v3047 = vld [vmem:[%s1419 + $0x44] sm:$0xf]
      %v3048 = vld [vmem:[%s1419 + $0x48] sm:$0xf]
      %v3049 = vld [vmem:[%s1419 + $0x4c] sm:$0xf]
      %v3050 = vld [vmem:[%s1419 + $0x50] sm:$0xf]
      %v3051 = vld [vmem:[%s1419 + $0x54] sm:$0xf]
      %v3052 = vld [vmem:[%s1419 + $0x58] sm:$0xf]
      %v3053 = vld [vmem:[%s1419 + $0x5c] sm:$0xf]
      %v3054 = vld [vmem:[%s1419 + $0x60] sm:$0xf]
      %v3055 = vld [vmem:[%s1419 + $0x64] sm:$0xf]
      %v3056 = vld [vmem:[%s1419 + $0x68] sm:$0xf]
      %v3057 = vld [vmem:[%s1419 + $0x6c] sm:$0xf]
      %v3058 = vld [vmem:[%s1419 + $0x70] sm:$0xf]
      %v3059 = vld [vmem:[%s1419 + $0x74] sm:$0xf]
      %v3060 = vld [vmem:[%s1419 + $0x78] sm:$0xf]
      %v3061 = vld [vmem:[%s1419 + $0x7c] sm:$0xf]
      %s3062 = scalar_lea.vmem %s4, 8
      %v3063 = vld [vmem:[%s3062] sm:$0x3]
      %v3096 = vunpack.c.l.b16 %v3030
      %v3097 = vunpack.c.l.b16 %v3031
      %v3098 = vunpack.c.l.b16 %v3032
      %v3099 = vunpack.c.l.b16 %v3033
      %v3100 = vunpack.c.l.b16 %v3034
      %v3101 = vunpack.c.l.b16 %v3035
      %v3102 = vunpack.c.l.b16 %v3036
      %v3103 = vunpack.c.l.b16 %v3037
      %v3104 = vunpack.c.l.b16 %v3038
      %v3105 = vunpack.c.l.b16 %v3039
      %v3106 = vunpack.c.l.b16 %v3040
      %v3107 = vunpack.c.l.b16 %v3041
      %v3108 = vunpack.c.l.b16 %v3042
      %v3109 = vunpack.c.l.b16 %v3043
      %v3110 = vunpack.c.l.b16 %v3044
      %v3111 = vunpack.c.l.b16 %v3045
      %v3112 = vunpack.c.l.b16 %v3046
      %v3113 = vunpack.c.l.b16 %v3047
      %v3114 = vunpack.c.l.b16 %v3048
      %v3115 = vunpack.c.l.b16 %v3049
      %v3116 = vunpack.c.l.b16 %v3050
      %v3117 = vunpack.c.l.b16 %v3051
      %v3118 = vunpack.c.l.b16 %v3052
      %v3119 = vunpack.c.l.b16 %v3053
      %v3120 = vunpack.c.l.b16 %v3054
      %v3121 = vunpack.c.l.b16 %v3055
      %v3122 = vunpack.c.l.b16 %v3056
      %v3123 = vunpack.c.l.b16 %v3057
      %v3124 = vunpack.c.l.b16 %v3058
      %v3125 = vunpack.c.l.b16 %v3059
      %v3126 = vunpack.c.l.b16 %v3060
      %v3127 = vunpack.c.l.b16 %v3061
      %v3128 = vpack.c.b16 %v3097, %v3096
      %v3129 = vpack.c.b16 %v3099, %v3098
      %v3130 = vpack.c.b16 %v3101, %v3100
      %v3131 = vpack.c.b16 %v3103, %v3102
      %v3132 = vpack.c.b16 %v3105, %v3104
      %v3133 = vpack.c.b16 %v3107, %v3106
      %v3134 = vpack.c.b16 %v3109, %v3108
      %v3135 = vpack.c.b16 %v3111, %v3110
      %v3136 = vpack.c.b16 %v3113, %v3112
      %v3137 = vpack.c.b16 %v3115, %v3114
      %v3138 = vpack.c.b16 %v3117, %v3116
      %v3139 = vpack.c.b16 %v3119, %v3118
      %v3140 = vpack.c.b16 %v3121, %v3120
      %v3141 = vpack.c.b16 %v3123, %v3122
      %v3142 = vpack.c.b16 %v3125, %v3124
      %v3143 = vpack.c.b16 %v3127, %v3126
      %v3145 = vsel %vm1534, %v3128, 0
      %v3148 = vsel %vm1534, %v3129, 0
      %v3151 = vsel %vm1534, %v3130, 0
      %v3154 = vsel %vm1534, %v3131, 0
      %v3157 = vsel %vm1534, %v3132, 0
      %v3160 = vsel %vm1534, %v3133, 0
      %v3163 = vsel %vm1534, %v3134, 0
      %v3166 = vsel %vm1534, %v3135, 0
      %v3169 = vsel %vm1534, %v3136, 0
      %v3172 = vsel %vm1534, %v3137, 0
      %v3175 = vsel %vm1534, %v3138, 0
      %v3178 = vsel %vm1534, %v3139, 0
      %v3181 = vsel %vm1534, %v3140, 0
      %v3184 = vsel %vm1534, %v3141, 0
      %v3187 = vsel %vm1534, %v3142, 0
      %v3190 = vsel %vm1534, %v3143, 0
      %v3193 = vsel %vm1583, %v3063, 0
      %3195 = vmatpush.bf16.msra.mxu0 0
      %3196 = vmatpush.bf16.msra.mxu0 0
      %3197 = vmatpush.bf16.msra.mxu0 0
      %3198 = vmatpush.bf16.msra.mxu0 0
      %3199 = vmatpush.bf16.msra.mxu0 0
      %3200 = vmatpush.bf16.msra.mxu0 0
      %3201 = vmatpush.bf16.msra.mxu0 0
      %3202 = vmatpush.bf16.msra.mxu0 %v3193
      %3203 = vmatmul.bf16.gmra.mxu0 %v3145
      %v3204 = vpop.f32.mrf.mxu0
      %v3205 = vadd.f32 0.0, %v3204
      %v3206 = vpop.f32.mrf.mxu0
      %v3207 = vadd.f32 0.0, %v3206
      %3208 = vmatmul.bf16.gmra.mxu0 %v3148
      %v3209 = vpop.f32.mrf.mxu0
      %v3210 = vadd.f32 0.0, %v3209
      %v3211 = vpop.f32.mrf.mxu0
      %v3212 = vadd.f32 0.0, %v3211
      %3213 = vmatmul.bf16.gmra.mxu0 %v3151
      %v3214 = vpop.f32.mrf.mxu0
      %v3215 = vadd.f32 0.0, %v3214
      %v3216 = vpop.f32.mrf.mxu0
      %v3217 = vadd.f32 0.0, %v3216
      %3218 = vmatmul.bf16.gmra.mxu0 %v3154
      %v3219 = vpop.f32.mrf.mxu0
      %v3220 = vadd.f32 0.0, %v3219
      %v3221 = vpop.f32.mrf.mxu0
      %v3222 = vadd.f32 0.0, %v3221
      %3223 = vmatmul.bf16.gmra.mxu0 %v3157
      %v3224 = vpop.f32.mrf.mxu0
      %v3225 = vadd.f32 0.0, %v3224
      %v3226 = vpop.f32.mrf.mxu0
      %v3227 = vadd.f32 0.0, %v3226
      %3228 = vmatmul.bf16.gmra.mxu0 %v3160
      %v3229 = vpop.f32.mrf.mxu0
      %v3230 = vadd.f32 0.0, %v3229
      %v3231 = vpop.f32.mrf.mxu0
      %v3232 = vadd.f32 0.0, %v3231
      %3233 = vmatmul.bf16.gmra.mxu0 %v3163
      %v3234 = vpop.f32.mrf.mxu0
      %v3235 = vadd.f32 0.0, %v3234
      %v3236 = vpop.f32.mrf.mxu0
      %v3237 = vadd.f32 0.0, %v3236
      %3238 = vmatmul.bf16.gmra.mxu0 %v3166
      %v3239 = vpop.f32.mrf.mxu0
      %v3240 = vadd.f32 0.0, %v3239
      %v3241 = vpop.f32.mrf.mxu0
      %v3242 = vadd.f32 0.0, %v3241
      %3243 = vmatmul.bf16.gmra.mxu0 %v3169
      %v3244 = vpop.f32.mrf.mxu0
      %v3245 = vadd.f32 0.0, %v3244
      %v3246 = vpop.f32.mrf.mxu0
      %v3247 = vadd.f32 0.0, %v3246
      %3248 = vmatmul.bf16.gmra.mxu0 %v3172
      %v3249 = vpop.f32.mrf.mxu0
      %v3250 = vadd.f32 0.0, %v3249
      %v3251 = vpop.f32.mrf.mxu0
      %v3252 = vadd.f32 0.0, %v3251
      %3253 = vmatmul.bf16.gmra.mxu0 %v3175
      %v3254 = vpop.f32.mrf.mxu0
      %v3255 = vadd.f32 0.0, %v3254
      %v3256 = vpop.f32.mrf.mxu0
      %v3257 = vadd.f32 0.0, %v3256
      %3258 = vmatmul.bf16.gmra.mxu0 %v3178
      %v3259 = vpop.f32.mrf.mxu0
      %v3260 = vadd.f32 0.0, %v3259
      %v3261 = vpop.f32.mrf.mxu0
      %v3262 = vadd.f32 0.0, %v3261
      %3263 = vmatmul.bf16.gmra.mxu0 %v3181
      %v3264 = vpop.f32.mrf.mxu0
      %v3265 = vadd.f32 0.0, %v3264
      %v3266 = vpop.f32.mrf.mxu0
      %v3267 = vadd.f32 0.0, %v3266
      %3268 = vmatmul.bf16.gmra.mxu0 %v3184
      %v3269 = vpop.f32.mrf.mxu0
      %v3270 = vadd.f32 0.0, %v3269
      %v3271 = vpop.f32.mrf.mxu0
      %v3272 = vadd.f32 0.0, %v3271
      %3273 = vmatmul.bf16.gmra.mxu0 %v3187
      %v3274 = vpop.f32.mrf.mxu0
      %v3275 = vadd.f32 0.0, %v3274
      %v3276 = vpop.f32.mrf.mxu0
      %v3277 = vadd.f32 0.0, %v3276
      %3278 = vmatmul.bf16.gmra.mxu0 %v3190
      %v3279 = vpop.f32.mrf.mxu0
      %v3280 = vadd.f32 0.0, %v3279
      %v3281 = vpop.f32.mrf.mxu0
      %v3282 = vadd.f32 0.0, %v3281
      %3283 = vdwg.mxu0
      %v3284 = vadd.f32 %v2998, %v3205
      %v3285 = vadd.f32 %v2999, %v3207
      %v3286 = vadd.f32 %v3000, %v3210
      %v3287 = vadd.f32 %v3001, %v3212
      %v3288 = vadd.f32 %v3002, %v3215
      %v3289 = vadd.f32 %v3003, %v3217
      %v3290 = vadd.f32 %v3004, %v3220
      %v3291 = vadd.f32 %v3005, %v3222
      %v3292 = vadd.f32 %v3006, %v3225
      %v3293 = vadd.f32 %v3007, %v3227
      %v3294 = vadd.f32 %v3008, %v3230
      %v3295 = vadd.f32 %v3009, %v3232
      %v3296 = vadd.f32 %v3010, %v3235
      %v3297 = vadd.f32 %v3011, %v3237
      %v3298 = vadd.f32 %v3012, %v3240
      %v3299 = vadd.f32 %v3013, %v3242
      %v3300 = vadd.f32 %v3014, %v3245
      %v3301 = vadd.f32 %v3015, %v3247
      %v3302 = vadd.f32 %v3016, %v3250
      %v3303 = vadd.f32 %v3017, %v3252
      %v3304 = vadd.f32 %v3018, %v3255
      %v3305 = vadd.f32 %v3019, %v3257
      %v3306 = vadd.f32 %v3020, %v3260
      %v3307 = vadd.f32 %v3021, %v3262
      %v3308 = vadd.f32 %v3022, %v3265
      %v3309 = vadd.f32 %v3023, %v3267
      %v3310 = vadd.f32 %v3024, %v3270
      %v3311 = vadd.f32 %v3025, %v3272
      %v3312 = vadd.f32 %v3026, %v3275
      %v3313 = vadd.f32 %v3027, %v3277
      %v3314 = vadd.f32 %v3028, %v3280
      %v3315 = vadd.f32 %v3029, %v3282
      %v3316 = vld [vmem:[%s1896] sm:$0xf]
      %v3317 = vld [vmem:[%s1896 + $0x4] sm:$0xf]
      %v3318 = vld [vmem:[%s1896 + $0x8] sm:$0xf]
      %v3319 = vld [vmem:[%s1896 + $0xc] sm:$0xf]
      %v3320 = vld [vmem:[%s1896 + $0x10] sm:$0xf]
      %v3321 = vld [vmem:[%s1896 + $0x14] sm:$0xf]
      %v3322 = vld [vmem:[%s1896 + $0x18] sm:$0xf]
      %v3323 = vld [vmem:[%s1896 + $0x1c] sm:$0xf]
      %v3324 = vld [vmem:[%s1896 + $0x20] sm:$0xf]
      %v3325 = vld [vmem:[%s1896 + $0x24] sm:$0xf]
      %v3326 = vld [vmem:[%s1896 + $0x28] sm:$0xf]
      %v3327 = vld [vmem:[%s1896 + $0x2c] sm:$0xf]
      %v3328 = vld [vmem:[%s1896 + $0x30] sm:$0xf]
      %v3329 = vld [vmem:[%s1896 + $0x34] sm:$0xf]
      %v3330 = vld [vmem:[%s1896 + $0x38] sm:$0xf]
      %v3331 = vld [vmem:[%s1896 + $0x3c] sm:$0xf]
      %v3332 = vld [vmem:[%s1896 + $0x40] sm:$0xf]
      %v3333 = vld [vmem:[%s1896 + $0x44] sm:$0xf]
      %v3334 = vld [vmem:[%s1896 + $0x48] sm:$0xf]
      %v3335 = vld [vmem:[%s1896 + $0x4c] sm:$0xf]
      %v3336 = vld [vmem:[%s1896 + $0x50] sm:$0xf]
      %v3337 = vld [vmem:[%s1896 + $0x54] sm:$0xf]
      %v3338 = vld [vmem:[%s1896 + $0x58] sm:$0xf]
      %v3339 = vld [vmem:[%s1896 + $0x5c] sm:$0xf]
      %v3340 = vld [vmem:[%s1896 + $0x60] sm:$0xf]
      %v3341 = vld [vmem:[%s1896 + $0x64] sm:$0xf]
      %v3342 = vld [vmem:[%s1896 + $0x68] sm:$0xf]
      %v3343 = vld [vmem:[%s1896 + $0x6c] sm:$0xf]
      %v3344 = vld [vmem:[%s1896 + $0x70] sm:$0xf]
      %v3345 = vld [vmem:[%s1896 + $0x74] sm:$0xf]
      %v3346 = vld [vmem:[%s1896 + $0x78] sm:$0xf]
      %v3347 = vld [vmem:[%s1896 + $0x7c] sm:$0xf]
      %s3348 = scalar_lea.vmem %s4, 14
      %v3349 = vld [vmem:[%s3348] sm:$0x3]
      %v3382 = vunpack.c.l.b16 %v3316
      %v3383 = vunpack.c.l.b16 %v3317
      %v3384 = vunpack.c.l.b16 %v3318
      %v3385 = vunpack.c.l.b16 %v3319
      %v3386 = vunpack.c.l.b16 %v3320
      %v3387 = vunpack.c.l.b16 %v3321
      %v3388 = vunpack.c.l.b16 %v3322
      %v3389 = vunpack.c.l.b16 %v3323
      %v3390 = vunpack.c.l.b16 %v3324
      %v3391 = vunpack.c.l.b16 %v3325
      %v3392 = vunpack.c.l.b16 %v3326
      %v3393 = vunpack.c.l.b16 %v3327
      %v3394 = vunpack.c.l.b16 %v3328
      %v3395 = vunpack.c.l.b16 %v3329
      %v3396 = vunpack.c.l.b16 %v3330
      %v3397 = vunpack.c.l.b16 %v3331
      %v3398 = vunpack.c.l.b16 %v3332
      %v3399 = vunpack.c.l.b16 %v3333
      %v3400 = vunpack.c.l.b16 %v3334
      %v3401 = vunpack.c.l.b16 %v3335
      %v3402 = vunpack.c.l.b16 %v3336
      %v3403 = vunpack.c.l.b16 %v3337
      %v3404 = vunpack.c.l.b16 %v3338
      %v3405 = vunpack.c.l.b16 %v3339
      %v3406 = vunpack.c.l.b16 %v3340
      %v3407 = vunpack.c.l.b16 %v3341
      %v3408 = vunpack.c.l.b16 %v3342
      %v3409 = vunpack.c.l.b16 %v3343
      %v3410 = vunpack.c.l.b16 %v3344
      %v3411 = vunpack.c.l.b16 %v3345
      %v3412 = vunpack.c.l.b16 %v3346
      %v3413 = vunpack.c.l.b16 %v3347
      %v3414 = vpack.c.b16 %v3383, %v3382
      %v3415 = vpack.c.b16 %v3385, %v3384
      %v3416 = vpack.c.b16 %v3387, %v3386
      %v3417 = vpack.c.b16 %v3389, %v3388
      %v3418 = vpack.c.b16 %v3391, %v3390
      %v3419 = vpack.c.b16 %v3393, %v3392
      %v3420 = vpack.c.b16 %v3395, %v3394
      %v3421 = vpack.c.b16 %v3397, %v3396
      %v3422 = vpack.c.b16 %v3399, %v3398
      %v3423 = vpack.c.b16 %v3401, %v3400
      %v3424 = vpack.c.b16 %v3403, %v3402
      %v3425 = vpack.c.b16 %v3405, %v3404
      %v3426 = vpack.c.b16 %v3407, %v3406
      %v3427 = vpack.c.b16 %v3409, %v3408
      %v3428 = vpack.c.b16 %v3411, %v3410
      %v3429 = vpack.c.b16 %v3413, %v3412
      %v3431 = vsel %vm1534, %v3414, 0
      %v3434 = vsel %vm1534, %v3415, 0
      %v3437 = vsel %vm1534, %v3416, 0
      %v3440 = vsel %vm1534, %v3417, 0
      %v3443 = vsel %vm1534, %v3418, 0
      %v3446 = vsel %vm1534, %v3419, 0
      %v3449 = vsel %vm1534, %v3420, 0
      %v3452 = vsel %vm1534, %v3421, 0
      %v3455 = vsel %vm1534, %v3422, 0
      %v3458 = vsel %vm1534, %v3423, 0
      %v3461 = vsel %vm1534, %v3424, 0
      %v3464 = vsel %vm1534, %v3425, 0
      %v3467 = vsel %vm1534, %v3426, 0
      %v3470 = vsel %vm1534, %v3427, 0
      %v3473 = vsel %vm1534, %v3428, 0
      %v3476 = vsel %vm1534, %v3429, 0
      %v3479 = vsel %vm1583, %v3349, 0
      %3481 = vmatpush.bf16.msra.mxu0 0
      %3482 = vmatpush.bf16.msra.mxu0 0
      %3483 = vmatpush.bf16.msra.mxu0 0
      %3484 = vmatpush.bf16.msra.mxu0 0
      %3485 = vmatpush.bf16.msra.mxu0 0
      %3486 = vmatpush.bf16.msra.mxu0 0
      %3487 = vmatpush.bf16.msra.mxu0 0
      %3488 = vmatpush.bf16.msra.mxu0 %v3479
      %3489 = vmatmul.bf16.gmra.mxu0 %v3431
      %v3490 = vpop.f32.mrf.mxu0
      %v3491 = vadd.f32 0.0, %v3490
      %v3492 = vpop.f32.mrf.mxu0
      %v3493 = vadd.f32 0.0, %v3492
      %3494 = vmatmul.bf16.gmra.mxu0 %v3434
      %v3495 = vpop.f32.mrf.mxu0
      %v3496 = vadd.f32 0.0, %v3495
      %v3497 = vpop.f32.mrf.mxu0
      %v3498 = vadd.f32 0.0, %v3497
      %3499 = vmatmul.bf16.gmra.mxu0 %v3437
      %v3500 = vpop.f32.mrf.mxu0
      %v3501 = vadd.f32 0.0, %v3500
      %v3502 = vpop.f32.mrf.mxu0
      %v3503 = vadd.f32 0.0, %v3502
      %3504 = vmatmul.bf16.gmra.mxu0 %v3440
      %v3505 = vpop.f32.mrf.mxu0
      %v3506 = vadd.f32 0.0, %v3505
      %v3507 = vpop.f32.mrf.mxu0
      %v3508 = vadd.f32 0.0, %v3507
      %3509 = vmatmul.bf16.gmra.mxu0 %v3443
      %v3510 = vpop.f32.mrf.mxu0
      %v3511 = vadd.f32 0.0, %v3510
      %v3512 = vpop.f32.mrf.mxu0
      %v3513 = vadd.f32 0.0, %v3512
      %3514 = vmatmul.bf16.gmra.mxu0 %v3446
      %v3515 = vpop.f32.mrf.mxu0
      %v3516 = vadd.f32 0.0, %v3515
      %v3517 = vpop.f32.mrf.mxu0
      %v3518 = vadd.f32 0.0, %v3517
      %3519 = vmatmul.bf16.gmra.mxu0 %v3449
      %v3520 = vpop.f32.mrf.mxu0
      %v3521 = vadd.f32 0.0, %v3520
      %v3522 = vpop.f32.mrf.mxu0
      %v3523 = vadd.f32 0.0, %v3522
      %3524 = vmatmul.bf16.gmra.mxu0 %v3452
      %v3525 = vpop.f32.mrf.mxu0
      %v3526 = vadd.f32 0.0, %v3525
      %v3527 = vpop.f32.mrf.mxu0
      %v3528 = vadd.f32 0.0, %v3527
      %3529 = vmatmul.bf16.gmra.mxu0 %v3455
      %v3530 = vpop.f32.mrf.mxu0
      %v3531 = vadd.f32 0.0, %v3530
      %v3532 = vpop.f32.mrf.mxu0
      %v3533 = vadd.f32 0.0, %v3532
      %3534 = vmatmul.bf16.gmra.mxu0 %v3458
      %v3535 = vpop.f32.mrf.mxu0
      %v3536 = vadd.f32 0.0, %v3535
      %v3537 = vpop.f32.mrf.mxu0
      %v3538 = vadd.f32 0.0, %v3537
      %3539 = vmatmul.bf16.gmra.mxu0 %v3461
      %v3540 = vpop.f32.mrf.mxu0
      %v3541 = vadd.f32 0.0, %v3540
      %v3542 = vpop.f32.mrf.mxu0
      %v3543 = vadd.f32 0.0, %v3542
      %3544 = vmatmul.bf16.gmra.mxu0 %v3464
      %v3545 = vpop.f32.mrf.mxu0
      %v3546 = vadd.f32 0.0, %v3545
      %v3547 = vpop.f32.mrf.mxu0
      %v3548 = vadd.f32 0.0, %v3547
      %3549 = vmatmul.bf16.gmra.mxu0 %v3467
      %v3550 = vpop.f32.mrf.mxu0
      %v3551 = vadd.f32 0.0, %v3550
      %v3552 = vpop.f32.mrf.mxu0
      %v3553 = vadd.f32 0.0, %v3552
      %3554 = vmatmul.bf16.gmra.mxu0 %v3470
      %v3555 = vpop.f32.mrf.mxu0
      %v3556 = vadd.f32 0.0, %v3555
      %v3557 = vpop.f32.mrf.mxu0
      %v3558 = vadd.f32 0.0, %v3557
      %3559 = vmatmul.bf16.gmra.mxu0 %v3473
      %v3560 = vpop.f32.mrf.mxu0
      %v3561 = vadd.f32 0.0, %v3560
      %v3562 = vpop.f32.mrf.mxu0
      %v3563 = vadd.f32 0.0, %v3562
      %3564 = vmatmul.bf16.gmra.mxu0 %v3476
      %v3565 = vpop.f32.mrf.mxu0
      %v3566 = vadd.f32 0.0, %v3565
      %v3567 = vpop.f32.mrf.mxu0
      %v3568 = vadd.f32 0.0, %v3567
      %3569 = vdwg.mxu0
      %v3570 = vadd.f32 %v3284, %v3491
      %v3571 = vadd.f32 %v3285, %v3493
      %v3572 = vadd.f32 %v3286, %v3496
      %v3573 = vadd.f32 %v3287, %v3498
      %v3574 = vadd.f32 %v3288, %v3501
      %v3575 = vadd.f32 %v3289, %v3503
      %v3576 = vadd.f32 %v3290, %v3506
      %v3577 = vadd.f32 %v3291, %v3508
      %v3578 = vadd.f32 %v3292, %v3511
      %v3579 = vadd.f32 %v3293, %v3513
      %v3580 = vadd.f32 %v3294, %v3516
      %v3581 = vadd.f32 %v3295, %v3518
      %v3582 = vadd.f32 %v3296, %v3521
      %v3583 = vadd.f32 %v3297, %v3523
      %v3584 = vadd.f32 %v3298, %v3526
      %v3585 = vadd.f32 %v3299, %v3528
      %v3586 = vadd.f32 %v3300, %v3531
      %v3587 = vadd.f32 %v3301, %v3533
      %v3588 = vadd.f32 %v3302, %v3536
      %v3589 = vadd.f32 %v3303, %v3538
      %v3590 = vadd.f32 %v3304, %v3541
      %v3591 = vadd.f32 %v3305, %v3543
      %v3592 = vadd.f32 %v3306, %v3546
      %v3593 = vadd.f32 %v3307, %v3548
      %v3594 = vadd.f32 %v3308, %v3551
      %v3595 = vadd.f32 %v3309, %v3553
      %v3596 = vadd.f32 %v3310, %v3556
      %v3597 = vadd.f32 %v3311, %v3558
      %v3598 = vadd.f32 %v3312, %v3561
      %v3599 = vadd.f32 %v3313, %v3563
      %v3600 = vadd.f32 %v3314, %v3566
      %v3601 = vadd.f32 %v3315, %v3568
      %v3602 = vld [vmem:[#allocation2] sm:$0xe]
      %v3603 = vld [vmem:[#allocation2 + $0x4] sm:$0xf]
      %v3604 = vld [vmem:[#allocation2 + $0x8] sm:$0x1]
      %v3605 = vld [vmem:[#allocation2 + $0xc] sm:$0xe]
      %v3606 = vld [vmem:[#allocation2 + $0x10] sm:$0xf]
      %v3607 = vld [vmem:[#allocation2 + $0x14] sm:$0x1]
      %v3608 = vld [vmem:[#allocation2 + $0x18] sm:$0xe]
      %v3609 = vld [vmem:[#allocation2 + $0x1c] sm:$0xf]
      %v3610 = vld [vmem:[#allocation2 + $0x20] sm:$0x1]
      %v3611 = vld [vmem:[#allocation2 + $0x24] sm:$0xe]
      %v3612 = vld [vmem:[#allocation2 + $0x28] sm:$0xf]
      %v3613 = vld [vmem:[#allocation2 + $0x2c] sm:$0x1]
      %v3614 = vld [vmem:[#allocation2 + $0x30] sm:$0xe]
      %v3615 = vld [vmem:[#allocation2 + $0x34] sm:$0xf]
      %v3616 = vld [vmem:[#allocation2 + $0x38] sm:$0x1]
      %v3617 = vld [vmem:[#allocation2 + $0x3c] sm:$0xe]
      %v3618 = vld [vmem:[#allocation2 + $0x40] sm:$0xf]
      %v3619 = vld [vmem:[#allocation2 + $0x44] sm:$0x1]
      %v3620 = vld [vmem:[#allocation2 + $0x48] sm:$0xe]
      %v3621 = vld [vmem:[#allocation2 + $0x4c] sm:$0xf]
      %v3622 = vld [vmem:[#allocation2 + $0x50] sm:$0x1]
      %v3623 = vld [vmem:[#allocation2 + $0x54] sm:$0xe]
      %v3624 = vld [vmem:[#allocation2 + $0x58] sm:$0xf]
      %v3625 = vld [vmem:[#allocation2 + $0x5c] sm:$0x1]
      %v3626 = vld [vmem:[#allocation2 + $0x60] sm:$0xe]
      %v3627 = vld [vmem:[#allocation2 + $0x64] sm:$0xf]
      %v3628 = vld [vmem:[#allocation2 + $0x68] sm:$0x1]
      %v3629 = vld [vmem:[#allocation2 + $0x6c] sm:$0xe]
      %v3630 = vld [vmem:[#allocation2 + $0x70] sm:$0xf]
      %v3631 = vld [vmem:[#allocation2 + $0x74] sm:$0x1]
      %v3632 = vld [vmem:[#allocation2 + $0x78] sm:$0xe]
      %v3633 = vld [vmem:[#allocation2 + $0x7c] sm:$0xf]
      %v3634 = vld [vmem:[#allocation2 + $0x80] sm:$0x1]
      %v3635 = vld [vmem:[#allocation2 + $0x84] sm:$0xe]
      %v3636 = vld [vmem:[#allocation2 + $0x88] sm:$0xf]
      %v3637 = vld [vmem:[#allocation2 + $0x8c] sm:$0x1]
      %v3638 = vld [vmem:[#allocation2 + $0x90] sm:$0xe]
      %v3639 = vld [vmem:[#allocation2 + $0x94] sm:$0xf]
      %v3640 = vld [vmem:[#allocation2 + $0x98] sm:$0x1]
      %v3641 = vld [vmem:[#allocation2 + $0x9c] sm:$0xe]
      %v3642 = vld [vmem:[#allocation2 + $0xa0] sm:$0xf]
      %v3643 = vld [vmem:[#allocation2 + $0xa4] sm:$0x1]
      %v3644 = vld [vmem:[#allocation2 + $0xa8] sm:$0xe]
      %v3645 = vld [vmem:[#allocation2 + $0xac] sm:$0xf]
      %v3646 = vld [vmem:[#allocation2 + $0xb0] sm:$0x1]
      %v3647 = vld [vmem:[#allocation2 + $0xb4] sm:$0xe]
      %v3648 = vld [vmem:[#allocation2 + $0xb8] sm:$0xf]
      %v3649 = vld [vmem:[#allocation2 + $0xbc] sm:$0x1]
      %v3650 = vld [vmem:[#allocation2 + $0xc0] sm:$0xe]
      %v3651 = vld [vmem:[#allocation2 + $0xc4] sm:$0xf]
      %v3652 = vld [vmem:[#allocation2 + $0xc8] sm:$0x1]
      %v3653 = vld [vmem:[#allocation2 + $0xcc] sm:$0xe]
      %v3654 = vld [vmem:[#allocation2 + $0xd0] sm:$0xf]
      %v3655 = vld [vmem:[#allocation2 + $0xd4] sm:$0x1]
      %vm3710 = vcmask 1042432
      %vm3711 = vcmask 1046532
      %vm3712 = vmor %vm3710, %vm3711
      %v3713 = vrot.slane %v3602, 5
      %v3714 = vrot.slane %v3713, 4
      %v3715 = vrot.slane %v3603, 5
      %v3716 = vsel %vm3712, %v3714, %v3715
      %v3717 = vrot.slane %v3715, 4
      %v3718 = vrot.slane %v3604, 5
      %v3719 = vsel %vm3712, %v3717, %v3718
      %v3720 = vrot.slane %v3605, 5
      %v3721 = vrot.slane %v3720, 4
      %v3722 = vrot.slane %v3606, 5
      %v3723 = vsel %vm3712, %v3721, %v3722
      %v3724 = vrot.slane %v3722, 4
      %v3725 = vrot.slane %v3607, 5
      %v3726 = vsel %vm3712, %v3724, %v3725
      %v3727 = vrot.slane %v3608, 5
      %v3728 = vrot.slane %v3727, 4
      %v3729 = vrot.slane %v3609, 5
      %v3730 = vsel %vm3712, %v3728, %v3729
      %v3731 = vrot.slane %v3729, 4
      %v3732 = vrot.slane %v3610, 5
      %v3733 = vsel %vm3712, %v3731, %v3732
      %v3734 = vrot.slane %v3611, 5
      %v3735 = vrot.slane %v3734, 4
      %v3736 = vrot.slane %v3612, 5
      %v3737 = vsel %vm3712, %v3735, %v3736
      %v3738 = vrot.slane %v3736, 4
      %v3739 = vrot.slane %v3613, 5
      %v3740 = vsel %vm3712, %v3738, %v3739
      %v3741 = vrot.slane %v3614, 5
      %v3742 = vrot.slane %v3741, 4
      %v3743 = vrot.slane %v3615, 5
      %v3744 = vsel %vm3712, %v3742, %v3743
      %v3745 = vrot.slane %v3743, 4
      %v3746 = vrot.slane %v3616, 5
      %v3747 = vsel %vm3712, %v3745, %v3746
      %v3748 = vrot.slane %v3617, 5
      %v3749 = vrot.slane %v3748, 4
      %v3750 = vrot.slane %v3618, 5
      %v3751 = vsel %vm3712, %v3749, %v3750
      %v3752 = vrot.slane %v3750, 4
      %v3753 = vrot.slane %v3619, 5
      %v3754 = vsel %vm3712, %v3752, %v3753
      %v3755 = vrot.slane %v3620, 5
      %v3756 = vrot.slane %v3755, 4
      %v3757 = vrot.slane %v3621, 5
      %v3758 = vsel %vm3712, %v3756, %v3757
      %v3759 = vrot.slane %v3757, 4
      %v3760 = vrot.slane %v3622, 5
      %v3761 = vsel %vm3712, %v3759, %v3760
      %v3762 = vrot.slane %v3623, 5
      %v3763 = vrot.slane %v3762, 4
      %v3764 = vrot.slane %v3624, 5
      %v3765 = vsel %vm3712, %v3763, %v3764
      %v3766 = vrot.slane %v3764, 4
      %v3767 = vrot.slane %v3625, 5
      %v3768 = vsel %vm3712, %v3766, %v3767
      %v3769 = vrot.slane %v3626, 5
      %v3770 = vrot.slane %v3769, 4
      %v3771 = vrot.slane %v3627, 5
      %v3772 = vsel %vm3712, %v3770, %v3771
      %v3773 = vrot.slane %v3771, 4
      %v3774 = vrot.slane %v3628, 5
      %v3775 = vsel %vm3712, %v3773, %v3774
      %v3776 = vrot.slane %v3629, 5
      %v3777 = vrot.slane %v3776, 4
      %v3778 = vrot.slane %v3630, 5
      %v3779 = vsel %vm3712, %v3777, %v3778
      %v3780 = vrot.slane %v3778, 4
      %v3781 = vrot.slane %v3631, 5
      %v3782 = vsel %vm3712, %v3780, %v3781
      %v3783 = vrot.slane %v3632, 5
      %v3784 = vrot.slane %v3783, 4
      %v3785 = vrot.slane %v3633, 5
      %v3786 = vsel %vm3712, %v3784, %v3785
      %v3787 = vrot.slane %v3785, 4
      %v3788 = vrot.slane %v3634, 5
      %v3789 = vsel %vm3712, %v3787, %v3788
      %v3790 = vrot.slane %v3635, 5
      %v3791 = vrot.slane %v3790, 4
      %v3792 = vrot.slane %v3636, 5
      %v3793 = vsel %vm3712, %v3791, %v3792
      %v3794 = vrot.slane %v3792, 4
      %v3795 = vrot.slane %v3637, 5
      %v3796 = vsel %vm3712, %v3794, %v3795
      %v3797 = vrot.slane %v3638, 5
      %v3798 = vrot.slane %v3797, 4
      %v3799 = vrot.slane %v3639, 5
      %v3800 = vsel %vm3712, %v3798, %v3799
      %v3801 = vrot.slane %v3799, 4
      %v3802 = vrot.slane %v3640, 5
      %v3803 = vsel %vm3712, %v3801, %v3802
      %v3804 = vrot.slane %v3641, 5
      %v3805 = vrot.slane %v3804, 4
      %v3806 = vrot.slane %v3642, 5
      %v3807 = vsel %vm3712, %v3805, %v3806
      %v3808 = vrot.slane %v3806, 4
      %v3809 = vrot.slane %v3643, 5
      %v3810 = vsel %vm3712, %v3808, %v3809
      %v3811 = vrot.slane %v3644, 5
      %v3812 = vrot.slane %v3811, 4
      %v3813 = vrot.slane %v3645, 5
      %v3814 = vsel %vm3712, %v3812, %v3813
      %v3815 = vrot.slane %v3813, 4
      %v3816 = vrot.slane %v3646, 5
      %v3817 = vsel %vm3712, %v3815, %v3816
      %v3818 = vrot.slane %v3647, 5
      %v3819 = vrot.slane %v3818, 4
      %v3820 = vrot.slane %v3648, 5
      %v3821 = vsel %vm3712, %v3819, %v3820
      %v3822 = vrot.slane %v3820, 4
      %v3823 = vrot.slane %v3649, 5
      %v3824 = vsel %vm3712, %v3822, %v3823
      %v3825 = vrot.slane %v3650, 5
      %v3826 = vrot.slane %v3825, 4
      %v3827 = vrot.slane %v3651, 5
      %v3828 = vsel %vm3712, %v3826, %v3827
      %v3829 = vrot.slane %v3827, 4
      %v3830 = vrot.slane %v3652, 5
      %v3831 = vsel %vm3712, %v3829, %v3830
      %v3832 = vrot.slane %v3653, 5
      %v3833 = vrot.slane %v3832, 4
      %v3834 = vrot.slane %v3654, 5
      %v3835 = vsel %vm3712, %v3833, %v3834
      %v3836 = vrot.slane %v3834, 4
      %v3837 = vrot.slane %v3655, 5
      %v3838 = vsel %vm3712, %v3836, %v3837
      %3875 = vst.msk [vmem:[#allocation3] sm:$0xf] %vm723, %v3716
      %3876 = vst.msk [vmem:[#allocation3 + $0x4] sm:$0xf] %vm723, %v3719
      %3877 = vst.msk [vmem:[#allocation3 + $0x8] sm:$0xf] %vm723, %v3723
      %3878 = vst.msk [vmem:[#allocation3 + $0xc] sm:$0xf] %vm723, %v3726
      %3879 = vst.msk [vmem:[#allocation3 + $0x10] sm:$0xf] %vm723, %v3730
      %3880 = vst.msk [vmem:[#allocation3 + $0x14] sm:$0xf] %vm723, %v3733
      %3881 = vst.msk [vmem:[#allocation3 + $0x18] sm:$0xf] %vm723, %v3737
      %3882 = vst.msk [vmem:[#allocation3 + $0x1c] sm:$0xf] %vm723, %v3740
      %3883 = vst.msk [vmem:[#allocation3 + $0x20] sm:$0xf] %vm723, %v3744
      %3884 = vst.msk [vmem:[#allocation3 + $0x24] sm:$0xf] %vm723, %v3747
      %3885 = vst.msk [vmem:[#allocation3 + $0x28] sm:$0xf] %vm723, %v3751
      %3886 = vst.msk [vmem:[#allocation3 + $0x2c] sm:$0xf] %vm723, %v3754
      %3887 = vst.msk [vmem:[#allocation3 + $0x30] sm:$0xf] %vm723, %v3758
      %3888 = vst.msk [vmem:[#allocation3 + $0x34] sm:$0xf] %vm723, %v3761
      %3889 = vst.msk [vmem:[#allocation3 + $0x38] sm:$0xf] %vm723, %v3765
      %3890 = vst.msk [vmem:[#allocation3 + $0x3c] sm:$0xf] %vm723, %v3768
      %3891 = vst.msk [vmem:[#allocation3 + $0x40] sm:$0xf] %vm723, %v3772
      %3892 = vst.msk [vmem:[#allocation3 + $0x44] sm:$0xf] %vm723, %v3775
      %3893 = vst.msk [vmem:[#allocation3 + $0x48] sm:$0xf] %vm723, %v3779
      %3894 = vst.msk [vmem:[#allocation3 + $0x4c] sm:$0xf] %vm723, %v3782
      %3895 = vst.msk [vmem:[#allocation3 + $0x50] sm:$0xf] %vm723, %v3786
      %3896 = vst.msk [vmem:[#allocation3 + $0x54] sm:$0xf] %vm723, %v3789
      %3897 = vst.msk [vmem:[#allocation3 + $0x58] sm:$0xf] %vm723, %v3793
      %3898 = vst.msk [vmem:[#allocation3 + $0x5c] sm:$0xf] %vm723, %v3796
      %3899 = vst.msk [vmem:[#allocation3 + $0x60] sm:$0xf] %vm723, %v3800
      %3900 = vst.msk [vmem:[#allocation3 + $0x64] sm:$0xf] %vm723, %v3803
      %3901 = vst.msk [vmem:[#allocation3 + $0x68] sm:$0xf] %vm723, %v3807
      %3902 = vst.msk [vmem:[#allocation3 + $0x6c] sm:$0xf] %vm723, %v3810
      %3903 = vst.msk [vmem:[#allocation3 + $0x70] sm:$0xf] %vm723, %v3814
      %3904 = vst.msk [vmem:[#allocation3 + $0x74] sm:$0xf] %vm723, %v3817
      %3905 = vst.msk [vmem:[#allocation3 + $0x78] sm:$0xf] %vm723, %v3821
      %3906 = vst.msk [vmem:[#allocation3 + $0x7c] sm:$0xf] %vm723, %v3824
      %3907 = vst.msk [vmem:[#allocation3 + $0x80] sm:$0xf] %vm723, %v3828
      %3908 = vst.msk [vmem:[#allocation3 + $0x84] sm:$0xf] %vm723, %v3831
      %3909 = vst.msk [vmem:[#allocation3 + $0x88] sm:$0xf] %vm723, %v3835
      %3910 = vst.msk [vmem:[#allocation3 + $0x8c] sm:$0xf] %vm723, %v3838
      %v3911 = vld [vmem:[#allocation3] sm:$0xf]
      %v3912 = vld [vmem:[#allocation3 + $0x4] sm:$0xf]
      %v3913 = vld [vmem:[#allocation3 + $0x8] sm:$0xf]
      %v3914 = vld [vmem:[#allocation3 + $0xc] sm:$0xf]
      %v3915 = vld [vmem:[#allocation3 + $0x10] sm:$0xf]
      %v3916 = vld [vmem:[#allocation3 + $0x14] sm:$0xf]
      %v3917 = vld [vmem:[#allocation3 + $0x18] sm:$0xf]
      %v3918 = vld [vmem:[#allocation3 + $0x1c] sm:$0xf]
      %v3919 = vld [vmem:[#allocation3 + $0x20] sm:$0xf]
      %v3920 = vld [vmem:[#allocation3 + $0x24] sm:$0xf]
      %v3921 = vld [vmem:[#allocation3 + $0x28] sm:$0xf]
      %v3922 = vld [vmem:[#allocation3 + $0x2c] sm:$0xf]
      %v3923 = vld [vmem:[#allocation3 + $0x30] sm:$0xf]
      %v3924 = vld [vmem:[#allocation3 + $0x34] sm:$0xf]
      %v3925 = vld [vmem:[#allocation3 + $0x38] sm:$0xf]
      %v3926 = vld [vmem:[#allocation3 + $0x3c] sm:$0xf]
      %v3927 = vld [vmem:[#allocation3 + $0x40] sm:$0xf]
      %v3928 = vld [vmem:[#allocation3 + $0x44] sm:$0xf]
      %v3929 = vld [vmem:[#allocation3 + $0x48] sm:$0xf]
      %v3930 = vld [vmem:[#allocation3 + $0x4c] sm:$0xf]
      %v3931 = vld [vmem:[#allocation3 + $0x50] sm:$0xf]
      %v3932 = vld [vmem:[#allocation3 + $0x54] sm:$0xf]
      %v3933 = vld [vmem:[#allocation3 + $0x58] sm:$0xf]
      %v3934 = vld [vmem:[#allocation3 + $0x5c] sm:$0xf]
      %v3935 = vld [vmem:[#allocation3 + $0x60] sm:$0xf]
      %v3936 = vld [vmem:[#allocation3 + $0x64] sm:$0xf]
      %v3937 = vld [vmem:[#allocation3 + $0x68] sm:$0xf]
      %v3938 = vld [vmem:[#allocation3 + $0x6c] sm:$0xf]
      %v3939 = vld [vmem:[#allocation3 + $0x70] sm:$0xf]
      %v3940 = vld [vmem:[#allocation3 + $0x74] sm:$0xf]
      %v3941 = vld [vmem:[#allocation3 + $0x78] sm:$0xf]
      %v3942 = vld [vmem:[#allocation3 + $0x7c] sm:$0xf]
      %s3943 = scalar_lea.vmem %s4, 4
      %v3944 = vld [vmem:[%s3943] sm:$0x3]
      %v3977 = vunpack.c.l.b16 %v3911
      %v3978 = vunpack.c.l.b16 %v3912
      %v3979 = vunpack.c.l.b16 %v3913
      %v3980 = vunpack.c.l.b16 %v3914
      %v3981 = vunpack.c.l.b16 %v3915
      %v3982 = vunpack.c.l.b16 %v3916
      %v3983 = vunpack.c.l.b16 %v3917
      %v3984 = vunpack.c.l.b16 %v3918
      %v3985 = vunpack.c.l.b16 %v3919
      %v3986 = vunpack.c.l.b16 %v3920
      %v3987 = vunpack.c.l.b16 %v3921
      %v3988 = vunpack.c.l.b16 %v3922
      %v3989 = vunpack.c.l.b16 %v3923
      %v3990 = vunpack.c.l.b16 %v3924
      %v3991 = vunpack.c.l.b16 %v3925
      %v3992 = vunpack.c.l.b16 %v3926
      %v3993 = vunpack.c.l.b16 %v3927
      %v3994 = vunpack.c.l.b16 %v3928
      %v3995 = vunpack.c.l.b16 %v3929
      %v3996 = vunpack.c.l.b16 %v3930
      %v3997 = vunpack.c.l.b16 %v3931
      %v3998 = vunpack.c.l.b16 %v3932
      %v3999 = vunpack.c.l.b16 %v3933
      %v4000 = vunpack.c.l.b16 %v3934
      %v4001 = vunpack.c.l.b16 %v3935
      %v4002 = vunpack.c.l.b16 %v3936
      %v4003 = vunpack.c.l.b16 %v3937
      %v4004 = vunpack.c.l.b16 %v3938
      %v4005 = vunpack.c.l.b16 %v3939
      %v4006 = vunpack.c.l.b16 %v3940
      %v4007 = vunpack.c.l.b16 %v3941
      %v4008 = vunpack.c.l.b16 %v3942
      %v4009 = vpack.c.b16 %v3978, %v3977
      %v4010 = vpack.c.b16 %v3980, %v3979
      %v4011 = vpack.c.b16 %v3982, %v3981
      %v4012 = vpack.c.b16 %v3984, %v3983
      %v4013 = vpack.c.b16 %v3986, %v3985
      %v4014 = vpack.c.b16 %v3988, %v3987
      %v4015 = vpack.c.b16 %v3990, %v3989
      %v4016 = vpack.c.b16 %v3992, %v3991
      %v4017 = vpack.c.b16 %v3994, %v3993
      %v4018 = vpack.c.b16 %v3996, %v3995
      %v4019 = vpack.c.b16 %v3998, %v3997
      %v4020 = vpack.c.b16 %v4000, %v3999
      %v4021 = vpack.c.b16 %v4002, %v4001
      %v4022 = vpack.c.b16 %v4004, %v4003
      %v4023 = vpack.c.b16 %v4006, %v4005
      %v4024 = vpack.c.b16 %v4008, %v4007
      %v4026 = vsel %vm1534, %v4009, 0
      %v4029 = vsel %vm1534, %v4010, 0
      %v4032 = vsel %vm1534, %v4011, 0
      %v4035 = vsel %vm1534, %v4012, 0
      %v4038 = vsel %vm1534, %v4013, 0
      %v4041 = vsel %vm1534, %v4014, 0
      %v4044 = vsel %vm1534, %v4015, 0
      %v4047 = vsel %vm1534, %v4016, 0
      %v4050 = vsel %vm1534, %v4017, 0
      %v4053 = vsel %vm1534, %v4018, 0
      %v4056 = vsel %vm1534, %v4019, 0
      %v4059 = vsel %vm1534, %v4020, 0
      %v4062 = vsel %vm1534, %v4021, 0
      %v4065 = vsel %vm1534, %v4022, 0
      %v4068 = vsel %vm1534, %v4023, 0
      %v4071 = vsel %vm1534, %v4024, 0
      %v4074 = vsel %vm1583, %v3944, 0
      %4076 = vmatpush.bf16.msra.mxu0 0
      %4077 = vmatpush.bf16.msra.mxu0 0
      %4078 = vmatpush.bf16.msra.mxu0 0
      %4079 = vmatpush.bf16.msra.mxu0 0
      %4080 = vmatpush.bf16.msra.mxu0 0
      %4081 = vmatpush.bf16.msra.mxu0 0
      %4082 = vmatpush.bf16.msra.mxu0 0
      %4083 = vmatpush.bf16.msra.mxu0 %v4074
      %4084 = vmatmul.bf16.gmra.mxu0 %v4026
      %v4085 = vpop.f32.mrf.mxu0
      %v4086 = vadd.f32 0.0, %v4085
      %v4087 = vpop.f32.mrf.mxu0
      %v4088 = vadd.f32 0.0, %v4087
      %4089 = vmatmul.bf16.gmra.mxu0 %v4029
      %v4090 = vpop.f32.mrf.mxu0
      %v4091 = vadd.f32 0.0, %v4090
      %v4092 = vpop.f32.mrf.mxu0
      %v4093 = vadd.f32 0.0, %v4092
      %4094 = vmatmul.bf16.gmra.mxu0 %v4032
      %v4095 = vpop.f32.mrf.mxu0
      %v4096 = vadd.f32 0.0, %v4095
      %v4097 = vpop.f32.mrf.mxu0
      %v4098 = vadd.f32 0.0, %v4097
      %4099 = vmatmul.bf16.gmra.mxu0 %v4035
      %v4100 = vpop.f32.mrf.mxu0
      %v4101 = vadd.f32 0.0, %v4100
      %v4102 = vpop.f32.mrf.mxu0
      %v4103 = vadd.f32 0.0, %v4102
      %4104 = vmatmul.bf16.gmra.mxu0 %v4038
      %v4105 = vpop.f32.mrf.mxu0
      %v4106 = vadd.f32 0.0, %v4105
      %v4107 = vpop.f32.mrf.mxu0
      %v4108 = vadd.f32 0.0, %v4107
      %4109 = vmatmul.bf16.gmra.mxu0 %v4041
      %v4110 = vpop.f32.mrf.mxu0
      %v4111 = vadd.f32 0.0, %v4110
      %v4112 = vpop.f32.mrf.mxu0
      %v4113 = vadd.f32 0.0, %v4112
      %4114 = vmatmul.bf16.gmra.mxu0 %v4044
      %v4115 = vpop.f32.mrf.mxu0
      %v4116 = vadd.f32 0.0, %v4115
      %v4117 = vpop.f32.mrf.mxu0
      %v4118 = vadd.f32 0.0, %v4117
      %4119 = vmatmul.bf16.gmra.mxu0 %v4047
      %v4120 = vpop.f32.mrf.mxu0
      %v4121 = vadd.f32 0.0, %v4120
      %v4122 = vpop.f32.mrf.mxu0
      %v4123 = vadd.f32 0.0, %v4122
      %4124 = vmatmul.bf16.gmra.mxu0 %v4050
      %v4125 = vpop.f32.mrf.mxu0
      %v4126 = vadd.f32 0.0, %v4125
      %v4127 = vpop.f32.mrf.mxu0
      %v4128 = vadd.f32 0.0, %v4127
      %4129 = vmatmul.bf16.gmra.mxu0 %v4053
      %v4130 = vpop.f32.mrf.mxu0
      %v4131 = vadd.f32 0.0, %v4130
      %v4132 = vpop.f32.mrf.mxu0
      %v4133 = vadd.f32 0.0, %v4132
      %4134 = vmatmul.bf16.gmra.mxu0 %v4056
      %v4135 = vpop.f32.mrf.mxu0
      %v4136 = vadd.f32 0.0, %v4135
      %v4137 = vpop.f32.mrf.mxu0
      %v4138 = vadd.f32 0.0, %v4137
      %4139 = vmatmul.bf16.gmra.mxu0 %v4059
      %v4140 = vpop.f32.mrf.mxu0
      %v4141 = vadd.f32 0.0, %v4140
      %v4142 = vpop.f32.mrf.mxu0
      %v4143 = vadd.f32 0.0, %v4142
      %4144 = vmatmul.bf16.gmra.mxu0 %v4062
      %v4145 = vpop.f32.mrf.mxu0
      %v4146 = vadd.f32 0.0, %v4145
      %v4147 = vpop.f32.mrf.mxu0
      %v4148 = vadd.f32 0.0, %v4147
      %4149 = vmatmul.bf16.gmra.mxu0 %v4065
      %v4150 = vpop.f32.mrf.mxu0
      %v4151 = vadd.f32 0.0, %v4150
      %v4152 = vpop.f32.mrf.mxu0
      %v4153 = vadd.f32 0.0, %v4152
      %4154 = vmatmul.bf16.gmra.mxu0 %v4068
      %v4155 = vpop.f32.mrf.mxu0
      %v4156 = vadd.f32 0.0, %v4155
      %v4157 = vpop.f32.mrf.mxu0
      %v4158 = vadd.f32 0.0, %v4157
      %4159 = vmatmul.bf16.gmra.mxu0 %v4071
      %v4160 = vpop.f32.mrf.mxu0
      %v4161 = vadd.f32 0.0, %v4160
      %v4162 = vpop.f32.mrf.mxu0
      %v4163 = vadd.f32 0.0, %v4162
      %4164 = vdwg.mxu0
      %v4165 = vadd.f32 %v3570, %v4086
      %v4166 = vadd.f32 %v3571, %v4088
      %v4167 = vadd.f32 %v3572, %v4091
      %v4168 = vadd.f32 %v3573, %v4093
      %v4169 = vadd.f32 %v3574, %v4096
      %v4170 = vadd.f32 %v3575, %v4098
      %v4171 = vadd.f32 %v3576, %v4101
      %v4172 = vadd.f32 %v3577, %v4103
      %v4173 = vadd.f32 %v3578, %v4106
      %v4174 = vadd.f32 %v3579, %v4108
      %v4175 = vadd.f32 %v3580, %v4111
      %v4176 = vadd.f32 %v3581, %v4113
      %v4177 = vadd.f32 %v3582, %v4116
      %v4178 = vadd.f32 %v3583, %v4118
      %v4179 = vadd.f32 %v3584, %v4121
      %v4180 = vadd.f32 %v3585, %v4123
      %v4181 = vadd.f32 %v3586, %v4126
      %v4182 = vadd.f32 %v3587, %v4128
      %v4183 = vadd.f32 %v3588, %v4131
      %v4184 = vadd.f32 %v3589, %v4133
      %v4185 = vadd.f32 %v3590, %v4136
      %v4186 = vadd.f32 %v3591, %v4138
      %v4187 = vadd.f32 %v3592, %v4141
      %v4188 = vadd.f32 %v3593, %v4143
      %v4189 = vadd.f32 %v3594, %v4146
      %v4190 = vadd.f32 %v3595, %v4148
      %v4191 = vadd.f32 %v3596, %v4151
      %v4192 = vadd.f32 %v3597, %v4153
      %v4193 = vadd.f32 %v3598, %v4156
      %v4194 = vadd.f32 %v3599, %v4158
      %v4195 = vadd.f32 %v3600, %v4161
      %v4196 = vadd.f32 %v3601, %v4163
      %v4197 = vld [vmem:[%s1419] sm:$0xf]
      %v4198 = vld [vmem:[%s1419 + $0x4] sm:$0xf]
      %v4199 = vld [vmem:[%s1419 + $0x8] sm:$0xf]
      %v4200 = vld [vmem:[%s1419 + $0xc] sm:$0xf]
      %v4201 = vld [vmem:[%s1419 + $0x10] sm:$0xf]
      %v4202 = vld [vmem:[%s1419 + $0x14] sm:$0xf]
      %v4203 = vld [vmem:[%s1419 + $0x18] sm:$0xf]
      %v4204 = vld [vmem:[%s1419 + $0x1c] sm:$0xf]
      %v4205 = vld [vmem:[%s1419 + $0x20] sm:$0xf]
      %v4206 = vld [vmem:[%s1419 + $0x24] sm:$0xf]
      %v4207 = vld [vmem:[%s1419 + $0x28] sm:$0xf]
      %v4208 = vld [vmem:[%s1419 + $0x2c] sm:$0xf]
      %v4209 = vld [vmem:[%s1419 + $0x30] sm:$0xf]
      %v4210 = vld [vmem:[%s1419 + $0x34] sm:$0xf]
      %v4211 = vld [vmem:[%s1419 + $0x38] sm:$0xf]
      %v4212 = vld [vmem:[%s1419 + $0x3c] sm:$0xf]
      %v4213 = vld [vmem:[%s1419 + $0x40] sm:$0xf]
      %v4214 = vld [vmem:[%s1419 + $0x44] sm:$0xf]
      %v4215 = vld [vmem:[%s1419 + $0x48] sm:$0xf]
      %v4216 = vld [vmem:[%s1419 + $0x4c] sm:$0xf]
      %v4217 = vld [vmem:[%s1419 + $0x50] sm:$0xf]
      %v4218 = vld [vmem:[%s1419 + $0x54] sm:$0xf]
      %v4219 = vld [vmem:[%s1419 + $0x58] sm:$0xf]
      %v4220 = vld [vmem:[%s1419 + $0x5c] sm:$0xf]
      %v4221 = vld [vmem:[%s1419 + $0x60] sm:$0xf]
      %v4222 = vld [vmem:[%s1419 + $0x64] sm:$0xf]
      %v4223 = vld [vmem:[%s1419 + $0x68] sm:$0xf]
      %v4224 = vld [vmem:[%s1419 + $0x6c] sm:$0xf]
      %v4225 = vld [vmem:[%s1419 + $0x70] sm:$0xf]
      %v4226 = vld [vmem:[%s1419 + $0x74] sm:$0xf]
      %v4227 = vld [vmem:[%s1419 + $0x78] sm:$0xf]
      %v4228 = vld [vmem:[%s1419 + $0x7c] sm:$0xf]
      %s4229 = scalar_lea.vmem %s4, 10
      %v4230 = vld [vmem:[%s4229] sm:$0x3]
      %v4263 = vunpack.c.l.b16 %v4197
      %v4264 = vunpack.c.l.b16 %v4198
      %v4265 = vunpack.c.l.b16 %v4199
      %v4266 = vunpack.c.l.b16 %v4200
      %v4267 = vunpack.c.l.b16 %v4201
      %v4268 = vunpack.c.l.b16 %v4202
      %v4269 = vunpack.c.l.b16 %v4203
      %v4270 = vunpack.c.l.b16 %v4204
      %v4271 = vunpack.c.l.b16 %v4205
      %v4272 = vunpack.c.l.b16 %v4206
      %v4273 = vunpack.c.l.b16 %v4207
      %v4274 = vunpack.c.l.b16 %v4208
      %v4275 = vunpack.c.l.b16 %v4209
      %v4276 = vunpack.c.l.b16 %v4210
      %v4277 = vunpack.c.l.b16 %v4211
      %v4278 = vunpack.c.l.b16 %v4212
      %v4279 = vunpack.c.l.b16 %v4213
      %v4280 = vunpack.c.l.b16 %v4214
      %v4281 = vunpack.c.l.b16 %v4215
      %v4282 = vunpack.c.l.b16 %v4216
      %v4283 = vunpack.c.l.b16 %v4217
      %v4284 = vunpack.c.l.b16 %v4218
      %v4285 = vunpack.c.l.b16 %v4219
      %v4286 = vunpack.c.l.b16 %v4220
      %v4287 = vunpack.c.l.b16 %v4221
      %v4288 = vunpack.c.l.b16 %v4222
      %v4289 = vunpack.c.l.b16 %v4223
      %v4290 = vunpack.c.l.b16 %v4224
      %v4291 = vunpack.c.l.b16 %v4225
      %v4292 = vunpack.c.l.b16 %v4226
      %v4293 = vunpack.c.l.b16 %v4227
      %v4294 = vunpack.c.l.b16 %v4228
      %v4295 = vpack.c.b16 %v4264, %v4263
      %v4296 = vpack.c.b16 %v4266, %v4265
      %v4297 = vpack.c.b16 %v4268, %v4267
      %v4298 = vpack.c.b16 %v4270, %v4269
      %v4299 = vpack.c.b16 %v4272, %v4271
      %v4300 = vpack.c.b16 %v4274, %v4273
      %v4301 = vpack.c.b16 %v4276, %v4275
      %v4302 = vpack.c.b16 %v4278, %v4277
      %v4303 = vpack.c.b16 %v4280, %v4279
      %v4304 = vpack.c.b16 %v4282, %v4281
      %v4305 = vpack.c.b16 %v4284, %v4283
      %v4306 = vpack.c.b16 %v4286, %v4285
      %v4307 = vpack.c.b16 %v4288, %v4287
      %v4308 = vpack.c.b16 %v4290, %v4289
      %v4309 = vpack.c.b16 %v4292, %v4291
      %v4310 = vpack.c.b16 %v4294, %v4293
      %v4312 = vsel %vm1534, %v4295, 0
      %v4315 = vsel %vm1534, %v4296, 0
      %v4318 = vsel %vm1534, %v4297, 0
      %v4321 = vsel %vm1534, %v4298, 0
      %v4324 = vsel %vm1534, %v4299, 0
      %v4327 = vsel %vm1534, %v4300, 0
      %v4330 = vsel %vm1534, %v4301, 0
      %v4333 = vsel %vm1534, %v4302, 0
      %v4336 = vsel %vm1534, %v4303, 0
      %v4339 = vsel %vm1534, %v4304, 0
      %v4342 = vsel %vm1534, %v4305, 0
      %v4345 = vsel %vm1534, %v4306, 0
      %v4348 = vsel %vm1534, %v4307, 0
      %v4351 = vsel %vm1534, %v4308, 0
      %v4354 = vsel %vm1534, %v4309, 0
      %v4357 = vsel %vm1534, %v4310, 0
      %v4360 = vsel %vm1583, %v4230, 0
      %4362 = vmatpush.bf16.msra.mxu0 0
      %4363 = vmatpush.bf16.msra.mxu0 0
      %4364 = vmatpush.bf16.msra.mxu0 0
      %4365 = vmatpush.bf16.msra.mxu0 0
      %4366 = vmatpush.bf16.msra.mxu0 0
      %4367 = vmatpush.bf16.msra.mxu0 0
      %4368 = vmatpush.bf16.msra.mxu0 0
      %4369 = vmatpush.bf16.msra.mxu0 %v4360
      %4370 = vmatmul.bf16.gmra.mxu0 %v4312
      %v4371 = vpop.f32.mrf.mxu0
      %v4372 = vadd.f32 0.0, %v4371
      %v4373 = vpop.f32.mrf.mxu0
      %v4374 = vadd.f32 0.0, %v4373
      %4375 = vmatmul.bf16.gmra.mxu0 %v4315
      %v4376 = vpop.f32.mrf.mxu0
      %v4377 = vadd.f32 0.0, %v4376
      %v4378 = vpop.f32.mrf.mxu0
      %v4379 = vadd.f32 0.0, %v4378
      %4380 = vmatmul.bf16.gmra.mxu0 %v4318
      %v4381 = vpop.f32.mrf.mxu0
      %v4382 = vadd.f32 0.0, %v4381
      %v4383 = vpop.f32.mrf.mxu0
      %v4384 = vadd.f32 0.0, %v4383
      %4385 = vmatmul.bf16.gmra.mxu0 %v4321
      %v4386 = vpop.f32.mrf.mxu0
      %v4387 = vadd.f32 0.0, %v4386
      %v4388 = vpop.f32.mrf.mxu0
      %v4389 = vadd.f32 0.0, %v4388
      %4390 = vmatmul.bf16.gmra.mxu0 %v4324
      %v4391 = vpop.f32.mrf.mxu0
      %v4392 = vadd.f32 0.0, %v4391
      %v4393 = vpop.f32.mrf.mxu0
      %v4394 = vadd.f32 0.0, %v4393
      %4395 = vmatmul.bf16.gmra.mxu0 %v4327
      %v4396 = vpop.f32.mrf.mxu0
      %v4397 = vadd.f32 0.0, %v4396
      %v4398 = vpop.f32.mrf.mxu0
      %v4399 = vadd.f32 0.0, %v4398
      %4400 = vmatmul.bf16.gmra.mxu0 %v4330
      %v4401 = vpop.f32.mrf.mxu0
      %v4402 = vadd.f32 0.0, %v4401
      %v4403 = vpop.f32.mrf.mxu0
      %v4404 = vadd.f32 0.0, %v4403
      %4405 = vmatmul.bf16.gmra.mxu0 %v4333
      %v4406 = vpop.f32.mrf.mxu0
      %v4407 = vadd.f32 0.0, %v4406
      %v4408 = vpop.f32.mrf.mxu0
      %v4409 = vadd.f32 0.0, %v4408
      %4410 = vmatmul.bf16.gmra.mxu0 %v4336
      %v4411 = vpop.f32.mrf.mxu0
      %v4412 = vadd.f32 0.0, %v4411
      %v4413 = vpop.f32.mrf.mxu0
      %v4414 = vadd.f32 0.0, %v4413
      %4415 = vmatmul.bf16.gmra.mxu0 %v4339
      %v4416 = vpop.f32.mrf.mxu0
      %v4417 = vadd.f32 0.0, %v4416
      %v4418 = vpop.f32.mrf.mxu0
      %v4419 = vadd.f32 0.0, %v4418
      %4420 = vmatmul.bf16.gmra.mxu0 %v4342
      %v4421 = vpop.f32.mrf.mxu0
      %v4422 = vadd.f32 0.0, %v4421
      %v4423 = vpop.f32.mrf.mxu0
      %v4424 = vadd.f32 0.0, %v4423
      %4425 = vmatmul.bf16.gmra.mxu0 %v4345
      %v4426 = vpop.f32.mrf.mxu0
      %v4427 = vadd.f32 0.0, %v4426
      %v4428 = vpop.f32.mrf.mxu0
      %v4429 = vadd.f32 0.0, %v4428
      %4430 = vmatmul.bf16.gmra.mxu0 %v4348
      %v4431 = vpop.f32.mrf.mxu0
      %v4432 = vadd.f32 0.0, %v4431
      %v4433 = vpop.f32.mrf.mxu0
      %v4434 = vadd.f32 0.0, %v4433
      %4435 = vmatmul.bf16.gmra.mxu0 %v4351
      %v4436 = vpop.f32.mrf.mxu0
      %v4437 = vadd.f32 0.0, %v4436
      %v4438 = vpop.f32.mrf.mxu0
      %v4439 = vadd.f32 0.0, %v4438
      %4440 = vmatmul.bf16.gmra.mxu0 %v4354
      %v4441 = vpop.f32.mrf.mxu0
      %v4442 = vadd.f32 0.0, %v4441
      %v4443 = vpop.f32.mrf.mxu0
      %v4444 = vadd.f32 0.0, %v4443
      %4445 = vmatmul.bf16.gmra.mxu0 %v4357
      %v4446 = vpop.f32.mrf.mxu0
      %v4447 = vadd.f32 0.0, %v4446
      %v4448 = vpop.f32.mrf.mxu0
      %v4449 = vadd.f32 0.0, %v4448
      %4450 = vdwg.mxu0
      %v4451 = vadd.f32 %v4165, %v4372
      %v4452 = vadd.f32 %v4166, %v4374
      %v4453 = vadd.f32 %v4167, %v4377
      %v4454 = vadd.f32 %v4168, %v4379
      %v4455 = vadd.f32 %v4169, %v4382
      %v4456 = vadd.f32 %v4170, %v4384
      %v4457 = vadd.f32 %v4171, %v4387
      %v4458 = vadd.f32 %v4172, %v4389
      %v4459 = vadd.f32 %v4173, %v4392
      %v4460 = vadd.f32 %v4174, %v4394
      %v4461 = vadd.f32 %v4175, %v4397
      %v4462 = vadd.f32 %v4176, %v4399
      %v4463 = vadd.f32 %v4177, %v4402
      %v4464 = vadd.f32 %v4178, %v4404
      %v4465 = vadd.f32 %v4179, %v4407
      %v4466 = vadd.f32 %v4180, %v4409
      %v4467 = vadd.f32 %v4181, %v4412
      %v4468 = vadd.f32 %v4182, %v4414
      %v4469 = vadd.f32 %v4183, %v4417
      %v4470 = vadd.f32 %v4184, %v4419
      %v4471 = vadd.f32 %v4185, %v4422
      %v4472 = vadd.f32 %v4186, %v4424
      %v4473 = vadd.f32 %v4187, %v4427
      %v4474 = vadd.f32 %v4188, %v4429
      %v4475 = vadd.f32 %v4189, %v4432
      %v4476 = vadd.f32 %v4190, %v4434
      %v4477 = vadd.f32 %v4191, %v4437
      %v4478 = vadd.f32 %v4192, %v4439
      %v4479 = vadd.f32 %v4193, %v4442
      %v4480 = vadd.f32 %v4194, %v4444
      %v4481 = vadd.f32 %v4195, %v4447
      %v4482 = vadd.f32 %v4196, %v4449
      %v4483 = vld [vmem:[%s1896] sm:$0xf]
      %v4484 = vld [vmem:[%s1896 + $0x4] sm:$0xf]
      %v4485 = vld [vmem:[%s1896 + $0x8] sm:$0xf]
      %v4486 = vld [vmem:[%s1896 + $0xc] sm:$0xf]
      %v4487 = vld [vmem:[%s1896 + $0x10] sm:$0xf]
      %v4488 = vld [vmem:[%s1896 + $0x14] sm:$0xf]
      %v4489 = vld [vmem:[%s1896 + $0x18] sm:$0xf]
      %v4490 = vld [vmem:[%s1896 + $0x1c] sm:$0xf]
      %v4491 = vld [vmem:[%s1896 + $0x20] sm:$0xf]
      %v4492 = vld [vmem:[%s1896 + $0x24] sm:$0xf]
      %v4493 = vld [vmem:[%s1896 + $0x28] sm:$0xf]
      %v4494 = vld [vmem:[%s1896 + $0x2c] sm:$0xf]
      %v4495 = vld [vmem:[%s1896 + $0x30] sm:$0xf]
      %v4496 = vld [vmem:[%s1896 + $0x34] sm:$0xf]
      %v4497 = vld [vmem:[%s1896 + $0x38] sm:$0xf]
      %v4498 = vld [vmem:[%s1896 + $0x3c] sm:$0xf]
      %v4499 = vld [vmem:[%s1896 + $0x40] sm:$0xf]
      %v4500 = vld [vmem:[%s1896 + $0x44] sm:$0xf]
      %v4501 = vld [vmem:[%s1896 + $0x48] sm:$0xf]
      %v4502 = vld [vmem:[%s1896 + $0x4c] sm:$0xf]
      %v4503 = vld [vmem:[%s1896 + $0x50] sm:$0xf]
      %v4504 = vld [vmem:[%s1896 + $0x54] sm:$0xf]
      %v4505 = vld [vmem:[%s1896 + $0x58] sm:$0xf]
      %v4506 = vld [vmem:[%s1896 + $0x5c] sm:$0xf]
      %v4507 = vld [vmem:[%s1896 + $0x60] sm:$0xf]
      %v4508 = vld [vmem:[%s1896 + $0x64] sm:$0xf]
      %v4509 = vld [vmem:[%s1896 + $0x68] sm:$0xf]
      %v4510 = vld [vmem:[%s1896 + $0x6c] sm:$0xf]
      %v4511 = vld [vmem:[%s1896 + $0x70] sm:$0xf]
      %v4512 = vld [vmem:[%s1896 + $0x74] sm:$0xf]
      %v4513 = vld [vmem:[%s1896 + $0x78] sm:$0xf]
      %v4514 = vld [vmem:[%s1896 + $0x7c] sm:$0xf]
      %s4515 = scalar_lea.vmem %s4, 16
      %v4516 = vld [vmem:[%s4515] sm:$0x3]
      %v4549 = vunpack.c.l.b16 %v4483
      %v4550 = vunpack.c.l.b16 %v4484
      %v4551 = vunpack.c.l.b16 %v4485
      %v4552 = vunpack.c.l.b16 %v4486
      %v4553 = vunpack.c.l.b16 %v4487
      %v4554 = vunpack.c.l.b16 %v4488
      %v4555 = vunpack.c.l.b16 %v4489
      %v4556 = vunpack.c.l.b16 %v4490
      %v4557 = vunpack.c.l.b16 %v4491
      %v4558 = vunpack.c.l.b16 %v4492
      %v4559 = vunpack.c.l.b16 %v4493
      %v4560 = vunpack.c.l.b16 %v4494
      %v4561 = vunpack.c.l.b16 %v4495
      %v4562 = vunpack.c.l.b16 %v4496
      %v4563 = vunpack.c.l.b16 %v4497
      %v4564 = vunpack.c.l.b16 %v4498
      %v4565 = vunpack.c.l.b16 %v4499
      %v4566 = vunpack.c.l.b16 %v4500
      %v4567 = vunpack.c.l.b16 %v4501
      %v4568 = vunpack.c.l.b16 %v4502
      %v4569 = vunpack.c.l.b16 %v4503
      %v4570 = vunpack.c.l.b16 %v4504
      %v4571 = vunpack.c.l.b16 %v4505
      %v4572 = vunpack.c.l.b16 %v4506
      %v4573 = vunpack.c.l.b16 %v4507
      %v4574 = vunpack.c.l.b16 %v4508
      %v4575 = vunpack.c.l.b16 %v4509
      %v4576 = vunpack.c.l.b16 %v4510
      %v4577 = vunpack.c.l.b16 %v4511
      %v4578 = vunpack.c.l.b16 %v4512
      %v4579 = vunpack.c.l.b16 %v4513
      %v4580 = vunpack.c.l.b16 %v4514
      %v4581 = vpack.c.b16 %v4550, %v4549
      %v4582 = vpack.c.b16 %v4552, %v4551
      %v4583 = vpack.c.b16 %v4554, %v4553
      %v4584 = vpack.c.b16 %v4556, %v4555
      %v4585 = vpack.c.b16 %v4558, %v4557
      %v4586 = vpack.c.b16 %v4560, %v4559
      %v4587 = vpack.c.b16 %v4562, %v4561
      %v4588 = vpack.c.b16 %v4564, %v4563
      %v4589 = vpack.c.b16 %v4566, %v4565
      %v4590 = vpack.c.b16 %v4568, %v4567
      %v4591 = vpack.c.b16 %v4570, %v4569
      %v4592 = vpack.c.b16 %v4572, %v4571
      %v4593 = vpack.c.b16 %v4574, %v4573
      %v4594 = vpack.c.b16 %v4576, %v4575
      %v4595 = vpack.c.b16 %v4578, %v4577
      %v4596 = vpack.c.b16 %v4580, %v4579
      %v4598 = vsel %vm1534, %v4581, 0
      %v4601 = vsel %vm1534, %v4582, 0
      %v4604 = vsel %vm1534, %v4583, 0
      %v4607 = vsel %vm1534, %v4584, 0
      %v4610 = vsel %vm1534, %v4585, 0
      %v4613 = vsel %vm1534, %v4586, 0
      %v4616 = vsel %vm1534, %v4587, 0
      %v4619 = vsel %vm1534, %v4588, 0
      %v4622 = vsel %vm1534, %v4589, 0
      %v4625 = vsel %vm1534, %v4590, 0
      %v4628 = vsel %vm1534, %v4591, 0
      %v4631 = vsel %vm1534, %v4592, 0
      %v4634 = vsel %vm1534, %v4593, 0
      %v4637 = vsel %vm1534, %v4594, 0
      %v4640 = vsel %vm1534, %v4595, 0
      %v4643 = vsel %vm1534, %v4596, 0
      %v4646 = vsel %vm1583, %v4516, 0
      %4648 = vmatpush.bf16.msra.mxu0 0
      %4649 = vmatpush.bf16.msra.mxu0 0
      %4650 = vmatpush.bf16.msra.mxu0 0
      %4651 = vmatpush.bf16.msra.mxu0 0
      %4652 = vmatpush.bf16.msra.mxu0 0
      %4653 = vmatpush.bf16.msra.mxu0 0
      %4654 = vmatpush.bf16.msra.mxu0 0
      %4655 = vmatpush.bf16.msra.mxu0 %v4646
      %4656 = vmatmul.bf16.gmra.mxu0 %v4598
      %v4657 = vpop.f32.mrf.mxu0
      %v4658 = vadd.f32 0.0, %v4657
      %v4659 = vpop.f32.mrf.mxu0
      %v4660 = vadd.f32 0.0, %v4659
      %4661 = vmatmul.bf16.gmra.mxu0 %v4601
      %v4662 = vpop.f32.mrf.mxu0
      %v4663 = vadd.f32 0.0, %v4662
      %v4664 = vpop.f32.mrf.mxu0
      %v4665 = vadd.f32 0.0, %v4664
      %4666 = vmatmul.bf16.gmra.mxu0 %v4604
      %v4667 = vpop.f32.mrf.mxu0
      %v4668 = vadd.f32 0.0, %v4667
      %v4669 = vpop.f32.mrf.mxu0
      %v4670 = vadd.f32 0.0, %v4669
      %4671 = vmatmul.bf16.gmra.mxu0 %v4607
      %v4672 = vpop.f32.mrf.mxu0
      %v4673 = vadd.f32 0.0, %v4672
      %v4674 = vpop.f32.mrf.mxu0
      %v4675 = vadd.f32 0.0, %v4674
      %4676 = vmatmul.bf16.gmra.mxu0 %v4610
      %v4677 = vpop.f32.mrf.mxu0
      %v4678 = vadd.f32 0.0, %v4677
      %v4679 = vpop.f32.mrf.mxu0
      %v4680 = vadd.f32 0.0, %v4679
      %4681 = vmatmul.bf16.gmra.mxu0 %v4613
      %v4682 = vpop.f32.mrf.mxu0
      %v4683 = vadd.f32 0.0, %v4682
      %v4684 = vpop.f32.mrf.mxu0
      %v4685 = vadd.f32 0.0, %v4684
      %4686 = vmatmul.bf16.gmra.mxu0 %v4616
      %v4687 = vpop.f32.mrf.mxu0
      %v4688 = vadd.f32 0.0, %v4687
      %v4689 = vpop.f32.mrf.mxu0
      %v4690 = vadd.f32 0.0, %v4689
      %4691 = vmatmul.bf16.gmra.mxu0 %v4619
      %v4692 = vpop.f32.mrf.mxu0
      %v4693 = vadd.f32 0.0, %v4692
      %v4694 = vpop.f32.mrf.mxu0
      %v4695 = vadd.f32 0.0, %v4694
      %4696 = vmatmul.bf16.gmra.mxu0 %v4622
      %v4697 = vpop.f32.mrf.mxu0
      %v4698 = vadd.f32 0.0, %v4697
      %v4699 = vpop.f32.mrf.mxu0
      %v4700 = vadd.f32 0.0, %v4699
      %4701 = vmatmul.bf16.gmra.mxu0 %v4625
      %v4702 = vpop.f32.mrf.mxu0
      %v4703 = vadd.f32 0.0, %v4702
      %v4704 = vpop.f32.mrf.mxu0
      %v4705 = vadd.f32 0.0, %v4704
      %4706 = vmatmul.bf16.gmra.mxu0 %v4628
      %v4707 = vpop.f32.mrf.mxu0
      %v4708 = vadd.f32 0.0, %v4707
      %v4709 = vpop.f32.mrf.mxu0
      %v4710 = vadd.f32 0.0, %v4709
      %4711 = vmatmul.bf16.gmra.mxu0 %v4631
      %v4712 = vpop.f32.mrf.mxu0
      %v4713 = vadd.f32 0.0, %v4712
      %v4714 = vpop.f32.mrf.mxu0
      %v4715 = vadd.f32 0.0, %v4714
      %4716 = vmatmul.bf16.gmra.mxu0 %v4634
      %v4717 = vpop.f32.mrf.mxu0
      %v4718 = vadd.f32 0.0, %v4717
      %v4719 = vpop.f32.mrf.mxu0
      %v4720 = vadd.f32 0.0, %v4719
      %4721 = vmatmul.bf16.gmra.mxu0 %v4637
      %v4722 = vpop.f32.mrf.mxu0
      %v4723 = vadd.f32 0.0, %v4722
      %v4724 = vpop.f32.mrf.mxu0
      %v4725 = vadd.f32 0.0, %v4724
      %4726 = vmatmul.bf16.gmra.mxu0 %v4640
      %v4727 = vpop.f32.mrf.mxu0
      %v4728 = vadd.f32 0.0, %v4727
      %v4729 = vpop.f32.mrf.mxu0
      %v4730 = vadd.f32 0.0, %v4729
      %4731 = vmatmul.bf16.gmra.mxu0 %v4643
      %v4732 = vpop.f32.mrf.mxu0
      %v4733 = vadd.f32 0.0, %v4732
      %v4734 = vpop.f32.mrf.mxu0
      %v4735 = vadd.f32 0.0, %v4734
      %4736 = vdwg.mxu0
      %v4737 = vadd.f32 %v4451, %v4658
      %v4738 = vadd.f32 %v4452, %v4660
      %v4739 = vadd.f32 %v4453, %v4663
      %v4740 = vadd.f32 %v4454, %v4665
      %v4741 = vadd.f32 %v4455, %v4668
      %v4742 = vadd.f32 %v4456, %v4670
      %v4743 = vadd.f32 %v4457, %v4673
      %v4744 = vadd.f32 %v4458, %v4675
      %v4745 = vadd.f32 %v4459, %v4678
      %v4746 = vadd.f32 %v4460, %v4680
      %v4747 = vadd.f32 %v4461, %v4683
      %v4748 = vadd.f32 %v4462, %v4685
      %v4749 = vadd.f32 %v4463, %v4688
      %v4750 = vadd.f32 %v4464, %v4690
      %v4751 = vadd.f32 %v4465, %v4693
      %v4752 = vadd.f32 %v4466, %v4695
      %v4753 = vadd.f32 %v4467, %v4698
      %v4754 = vadd.f32 %v4468, %v4700
      %v4755 = vadd.f32 %v4469, %v4703
      %v4756 = vadd.f32 %v4470, %v4705
      %v4757 = vadd.f32 %v4471, %v4708
      %v4758 = vadd.f32 %v4472, %v4710
      %v4759 = vadd.f32 %v4473, %v4713
      %v4760 = vadd.f32 %v4474, %v4715
      %v4761 = vadd.f32 %v4475, %v4718
      %v4762 = vadd.f32 %v4476, %v4720
      %v4763 = vadd.f32 %v4477, %v4723
      %v4764 = vadd.f32 %v4478, %v4725
      %v4765 = vadd.f32 %v4479, %v4728
      %v4766 = vadd.f32 %v4480, %v4730
      %v4767 = vadd.f32 %v4481, %v4733
      %v4768 = vadd.f32 %v4482, %v4735
      %v4769 = vld [vmem:[%s5] sm:$0x1]
      %v4771 = vperm.slane %v4769, 0
      %v4773 = vmul.f32 %v4737, %v4771
      %v4774 = vmul.f32 %v4738, %v4771
      %v4775 = vmul.f32 %v4739, %v4771
      %v4776 = vmul.f32 %v4740, %v4771
      %v4777 = vmul.f32 %v4741, %v4771
      %v4778 = vmul.f32 %v4742, %v4771
      %v4779 = vmul.f32 %v4743, %v4771
      %v4780 = vmul.f32 %v4744, %v4771
      %v4781 = vmul.f32 %v4745, %v4771
      %v4782 = vmul.f32 %v4746, %v4771
      %v4783 = vmul.f32 %v4747, %v4771
      %v4784 = vmul.f32 %v4748, %v4771
      %v4785 = vmul.f32 %v4749, %v4771
      %v4786 = vmul.f32 %v4750, %v4771
      %v4787 = vmul.f32 %v4751, %v4771
      %v4788 = vmul.f32 %v4752, %v4771
      %v4789 = vmul.f32 %v4753, %v4771
      %v4790 = vmul.f32 %v4754, %v4771
      %v4791 = vmul.f32 %v4755, %v4771
      %v4792 = vmul.f32 %v4756, %v4771
      %v4793 = vmul.f32 %v4757, %v4771
      %v4794 = vmul.f32 %v4758, %v4771
      %v4795 = vmul.f32 %v4759, %v4771
      %v4796 = vmul.f32 %v4760, %v4771
      %v4797 = vmul.f32 %v4761, %v4771
      %v4798 = vmul.f32 %v4762, %v4771
      %v4799 = vmul.f32 %v4763, %v4771
      %v4800 = vmul.f32 %v4764, %v4771
      %v4801 = vmul.f32 %v4765, %v4771
      %v4802 = vmul.f32 %v4766, %v4771
      %v4803 = vmul.f32 %v4767, %v4771
      %v4804 = vmul.f32 %v4768, %v4771
      %v4805 = vld [vmem:[%s6] sm:$0x1]
      %v4807 = vperm.slane %v4805, 0
      %v4809 = vadd.f32 %v4773, %v4807
      %v4810 = vadd.f32 %v4774, %v4807
      %v4811 = vadd.f32 %v4775, %v4807
      %v4812 = vadd.f32 %v4776, %v4807
      %v4813 = vadd.f32 %v4777, %v4807
      %v4814 = vadd.f32 %v4778, %v4807
      %v4815 = vadd.f32 %v4779, %v4807
      %v4816 = vadd.f32 %v4780, %v4807
      %v4817 = vadd.f32 %v4781, %v4807
      %v4818 = vadd.f32 %v4782, %v4807
      %v4819 = vadd.f32 %v4783, %v4807
      %v4820 = vadd.f32 %v4784, %v4807
      %v4821 = vadd.f32 %v4785, %v4807
      %v4822 = vadd.f32 %v4786, %v4807
      %v4823 = vadd.f32 %v4787, %v4807
      %v4824 = vadd.f32 %v4788, %v4807
      %v4825 = vadd.f32 %v4789, %v4807
      %v4826 = vadd.f32 %v4790, %v4807
      %v4827 = vadd.f32 %v4791, %v4807
      %v4828 = vadd.f32 %v4792, %v4807
      %v4829 = vadd.f32 %v4793, %v4807
      %v4830 = vadd.f32 %v4794, %v4807
      %v4831 = vadd.f32 %v4795, %v4807
      %v4832 = vadd.f32 %v4796, %v4807
      %v4833 = vadd.f32 %v4797, %v4807
      %v4834 = vadd.f32 %v4798, %v4807
      %v4835 = vadd.f32 %v4799, %v4807
      %v4836 = vadd.f32 %v4800, %v4807
      %v4837 = vadd.f32 %v4801, %v4807
      %v4838 = vadd.f32 %v4802, %v4807
      %v4839 = vadd.f32 %v4803, %v4807
      %v4840 = vadd.f32 %v4804, %v4807
      %v4841 = vmax.f32 %v4809, 0.0
      %v4842 = vmax.f32 %v4810, 0.0
      %v4843 = vmax.f32 %v4811, 0.0
      %v4844 = vmax.f32 %v4812, 0.0
      %v4845 = vmax.f32 %v4813, 0.0
      %v4846 = vmax.f32 %v4814, 0.0
      %v4847 = vmax.f32 %v4815, 0.0
      %v4848 = vmax.f32 %v4816, 0.0
      %v4849 = vmax.f32 %v4817, 0.0
      %v4850 = vmax.f32 %v4818, 0.0
      %v4851 = vmax.f32 %v4819, 0.0
      %v4852 = vmax.f32 %v4820, 0.0
      %v4853 = vmax.f32 %v4821, 0.0
      %v4854 = vmax.f32 %v4822, 0.0
      %v4855 = vmax.f32 %v4823, 0.0
      %v4856 = vmax.f32 %v4824, 0.0
      %v4857 = vmax.f32 %v4825, 0.0
      %v4858 = vmax.f32 %v4826, 0.0
      %v4859 = vmax.f32 %v4827, 0.0
      %v4860 = vmax.f32 %v4828, 0.0
      %v4861 = vmax.f32 %v4829, 0.0
      %v4862 = vmax.f32 %v4830, 0.0
      %v4863 = vmax.f32 %v4831, 0.0
      %v4864 = vmax.f32 %v4832, 0.0
      %v4865 = vmax.f32 %v4833, 0.0
      %v4866 = vmax.f32 %v4834, 0.0
      %v4867 = vmax.f32 %v4835, 0.0
      %v4868 = vmax.f32 %v4836, 0.0
      %v4869 = vmax.f32 %v4837, 0.0
      %v4870 = vmax.f32 %v4838, 0.0
      %v4871 = vmax.f32 %v4839, 0.0
      %v4872 = vmax.f32 %v4840, 0.0
      %v4873 = vpack.c.bf16 %v4842, %v4841
      %v4874 = vpack.c.bf16 %v4844, %v4843
      %v4875 = vpack.c.bf16 %v4846, %v4845
      %v4876 = vpack.c.bf16 %v4848, %v4847
      %v4877 = vpack.c.bf16 %v4850, %v4849
      %v4878 = vpack.c.bf16 %v4852, %v4851
      %v4879 = vpack.c.bf16 %v4854, %v4853
      %v4880 = vpack.c.bf16 %v4856, %v4855
      %v4881 = vpack.c.bf16 %v4858, %v4857
      %v4882 = vpack.c.bf16 %v4860, %v4859
      %v4883 = vpack.c.bf16 %v4862, %v4861
      %v4884 = vpack.c.bf16 %v4864, %v4863
      %v4885 = vpack.c.bf16 %v4866, %v4865
      %v4886 = vpack.c.bf16 %v4868, %v4867
      %v4887 = vpack.c.bf16 %v4870, %v4869
      %v4888 = vpack.c.bf16 %v4872, %v4871
      %v4889 = vld [vmem:[%s7] sm:$0x3]
      %v4891 = vsel %vm1534, %v4873, 0
      %v4894 = vsel %vm1534, %v4874, 0
      %v4897 = vsel %vm1534, %v4875, 0
      %v4900 = vsel %vm1534, %v4876, 0
      %v4903 = vsel %vm1534, %v4877, 0
      %v4906 = vsel %vm1534, %v4878, 0
      %v4909 = vsel %vm1534, %v4879, 0
      %v4912 = vsel %vm1534, %v4880, 0
      %v4915 = vsel %vm1534, %v4881, 0
      %v4918 = vsel %vm1534, %v4882, 0
      %v4921 = vsel %vm1534, %v4883, 0
      %v4924 = vsel %vm1534, %v4884, 0
      %v4927 = vsel %vm1534, %v4885, 0
      %v4930 = vsel %vm1534, %v4886, 0
      %v4933 = vsel %vm1534, %v4887, 0
      %v4936 = vsel %vm1534, %v4888, 0
      %v4939 = vsel %vm1583, %v4889, 0
      %4941 = vmatpush.bf16.msra.mxu0 0
      %4942 = vmatpush.bf16.msra.mxu0 0
      %4943 = vmatpush.bf16.msra.mxu0 0
      %4944 = vmatpush.bf16.msra.mxu0 0
      %4945 = vmatpush.bf16.msra.mxu0 0
      %4946 = vmatpush.bf16.msra.mxu0 0
      %4947 = vmatpush.bf16.msra.mxu0 0
      %4948 = vmatpush.bf16.msra.mxu0 %v4939
      %4949 = vmatmul.bf16.gmra.mxu0 %v4891
      %v4950 = vpop.f32.mrf.mxu0
      %v4951 = vadd.f32 0.0, %v4950
      %v4952 = vpop.f32.mrf.mxu0
      %v4953 = vadd.f32 0.0, %v4952
      %4954 = vmatmul.bf16.gmra.mxu0 %v4894
      %v4955 = vpop.f32.mrf.mxu0
      %v4956 = vadd.f32 0.0, %v4955
      %v4957 = vpop.f32.mrf.mxu0
      %v4958 = vadd.f32 0.0, %v4957
      %4959 = vmatmul.bf16.gmra.mxu0 %v4897
      %v4960 = vpop.f32.mrf.mxu0
      %v4961 = vadd.f32 0.0, %v4960
      %v4962 = vpop.f32.mrf.mxu0
      %v4963 = vadd.f32 0.0, %v4962
      %4964 = vmatmul.bf16.gmra.mxu0 %v4900
      %v4965 = vpop.f32.mrf.mxu0
      %v4966 = vadd.f32 0.0, %v4965
      %v4967 = vpop.f32.mrf.mxu0
      %v4968 = vadd.f32 0.0, %v4967
      %4969 = vmatmul.bf16.gmra.mxu0 %v4903
      %v4970 = vpop.f32.mrf.mxu0
      %v4971 = vadd.f32 0.0, %v4970
      %v4972 = vpop.f32.mrf.mxu0
      %v4973 = vadd.f32 0.0, %v4972
      %4974 = vmatmul.bf16.gmra.mxu0 %v4906
      %v4975 = vpop.f32.mrf.mxu0
      %v4976 = vadd.f32 0.0, %v4975
      %v4977 = vpop.f32.mrf.mxu0
      %v4978 = vadd.f32 0.0, %v4977
      %4979 = vmatmul.bf16.gmra.mxu0 %v4909
      %v4980 = vpop.f32.mrf.mxu0
      %v4981 = vadd.f32 0.0, %v4980
      %v4982 = vpop.f32.mrf.mxu0
      %v4983 = vadd.f32 0.0, %v4982
      %4984 = vmatmul.bf16.gmra.mxu0 %v4912
      %v4985 = vpop.f32.mrf.mxu0
      %v4986 = vadd.f32 0.0, %v4985
      %v4987 = vpop.f32.mrf.mxu0
      %v4988 = vadd.f32 0.0, %v4987
      %4989 = vmatmul.bf16.gmra.mxu0 %v4915
      %v4990 = vpop.f32.mrf.mxu0
      %v4991 = vadd.f32 0.0, %v4990
      %v4992 = vpop.f32.mrf.mxu0
      %v4993 = vadd.f32 0.0, %v4992
      %4994 = vmatmul.bf16.gmra.mxu0 %v4918
      %v4995 = vpop.f32.mrf.mxu0
      %v4996 = vadd.f32 0.0, %v4995
      %v4997 = vpop.f32.mrf.mxu0
      %v4998 = vadd.f32 0.0, %v4997
      %4999 = vmatmul.bf16.gmra.mxu0 %v4921
      %v5000 = vpop.f32.mrf.mxu0
      %v5001 = vadd.f32 0.0, %v5000
      %v5002 = vpop.f32.mrf.mxu0
      %v5003 = vadd.f32 0.0, %v5002
      %5004 = vmatmul.bf16.gmra.mxu0 %v4924
      %v5005 = vpop.f32.mrf.mxu0
      %v5006 = vadd.f32 0.0, %v5005
      %v5007 = vpop.f32.mrf.mxu0
      %v5008 = vadd.f32 0.0, %v5007
      %5009 = vmatmul.bf16.gmra.mxu0 %v4927
      %v5010 = vpop.f32.mrf.mxu0
      %v5011 = vadd.f32 0.0, %v5010
      %v5012 = vpop.f32.mrf.mxu0
      %v5013 = vadd.f32 0.0, %v5012
      %5014 = vmatmul.bf16.gmra.mxu0 %v4930
      %v5015 = vpop.f32.mrf.mxu0
      %v5016 = vadd.f32 0.0, %v5015
      %v5017 = vpop.f32.mrf.mxu0
      %v5018 = vadd.f32 0.0, %v5017
      %5019 = vmatmul.bf16.gmra.mxu0 %v4933
      %v5020 = vpop.f32.mrf.mxu0
      %v5021 = vadd.f32 0.0, %v5020
      %v5022 = vpop.f32.mrf.mxu0
      %v5023 = vadd.f32 0.0, %v5022
      %5024 = vmatmul.bf16.gmra.mxu0 %v4936
      %v5025 = vpop.f32.mrf.mxu0
      %v5026 = vadd.f32 0.0, %v5025
      %v5027 = vpop.f32.mrf.mxu0
      %v5028 = vadd.f32 0.0, %v5027
      %5029 = vdwg.mxu0
      %v5030 = vld [vmem:[%s8] sm:$0x1]
      %v5032 = vperm.slane %v5030, 0
      %v5034 = vmul.f32 %v4951, %v5032
      %v5035 = vmul.f32 %v4953, %v5032
      %v5036 = vmul.f32 %v4956, %v5032
      %v5037 = vmul.f32 %v4958, %v5032
      %v5038 = vmul.f32 %v4961, %v5032
      %v5039 = vmul.f32 %v4963, %v5032
      %v5040 = vmul.f32 %v4966, %v5032
      %v5041 = vmul.f32 %v4968, %v5032
      %v5042 = vmul.f32 %v4971, %v5032
      %v5043 = vmul.f32 %v4973, %v5032
      %v5044 = vmul.f32 %v4976, %v5032
      %v5045 = vmul.f32 %v4978, %v5032
      %v5046 = vmul.f32 %v4981, %v5032
      %v5047 = vmul.f32 %v4983, %v5032
      %v5048 = vmul.f32 %v4986, %v5032
      %v5049 = vmul.f32 %v4988, %v5032
      %v5050 = vmul.f32 %v4991, %v5032
      %v5051 = vmul.f32 %v4993, %v5032
      %v5052 = vmul.f32 %v4996, %v5032
      %v5053 = vmul.f32 %v4998, %v5032
      %v5054 = vmul.f32 %v5001, %v5032
      %v5055 = vmul.f32 %v5003, %v5032
      %v5056 = vmul.f32 %v5006, %v5032
      %v5057 = vmul.f32 %v5008, %v5032
      %v5058 = vmul.f32 %v5011, %v5032
      %v5059 = vmul.f32 %v5013, %v5032
      %v5060 = vmul.f32 %v5016, %v5032
      %v5061 = vmul.f32 %v5018, %v5032
      %v5062 = vmul.f32 %v5021, %v5032
      %v5063 = vmul.f32 %v5023, %v5032
      %v5064 = vmul.f32 %v5026, %v5032
      %v5065 = vmul.f32 %v5028, %v5032
      %v5066 = vld [vmem:[%s9] sm:$0x1]
      %v5068 = vperm.slane %v5066, 0
      %v5070 = vadd.f32 %v5034, %v5068
      %v5071 = vadd.f32 %v5035, %v5068
      %v5072 = vadd.f32 %v5036, %v5068
      %v5073 = vadd.f32 %v5037, %v5068
      %v5074 = vadd.f32 %v5038, %v5068
      %v5075 = vadd.f32 %v5039, %v5068
      %v5076 = vadd.f32 %v5040, %v5068
      %v5077 = vadd.f32 %v5041, %v5068
      %v5078 = vadd.f32 %v5042, %v5068
      %v5079 = vadd.f32 %v5043, %v5068
      %v5080 = vadd.f32 %v5044, %v5068
      %v5081 = vadd.f32 %v5045, %v5068
      %v5082 = vadd.f32 %v5046, %v5068
      %v5083 = vadd.f32 %v5047, %v5068
      %v5084 = vadd.f32 %v5048, %v5068
      %v5085 = vadd.f32 %v5049, %v5068
      %v5086 = vadd.f32 %v5050, %v5068
      %v5087 = vadd.f32 %v5051, %v5068
      %v5088 = vadd.f32 %v5052, %v5068
      %v5089 = vadd.f32 %v5053, %v5068
      %v5090 = vadd.f32 %v5054, %v5068
      %v5091 = vadd.f32 %v5055, %v5068
      %v5092 = vadd.f32 %v5056, %v5068
      %v5093 = vadd.f32 %v5057, %v5068
      %v5094 = vadd.f32 %v5058, %v5068
      %v5095 = vadd.f32 %v5059, %v5068
      %v5096 = vadd.f32 %v5060, %v5068
      %v5097 = vadd.f32 %v5061, %v5068
      %v5098 = vadd.f32 %v5062, %v5068
      %v5099 = vadd.f32 %v5063, %v5068
      %v5100 = vadd.f32 %v5064, %v5068
      %v5101 = vadd.f32 %v5065, %v5068
      %v5102 = vunpack.c.l.bf16 %v361
      %v5103 = vunpack.c.l.bf16 %v362
      %v5104 = vunpack.c.l.bf16 %v363
      %v5105 = vunpack.c.l.bf16 %v364
      %v5106 = vunpack.c.l.bf16 %v365
      %v5107 = vunpack.c.l.bf16 %v366
      %v5108 = vunpack.c.l.bf16 %v367
      %v5109 = vunpack.c.l.bf16 %v368
      %v5110 = vunpack.c.l.bf16 %v369
      %v5111 = vunpack.c.l.bf16 %v370
      %v5112 = vunpack.c.l.bf16 %v371
      %v5113 = vunpack.c.l.bf16 %v372
      %v5114 = vunpack.c.l.bf16 %v373
      %v5115 = vunpack.c.l.bf16 %v374
      %v5116 = vunpack.c.l.bf16 %v375
      %v5117 = vunpack.c.l.bf16 %v376
      %v5118 = vunpack.c.l.bf16 %v377
      %v5119 = vunpack.c.l.bf16 %v378
      %v5120 = vunpack.c.l.bf16 %v379
      %v5121 = vunpack.c.l.bf16 %v380
      %v5122 = vunpack.c.l.bf16 %v381
      %v5123 = vunpack.c.l.bf16 %v382
      %v5124 = vunpack.c.l.bf16 %v383
      %v5125 = vunpack.c.l.bf16 %v384
      %v5126 = vunpack.c.l.bf16 %v385
      %v5127 = vunpack.c.l.bf16 %v386
      %v5128 = vunpack.c.l.bf16 %v387
      %v5129 = vunpack.c.l.bf16 %v388
      %v5130 = vunpack.c.l.bf16 %v389
      %v5131 = vunpack.c.l.bf16 %v390
      %v5132 = vunpack.c.l.bf16 %v391
      %v5133 = vunpack.c.l.bf16 %v392
      %v5134 = vadd.f32 %v5070, %v5102
      %v5135 = vadd.f32 %v5071, %v5103
      %v5136 = vadd.f32 %v5072, %v5104
      %v5137 = vadd.f32 %v5073, %v5105
      %v5138 = vadd.f32 %v5074, %v5106
      %v5139 = vadd.f32 %v5075, %v5107
      %v5140 = vadd.f32 %v5076, %v5108
      %v5141 = vadd.f32 %v5077, %v5109
      %v5142 = vadd.f32 %v5078, %v5110
      %v5143 = vadd.f32 %v5079, %v5111
      %v5144 = vadd.f32 %v5080, %v5112
      %v5145 = vadd.f32 %v5081, %v5113
      %v5146 = vadd.f32 %v5082, %v5114
      %v5147 = vadd.f32 %v5083, %v5115
      %v5148 = vadd.f32 %v5084, %v5116
      %v5149 = vadd.f32 %v5085, %v5117
      %v5150 = vadd.f32 %v5086, %v5118
      %v5151 = vadd.f32 %v5087, %v5119
      %v5152 = vadd.f32 %v5088, %v5120
      %v5153 = vadd.f32 %v5089, %v5121
      %v5154 = vadd.f32 %v5090, %v5122
      %v5155 = vadd.f32 %v5091, %v5123
      %v5156 = vadd.f32 %v5092, %v5124
      %v5157 = vadd.f32 %v5093, %v5125
      %v5158 = vadd.f32 %v5094, %v5126
      %v5159 = vadd.f32 %v5095, %v5127
      %v5160 = vadd.f32 %v5096, %v5128
      %v5161 = vadd.f32 %v5097, %v5129
      %v5162 = vadd.f32 %v5098, %v5130
      %v5163 = vadd.f32 %v5099, %v5131
      %v5164 = vadd.f32 %v5100, %v5132
      %v5165 = vadd.f32 %v5101, %v5133
      %v5166 = vmax.f32 %v5134, 0.0
      %v5167 = vmax.f32 %v5135, 0.0
      %v5168 = vmax.f32 %v5136, 0.0
      %v5169 = vmax.f32 %v5137, 0.0
      %v5170 = vmax.f32 %v5138, 0.0
      %v5171 = vmax.f32 %v5139, 0.0
      %v5172 = vmax.f32 %v5140, 0.0
      %v5173 = vmax.f32 %v5141, 0.0
      %v5174 = vmax.f32 %v5142, 0.0
      %v5175 = vmax.f32 %v5143, 0.0
      %v5176 = vmax.f32 %v5144, 0.0
      %v5177 = vmax.f32 %v5145, 0.0
      %v5178 = vmax.f32 %v5146, 0.0
      %v5179 = vmax.f32 %v5147, 0.0
      %v5180 = vmax.f32 %v5148, 0.0
      %v5181 = vmax.f32 %v5149, 0.0
      %v5182 = vmax.f32 %v5150, 0.0
      %v5183 = vmax.f32 %v5151, 0.0
      %v5184 = vmax.f32 %v5152, 0.0
      %v5185 = vmax.f32 %v5153, 0.0
      %v5186 = vmax.f32 %v5154, 0.0
      %v5187 = vmax.f32 %v5155, 0.0
      %v5188 = vmax.f32 %v5156, 0.0
      %v5189 = vmax.f32 %v5157, 0.0
      %v5190 = vmax.f32 %v5158, 0.0
      %v5191 = vmax.f32 %v5159, 0.0
      %v5192 = vmax.f32 %v5160, 0.0
      %v5193 = vmax.f32 %v5161, 0.0
      %v5194 = vmax.f32 %v5162, 0.0
      %v5195 = vmax.f32 %v5163, 0.0
      %v5196 = vmax.f32 %v5164, 0.0
      %v5197 = vmax.f32 %v5165, 0.0
      %v5198 = vpack.c.bf16 %v5166, %v5166
      %v5199 = vpack.c.bf16 %v5167, %v5167
      %v5200 = vpack.c.bf16 %v5168, %v5168
      %v5201 = vpack.c.bf16 %v5169, %v5169
      %v5202 = vpack.c.bf16 %v5170, %v5170
      %v5203 = vpack.c.bf16 %v5171, %v5171
      %v5204 = vpack.c.bf16 %v5172, %v5172
      %v5205 = vpack.c.bf16 %v5173, %v5173
      %v5206 = vpack.c.bf16 %v5174, %v5174
      %v5207 = vpack.c.bf16 %v5175, %v5175
      %v5208 = vpack.c.bf16 %v5176, %v5176
      %v5209 = vpack.c.bf16 %v5177, %v5177
      %v5210 = vpack.c.bf16 %v5178, %v5178
      %v5211 = vpack.c.bf16 %v5179, %v5179
      %v5212 = vpack.c.bf16 %v5180, %v5180
      %v5213 = vpack.c.bf16 %v5181, %v5181
      %v5214 = vpack.c.bf16 %v5182, %v5182
      %v5215 = vpack.c.bf16 %v5183, %v5183
      %v5216 = vpack.c.bf16 %v5184, %v5184
      %v5217 = vpack.c.bf16 %v5185, %v5185
      %v5218 = vpack.c.bf16 %v5186, %v5186
      %v5219 = vpack.c.bf16 %v5187, %v5187
      %v5220 = vpack.c.bf16 %v5188, %v5188
      %v5221 = vpack.c.bf16 %v5189, %v5189
      %v5222 = vpack.c.bf16 %v5190, %v5190
      %v5223 = vpack.c.bf16 %v5191, %v5191
      %v5224 = vpack.c.bf16 %v5192, %v5192
      %v5225 = vpack.c.bf16 %v5193, %v5193
      %v5226 = vpack.c.bf16 %v5194, %v5194
      %v5227 = vpack.c.bf16 %v5195, %v5195
      %v5228 = vpack.c.bf16 %v5196, %v5196
      %v5229 = vpack.c.bf16 %v5197, %v5197
      %vm5230 = vcmask 125952
      %5231 = vst.msk [vmem:[%s359] sm:$0xf] %vm5230, %v5198
      %5232 = vst.msk [vmem:[%s359 + $0x4] sm:$0xf] %vm5230, %v5199
      %5233 = vst.msk [vmem:[%s359 + $0x8] sm:$0xf] %vm5230, %v5200
      %5234 = vst.msk [vmem:[%s359 + $0xc] sm:$0xf] %vm5230, %v5201
      %5235 = vst.msk [vmem:[%s359 + $0x10] sm:$0xf] %vm5230, %v5202
      %5236 = vst.msk [vmem:[%s359 + $0x14] sm:$0xf] %vm5230, %v5203
      %5237 = vst.msk [vmem:[%s359 + $0x18] sm:$0xf] %vm5230, %v5204
      %5238 = vst.msk [vmem:[%s359 + $0x1c] sm:$0xf] %vm5230, %v5205
      %5239 = vst.msk [vmem:[%s359 + $0x20] sm:$0xf] %vm5230, %v5206
      %5240 = vst.msk [vmem:[%s359 + $0x24] sm:$0xf] %vm5230, %v5207
      %5241 = vst.msk [vmem:[%s359 + $0x28] sm:$0xf] %vm5230, %v5208
      %5242 = vst.msk [vmem:[%s359 + $0x2c] sm:$0xf] %vm5230, %v5209
      %5243 = vst.msk [vmem:[%s359 + $0x30] sm:$0xf] %vm5230, %v5210
      %5244 = vst.msk [vmem:[%s359 + $0x34] sm:$0xf] %vm5230, %v5211
      %5245 = vst.msk [vmem:[%s359 + $0x38] sm:$0xf] %vm5230, %v5212
      %5246 = vst.msk [vmem:[%s359 + $0x3c] sm:$0xf] %vm5230, %v5213
      %5247 = vst.msk [vmem:[%s359 + $0x40] sm:$0xf] %vm5230, %v5214
      %5248 = vst.msk [vmem:[%s359 + $0x44] sm:$0xf] %vm5230, %v5215
      %5249 = vst.msk [vmem:[%s359 + $0x48] sm:$0xf] %vm5230, %v5216
      %5250 = vst.msk [vmem:[%s359 + $0x4c] sm:$0xf] %vm5230, %v5217
      %5251 = vst.msk [vmem:[%s359 + $0x50] sm:$0xf] %vm5230, %v5218
      %5252 = vst.msk [vmem:[%s359 + $0x54] sm:$0xf] %vm5230, %v5219
      %5253 = vst.msk [vmem:[%s359 + $0x58] sm:$0xf] %vm5230, %v5220
      %5254 = vst.msk [vmem:[%s359 + $0x5c] sm:$0xf] %vm5230, %v5221
      %5255 = vst.msk [vmem:[%s359 + $0x60] sm:$0xf] %vm5230, %v5222
      %5256 = vst.msk [vmem:[%s359 + $0x64] sm:$0xf] %vm5230, %v5223
      %5257 = vst.msk [vmem:[%s359 + $0x68] sm:$0xf] %vm5230, %v5224
      %5258 = vst.msk [vmem:[%s359 + $0x6c] sm:$0xf] %vm5230, %v5225
      %5259 = vst.msk [vmem:[%s359 + $0x70] sm:$0xf] %vm5230, %v5226
      %5260 = vst.msk [vmem:[%s359 + $0x74] sm:$0xf] %vm5230, %v5227
      %5261 = vst.msk [vmem:[%s359 + $0x78] sm:$0xf] %vm5230, %v5228
      %5262 = vst.msk [vmem:[%s359 + $0x7c] sm:$0xf] %vm5230, %v5229
      %p5263 = scmp.lt.s32.totalorder %s21, 1
      %s5264 = scalar_select %p5263, %s21, 1
      %s5265 = smul.addr %s5264, 32
      %s5266 = smul.addr %s5265, 4
      %s5267 = scalar_lea.vmem %s10, %s5266
      // Predicated region
      $region61: #{eca_bottleneck_forward.1} parent=59 // pred_check
        %p5268 = pneg %p254
      $region62: #{eca_bottleneck_forward.1} parent=59 // pred_check_branch
        %5270 = sbr.rel (%p5268) target = $region64
      $region63: #{eca_bottleneck_forward.1} parent=59 // pred_region
        _
      $region64: #{eca_bottleneck_forward.1} parent=59 // pred_fallthru
        _
    $region60: #{eca_bottleneck_forward.1} parent=5 // pred_fallthru
      _
    %p5271 = scmp.le.s32.totalorder 2, %s16
    // Predicated region
    $region65: #{eca_bottleneck_forward.1} parent=5 // pred_check
      %p5272 = pneg %p5271
    $region66: #{eca_bottleneck_forward.1} parent=5 // pred_check_branch
      %5274 = sbr.rel (%p5272) target = $region68
    $region67: #{eca_bottleneck_forward.1} parent=5 // pred_region
      %s5275 = ssub.s32 %s16, 2
      // Predicated region
      $region69: #{eca_bottleneck_forward.1} parent=67 // pred_check
        %p5276 = pneg %p260
      $region70: #{eca_bottleneck_forward.1} parent=67 // pred_check_branch
        %5278 = sbr.rel (%p5276) target = $region72
      $region71: #{eca_bottleneck_forward.1} parent=67 // pred_region
        %p5279 = scmp.lt.s32.totalorder %s22, 1
        %s5280 = scalar_select %p5279, %s22, 1
        %s5281 = smul.addr %s5280, 32
        %s5282 = smul.addr %s5281, 4
        %s5283 = scalar_lea.vmem %s10, %s5282
      $region72: #{eca_bottleneck_forward.1} parent=67 // pred_fallthru
        _
    $region68: #{eca_bottleneck_forward.1} parent=5 // pred_fallthru
      _
  $region6: #{eca_bottleneck_forward.1} parent=0 // loop_footer
    %s20 = sadd.s32 1, %s16
  $region7: #{eca_bottleneck_forward.1} parent=0 // loop_footer_branch
    %15 = sbr.rel target = $region3
  $region8: #{eca_bottleneck_forward.1} parent=0 // loop_exit
    _

</llo_original>
